<compile_context>
chip_gen: v7x
topology: tpu7x:2x2x1
jax: 0.10.0
libtpu: 0.0.40
codegen_flags: <defaults>
</compile_context>

<pallas_src>
import functools

import jax
import jax.numpy as jnp
from jax import lax
from jax.experimental import pallas as pl
from jax.experimental.pallas import tpu as pltpu

EPS = 1e-5
LANE = 128
MXU_DTYPE = jnp.bfloat16


# ----------------------------------------------------------------------------
# static helpers
# ----------------------------------------------------------------------------
def _round_up(x, m):
    return ((x + m - 1) // m) * m


@functools.lru_cache(maxsize=None)
def _vmem_limit_bytes():
    """Generation-aware scoped-VMEM budget (~3/4 physical, capped at 96 MiB)."""
    try:
        cap = int(pltpu.get_tpu_info().vmem_capacity_bytes)
    except Exception:
        cap = 64 * 1024 * 1024          # conservative (v7x-sized) fallback
    return max(16 * 1024 * 1024, min((cap * 3) // 4, 96 * 1024 * 1024))


def _compiler_params(sem):
    return pltpu.CompilerParams(dimension_semantics=sem,
                                vmem_limit_bytes=_vmem_limit_bytes())


def _row_tile(rows, c_pad, n_streams):
    """Row tile for mem-bound epilogues: fit double-buffered streams in VMEM,
    keep >=2 tiles so the 'parallel' axis splits across v7x's two cores."""
    budget = _vmem_limit_bytes() // 2
    cap = max(8, budget // (n_streams * 2 * c_pad * 4))
    cap = min(cap, rows)
    if rows >= 16:
        cap = min(cap, rows // 2)
    t = (cap // 8) * 8
    while t >= 8:
        if rows % t == 0:
            return t
        t -= 8
    return rows


# ----------------------------------------------------------------------------
# plain-JAX layout glue (all in bf16, ~1x input bytes; no 9x im2col blow-up)
# ----------------------------------------------------------------------------
def _make_phases(x, k, stride, pad):
    """x: (N, H, W, Cp) -> (N*s*s, Hq/s, Wq/s, Cp) phase decomposition.

    phases[n*s*s + a*s + b, i, j, :] == x_padded[n, s*i + a, s*j + b, :], so the
    conv tap (di, dj) for output (ho, wo) is the contiguous shifted window
    phases[phase(di,dj), ho + di//s, wo + dj//s, :].  Returns (phases, Ho, Wo).
    """
    n, h, w, c = x.shape
    s = stride
    hp, wp = h + 2 * pad, w + 2 * pad
    ho = (hp - k) // s + 1
    wo = (wp - k) // s + 1
    smax = (k - 1) // s
    hq, wq = s * (ho + smax), s * (wo + smax)
    xp = jnp.pad(x, ((0, 0),
                     (pad, max(0, hq - hp) + pad),
                     (pad, max(0, wq - wp) + pad),
                     (0, 0)))[:, :hq, :wq, :]
    x_ph = xp.reshape(n, hq // s, s, wq // s, s, c).transpose(0, 2, 4, 1, 3, 5)
    return x_ph.reshape(n * s * s, hq // s, wq // s, c), ho, wo


def _weight_mat(w_oihw, cin_pad, cout_pad):
    """PyTorch (Cout, Cin, KH, KW) -> (KH*KW, cin_pad, cout_pad) bf16."""
    cout, cin, kh, kw = w_oihw.shape
    w = jnp.transpose(w_oihw, (2, 3, 1, 0)).reshape(kh * kw, cin, cout)
    w = jnp.pad(w, ((0, 0), (0, cin_pad - cin), (0, cout_pad - cout)))
    return w.astype(MXU_DTYPE)


def _weight_mat_1x1(w_oi11, cin_pad, cout_pad):
    cout, cin = w_oi11.shape[0], w_oi11.shape[1]
    wm = jnp.transpose(w_oi11.reshape(cout, cin), (1, 0))
    wm = jnp.pad(wm, ((0, cin_pad - cin), (0, cout_pad - cout)))
    return wm.astype(MXU_DTYPE)


# ----------------------------------------------------------------------------
# Pallas kernel 1: fused conv (+ optional shortcut 1x1 conv) + BN statistics
#   grid = (N,) 'parallel'; per step one image:
#     - 9 shifted-window MXU matmuls accumulate in an f32 value (no HBM RMW),
#     - y written as bf16, BN stats taken from the f32 accumulator.
# ----------------------------------------------------------------------------
def _make_conv_kernel(kh, kw, stride, pad, ho, wo, c_pad, with_shortcut):
    m = ho * wo
    s = stride

    def _stats_rows(acc):
        # row 0: per-image channel sum; row 1: per-image centered sum-of-squares
        col_sum = jnp.sum(acc, axis=0, keepdims=True)
        mu = col_sum * (1.0 / m)
        col_m2 = jnp.sum((acc - mu) ** 2, axis=0, keepdims=True)
        rows = lax.broadcasted_iota(jnp.int32, (8, c_pad), 0)
        return jnp.where(rows == 0, col_sum, jnp.where(rows == 1, col_m2, 0.0))

    def kernel(*refs):
        if with_shortcut:
            x_ref, w_ref, wsc_ref, y_ref, st_ref, ysc_ref, stsc_ref = refs
        else:
            x_ref, w_ref, y_ref, st_ref = refs

        def tap_lhs(row0, col0, phase):
            sl = x_ref[phase, row0:row0 + ho, col0:col0 + wo, :]
            return sl.reshape(m, sl.shape[-1])

        # Main KxK conv: fully unrolled tap accumulation ("im2col" never exists).
        acc = jnp.zeros((m, c_pad), jnp.float32)
        for di in range(kh):
            for dj in range(kw):
                lhs = tap_lhs(di // s, dj // s, (di % s) * s + (dj % s))
                acc = acc + jnp.dot(lhs, w_ref[di * kw + dj],
                                    preferred_element_type=jnp.float32)
        y_ref[0] = acc.astype(y_ref.dtype)        # bf16 store; f32 acc stays local
        st_ref[0] = _stats_rows(acc)

        if with_shortcut:
            # fused 1x1/stride-s shortcut conv: the (pad, pad) "center" sample of
            # the same resident input block -> zero extra HBM reads.
            lhs = tap_lhs(pad // s, pad // s, (pad % s) * s + (pad % s))
            acc_sc = jnp.dot(lhs, wsc_ref[...], preferred_element_type=jnp.float32)
            ysc_ref[0] = acc_sc.astype(ysc_ref.dtype)
            stsc_ref[0] = _stats_rows(acc_sc)

    return kernel


def conv_bn_stats_pallas(x_ph, w_mat, kh, kw, stride, pad, ho, wo, wsc_mat=None):
    # TODO(synk): tile Ho (with a manual-DMA halo) for very large feature maps;
    # the per-image block assumes one image's phases + output fit the VMEM budget.
    s2 = stride * stride
    n = x_ph.shape[0] // s2
    hph, wph, cin_pad = x_ph.shape[1], x_ph.shape[2], x_ph.shape[3]
    kk, _, c_pad = w_mat.shape
    m = ho * wo
    with_sc = wsc_mat is not None

    kernel = _make_conv_kernel(kh, kw, stride, pad, ho, wo, c_pad, with_sc)

    in_specs = [
        pl.BlockSpec((s2, hph, wph, cin_pad), lambda i: (i, 0, 0, 0)),
        pl.BlockSpec((kk, cin_pad, c_pad), lambda i: (0, 0, 0)),   # resident weights
    ]
    args = [x_ph, w_mat]
    out_shape = [jax.ShapeDtypeStruct((n, m, c_pad), MXU_DTYPE),
                 jax.ShapeDtypeStruct((n, 8, c_pad), jnp.float32)]
    out_specs = [pl.BlockSpec((1, m, c_pad), lambda i: (i, 0, 0)),
                 pl.BlockSpec((1, 8, c_pad), lambda i: (i, 0, 0))]
    if with_sc:
        in_specs.append(pl.BlockSpec((cin_pad, c_pad), lambda i: (0, 0)))
        args.append(wsc_mat)
        out_shape += [jax.ShapeDtypeStruct((n, m, c_pad), MXU_DTYPE),
                      jax.ShapeDtypeStruct((n, 8, c_pad), jnp.float32)]
        out_specs += [pl.BlockSpec((1, m, c_pad), lambda i: (i, 0, 0)),
                      pl.BlockSpec((1, 8, c_pad), lambda i: (i, 0, 0))]

    return pl.pallas_call(
        kernel,
        out_shape=tuple(out_shape),
        grid=(n,),
        in_specs=in_specs,
        out_specs=tuple(out_specs),
        compiler_params=_compiler_params(("parallel",)),
    )(*args)


# ----------------------------------------------------------------------------
# Pallas kernel 2: fused BN affine + ReLU        (after conv1, bf16 in/out)
# Pallas kernel 3: fused BN2 + shortcut-BN + add + ReLU (block epilogue)
# ----------------------------------------------------------------------------
def _bn_relu_kernel(x_ref, sc_ref, sh_ref, o_ref):
    y = x_ref[...].astype(jnp.float32) * sc_ref[...] + sh_ref[...]
    o_ref[...] = jnp.maximum(y, 0.0).astype(o_ref.dtype)


def bn_relu_pallas(y, scale, shift, out_dtype=MXU_DTYPE):
    rows, c_pad = y.shape
    tr = _row_tile(rows, c_pad, n_streams=2)
    return pl.pallas_call(
        _bn_relu_kernel,
        out_shape=jax.ShapeDtypeStruct((rows, c_pad), out_dtype),
        grid=(rows // tr,),
        in_specs=[pl.BlockSpec((tr, c_pad), lambda i: (i, 0)),
                  pl.BlockSpec((1, c_pad), lambda i: (0, 0)),
                  pl.BlockSpec((1, c_pad), lambda i: (0, 0))],
        out_specs=pl.BlockSpec((tr, c_pad), lambda i: (i, 0)),
        compiler_params=_compiler_params(("parallel",)),
    )(y, scale, shift)


def _make_bn_add_kernel(cout):
    def kernel(x_ref, sc_ref, sh_ref, r_ref, rsc_ref, rsh_ref, o_ref):
        y = x_ref[...].astype(jnp.float32) * sc_ref[...] + sh_ref[...]
        y = y + r_ref[...].astype(jnp.float32) * rsc_ref[...] + rsh_ref[...]
        y = jnp.maximum(y, 0.0)
        o_ref[...] = y[:, :cout]          # only the valid channels hit HBM
    return kernel


def bn_add_bn_relu_pallas(y, scale, shift, r, rscale, rshift, cout):
    rows, c_pad = y.shape
    tr = _row_tile(rows, c_pad, n_streams=4)
    return pl.pallas_call(
        _make_bn_add_kernel(cout),
        out_shape=jax.ShapeDtypeStruct((rows, cout), jnp.float32),
        grid=(rows // tr,),
        in_specs=[pl.BlockSpec((tr, c_pad), lambda i: (i, 0)),
                  pl.BlockSpec((1, c_pad), lambda i: (0, 0)),
                  pl.BlockSpec((1, c_pad), lambda i: (0, 0)),
                  pl.BlockSpec((tr, c_pad), lambda i: (i, 0)),
                  pl.BlockSpec((1, c_pad), lambda i: (0, 0)),
                  pl.BlockSpec((1, c_pad), lambda i: (0, 0))],
        out_specs=pl.BlockSpec((tr, cout), lambda i: (i, 0)),
        compiler_params=_compiler_params(("parallel",)),
    )(y, scale, shift, r, rscale, rshift)


# ----------------------------------------------------------------------------
# BatchNorm affine from in-kernel partial stats (Chan parallel-variance merge)
# ----------------------------------------------------------------------------
def _bn_affine(stats, count, gamma_pad, beta_pad, eps=EPS):
    s_i = stats[:, 0, :]                      # per-image channel sums  (N, C)
    m2_i = stats[:, 1, :]                     # per-image centered sumsq (N, C)
    n_img = stats.shape[0]
    total = count * n_img
    mean = jnp.sum(s_i, axis=0) / total
    mu_i = s_i / count
    m2 = jnp.sum(m2_i, axis=0) + count * jnp.sum((mu_i - mean) ** 2, axis=0)
    var = jnp.maximum(m2 / total, 0.0)        # biased (training-mode) variance
    scale = gamma_pad * lax.rsqrt(var + eps)
    shift = beta_pad - mean * scale
    return scale.reshape(1, -1), shift.reshape(1, -1)


# ----------------------------------------------------------------------------
# ResidualBlock forward
# ----------------------------------------------------------------------------
@functools.partial(jax.jit, static_argnames=("stride",))
def residual_block(x_nchw, params, stride):
    # TODO(synk): keep the surrounding model NHWC to drop these boundary transposes.
    cout, cin = params["w1"].shape[0], params["w1"].shape[1]
    cin_pad = _round_up(cin, LANE)
    c_pad = _round_up(cout, LANE)
    n = x_nchw.shape[0]
    has_sc = (stride != 1) or (cin != cout)

    x_nhwc = jnp.transpose(x_nchw, (0, 2, 3, 1))
    x = jnp.pad(x_nhwc.astype(MXU_DTYPE),          # bf16 before any widening glue
                ((0, 0), (0, 0), (0, 0), (0, cin_pad - cin)))

    def padv(v):
        return jnp.pad(v.astype(jnp.float32), (0, c_pad - v.shape[0]))

    # ---- conv1 (3x3, stride) fused with shortcut 1x1 conv + BN stats --------
    x_ph, ho1, wo1 = _make_phases(x, 3, stride, 1)
    w1 = _weight_mat(params["w1"], cin_pad, c_pad)
    if has_sc:
        wsc = _weight_mat_1x1(params["wsc"], cin_pad, c_pad)
        y1, st1, ysc, stsc = conv_bn_stats_pallas(x_ph, w1, 3, 3, stride, 1,
                                                  ho1, wo1, wsc_mat=wsc)
    else:
        y1, st1 = conv_bn_stats_pallas(x_ph, w1, 3, 3, stride, 1, ho1, wo1)
    m1 = ho1 * wo1

    # ---- BN1 affine + ReLU (fused epilogue, bf16 out for conv2) -------------
    sc1, sh1 = _bn_affine(st1, m1, padv(params["g1"]), padv(params["b1"]))
    a1 = bn_relu_pallas(y1.reshape(n * m1, c_pad), sc1, sh1, out_dtype=MXU_DTYPE)

    # ---- conv2 (3x3, stride 1) + BN2 stats -----------------------------------
    a1_img = a1.reshape(n, ho1, wo1, c_pad)
    x_ph2, ho2, wo2 = _make_phases(a1_img, 3, 1, 1)
    w2 = _weight_mat(params["w2"], c_pad, c_pad)
    y2, st2 = conv_bn_stats_pallas(x_ph2, w2, 3, 3, 1, 1, ho2, wo2)
    m2 = ho2 * wo2
    sc2, sh2 = _bn_affine(st2, m2, padv(params["g2"]), padv(params["b2"]))

    # ---- shortcut affine / identity ------------------------------------------
    if has_sc:
        rsc, rsh = _bn_affine(stsc, m1, padv(params["gsc"]), padv(params["bsc"]))
        r = ysc.reshape(n * m1, c_pad)
    else:
        r = jnp.pad(x_nhwc.astype(jnp.float32),     # identity residual stays f32
                    ((0, 0), (0, 0), (0, 0), (0, c_pad - cin))).reshape(n * m2, c_pad)
        rsc = jnp.ones((1, c_pad), jnp.float32)
        rsh = jnp.zeros((1, c_pad), jnp.float32)

    # ---- BN2 + shortcut-BN + residual add + ReLU in one fused pass -----------
    out = bn_add_bn_relu_pallas(y2.reshape(n * m2, c_pad), sc2, sh2,
                                r, rsc, rsh, cout)
    out = out.reshape(n, ho2, wo2, cout)
    return jnp.transpose(out, (0, 3, 1, 2))


# ----------------------------------------------------------------------------
# Pure-JAX reference (lax.conv) for correctness checks
# ----------------------------------------------------------------------------
def _ref_conv(x, w, stride, pad, conv_dtype):
    return lax.conv_general_dilated(
        x.astype(conv_dtype), w.astype(conv_dtype), (stride, stride),
        ((pad, pad), (pad, pad)),
        dimension_numbers=("NCHW", "OIHW", "NCHW"),
        preferred_element_type=jnp.float32)


def _ref_bn(y_stats, y_apply, gamma, beta):
    mean = jnp.mean(y_stats, axis=(0, 2, 3), keepdims=True)
    var = jnp.var(y_stats, axis=(0, 2, 3), keepdims=True)
    return ((y_apply - mean) * lax.rsqrt(var + EPS) * gamma.reshape(1, -1, 1, 1)
            + beta.reshape(1, -1, 1, 1))


def residual_block_ref(x, params, stride, conv_dtype=jnp.float32, quantize_y=False):
    """quantize_y=True mirrors the kernel: conv outputs stored as bf16, BN
    stats taken from the un-quantized f32 conv output."""
    def q(y):
        return y.astype(jnp.bfloat16).astype(jnp.float32) if quantize_y else y

    cin, cout = params["w1"].shape[1], params["w1"].shape[0]
    if stride != 1 or cin != cout:
        ysc = _ref_conv(x, params["wsc"], stride, 0, conv_dtype)
        identity = _ref_bn(ysc, q(ysc), params["gsc"], params["bsc"])
    else:
        identity = x
    y1 = _ref_conv(x, params["w1"], stride, 1, conv_dtype)
    a1 = jnp.maximum(_ref_bn(y1, q(y1), params["g1"], params["b1"]), 0.0)
    y2 = _ref_conv(a1, params["w2"], 1, 1, conv_dtype)
    out = _ref_bn(y2, q(y2), params["g2"], params["b2"])
    return jnp.maximum(out + identity, 0.0)


# ----------------------------------------------------------------------------
if __name__ == "__main__":
    key = jax.random.PRNGKey(0)
    N, Cin, H, W = 2, 4, 16, 16

    def make_params(k, cin, cout):
        k1, k2, k3 = jax.random.split(k, 3)
        return {
            "w1": 0.1 * jax.random.normal(k1, (cout, cin, 3, 3), jnp.float32),
            "w2": 0.1 * jax.random.normal(k2, (cout, cout, 3, 3), jnp.float32),
            "wsc": 0.1 * jax.random.normal(k3, (cout, cin, 1, 1), jnp.float32),
            "g1": jnp.ones((cout,), jnp.float32), "b1": jnp.zeros((cout,), jnp.float32),
            "g2": jnp.ones((cout,), jnp.float32), "b2": jnp.zeros((cout,), jnp.float32),
            "gsc": jnp.ones((cout,), jnp.float32), "bsc": jnp.zeros((cout,), jnp.float32),
        }

    def check(name, out, ref, rtol, atol):
        err = float(jnp.max(jnp.abs(out - ref)))
        assert jnp.allclose(out, ref, rtol=rtol, atol=atol), (name, err)

    kx, kp1, kp2 = jax.random.split(key, 3)
    x = jax.random.normal(kx, (N, Cin, H, W), jnp.float32)

    # Case 1: projection shortcut (stride=2, Cin != Cout)
    p1 = make_params(kp1, Cin, 8)
    out1 = jax.block_until_ready(residual_block(x, p1, stride=2))
    assert out1.shape == (N, 8, H // 2, W // 2), out1.shape
    check("case1/bf16", out1,
          residual_block_ref(x, p1, 2, conv_dtype=jnp.bfloat16, quantize_y=True),
          rtol=1e-2, atol=1e-2)
    check("case1/f32", out1,
          residual_block_ref(x, p1, 2, conv_dtype=jnp.float32),
          rtol=1e-1, atol=1e-1)

    # Case 2: identity shortcut (stride=1, Cin == Cout)
    p2 = make_params(kp2, Cin, Cin)
    out2 = jax.block_until_ready(residual_block(x, p2, stride=1))
    assert out2.shape == (N, Cin, H, W), out2.shape
    check("case2/bf16", out2,
          residual_block_ref(x, p2, 1, conv_dtype=jnp.bfloat16, quantize_y=True),
          rtol=1e-2, atol=1e-2)
    check("case2/f32", out2,
          residual_block_ref(x, p2, 1, conv_dtype=jnp.float32),
          rtol=1e-1, atol=1e-1)

    print("KERNEL_OK")
</pallas_src>

<mosaic_0001>
module attributes {stable_mosaic.version = 11 : i64} {
  func.func @kernel(%arg0: i32, %arg1: memref<4x9x9x128xbf16, #tpu.memory_space<vmem>>, %arg2: memref<9x128x128xbf16, #tpu.memory_space<vmem>>, %arg3: memref<128x128xbf16, #tpu.memory_space<vmem>>, %arg4: memref<1x64x128xbf16, #tpu.memory_space<vmem>>, %arg5: memref<1x8x128xf32, #tpu.memory_space<vmem>>, %arg6: memref<1x64x128xbf16, #tpu.memory_space<vmem>>, %arg7: memref<1x8x128xf32, #tpu.memory_space<vmem>>) attributes {dimension_semantics = [#tpu.dimension_semantics<parallel>], iteration_bounds = array<i64: 2>, scalar_prefetch = 0 : i64, scratch_operands = 0 : i64, tpu.core_type = #tpu.core_type<tc>, window_params = [{transform_indices = @transform_0, window_bounds = array<i64: 4, 9, 9, 128>}, {pipeline_mode = #tpu.pipeline_mode<synchronous>, transform_indices = @transform_1, window_bounds = array<i64: 9, 128, 128>}, {pipeline_mode = #tpu.pipeline_mode<synchronous>, transform_indices = @transform_2, window_bounds = array<i64: 128, 128>}, {transform_indices = @transform_3, window_bounds = array<i64: 1, 64, 128>}, {transform_indices = @transform_4, window_bounds = array<i64: 1, 8, 128>}, {transform_indices = @transform_5, window_bounds = array<i64: 1, 64, 128>}, {transform_indices = @transform_6, window_bounds = array<i64: 1, 8, 128>}]} {
    %cst = arith.constant 0.000000e+00 : f32
    %0 = vector.broadcast %cst : f32 to vector<64x128xf32>
    %c0 = arith.constant 0 : index
    %c0_0 = arith.constant 0 : index
    %c0_1 = arith.constant 0 : index
    %c0_2 = arith.constant 0 : index
    %1 = vector.load %arg1[%c0, %c0_0, %c0_1, %c0_2] : memref<4x9x9x128xbf16, #tpu.memory_space<vmem>>, vector<1x8x8x128xbf16>
    %2 = vector.shape_cast %1 : vector<1x8x8x128xbf16> to vector<8x8x128xbf16>
    %3 = vector.shape_cast %2 : vector<8x8x128xbf16> to vector<64x128xbf16>
    %c0_3 = arith.constant 0 : index
    %c0_4 = arith.constant 0 : index
    %c0_5 = arith.constant 0 : index
    %4 = vector.load %arg2[%c0_3, %c0_4, %c0_5] : memref<9x128x128xbf16, #tpu.memory_space<vmem>>, vector<1x128x128xbf16>
    %5 = vector.shape_cast %4 : vector<1x128x128xbf16> to vector<128x128xbf16>
    %cst_6 = arith.constant dense<0.000000e+00> : vector<64x128xf32>
    %6 = tpu.matmul %3, %5, %cst_6 {dimension_numbers = #tpu.dot_dimension_numbers<[1], [0], [0], [1], [0, 0, 1, 1], [], []>} : vector<64x128xbf16>, vector<128x128xbf16>, vector<64x128xf32> -> vector<64x128xf32>
    %7 = arith.addf %0, %6 : vector<64x128xf32>
    %c1 = arith.constant 1 : index
    %c0_7 = arith.constant 0 : index
    %c0_8 = arith.constant 0 : index
    %c0_9 = arith.constant 0 : index
    %8 = vector.load %arg1[%c1, %c0_7, %c0_8, %c0_9] : memref<4x9x9x128xbf16, #tpu.memory_space<vmem>>, vector<1x8x8x128xbf16>
    %9 = vector.shape_cast %8 : vector<1x8x8x128xbf16> to vector<8x8x128xbf16>
    %10 = vector.shape_cast %9 : vector<8x8x128xbf16> to vector<64x128xbf16>
    %c1_10 = arith.constant 1 : index
    %c0_11 = arith.constant 0 : index
    %c0_12 = arith.constant 0 : index
    %11 = vector.load %arg2[%c1_10, %c0_11, %c0_12] : memref<9x128x128xbf16, #tpu.memory_space<vmem>>, vector<1x128x128xbf16>
    %12 = vector.shape_cast %11 : vector<1x128x128xbf16> to vector<128x128xbf16>
    %cst_13 = arith.constant dense<0.000000e+00> : vector<64x128xf32>
    %13 = tpu.matmul %10, %12, %cst_13 {dimension_numbers = #tpu.dot_dimension_numbers<[1], [0], [0], [1], [0, 0, 1, 1], [], []>} : vector<64x128xbf16>, vector<128x128xbf16>, vector<64x128xf32> -> vector<64x128xf32>
    %14 = arith.addf %7, %13 : vector<64x128xf32>
    %c0_14 = arith.constant 0 : index
    %c0_15 = arith.constant 0 : index
    %c1_16 = arith.constant 1 : index
    %c0_17 = arith.constant 0 : index
    %15 = vector.load %arg1[%c0_14, %c0_15, %c1_16, %c0_17] : memref<4x9x9x128xbf16, #tpu.memory_space<vmem>>, vector<1x8x8x128xbf16>
    %16 = vector.shape_cast %15 : vector<1x8x8x128xbf16> to vector<8x8x128xbf16>
    %17 = vector.shape_cast %16 : vector<8x8x128xbf16> to vector<64x128xbf16>
    %c2 = arith.constant 2 : index
    %c0_18 = arith.constant 0 : index
    %c0_19 = arith.constant 0 : index
    %18 = vector.load %arg2[%c2, %c0_18, %c0_19] : memref<9x128x128xbf16, #tpu.memory_space<vmem>>, vector<1x128x128xbf16>
    %19 = vector.shape_cast %18 : vector<1x128x128xbf16> to vector<128x128xbf16>
    %cst_20 = arith.constant dense<0.000000e+00> : vector<64x128xf32>
    %20 = tpu.matmul %17, %19, %cst_20 {dimension_numbers = #tpu.dot_dimension_numbers<[1], [0], [0], [1], [0, 0, 1, 1], [], []>} : vector<64x128xbf16>, vector<128x128xbf16>, vector<64x128xf32> -> vector<64x128xf32>
    %21 = arith.addf %14, %20 : vector<64x128xf32>
    %c2_21 = arith.constant 2 : index
    %c0_22 = arith.constant 0 : index
    %c0_23 = arith.constant 0 : index
    %c0_24 = arith.constant 0 : index
    %22 = vector.load %arg1[%c2_21, %c0_22, %c0_23, %c0_24] : memref<4x9x9x128xbf16, #tpu.memory_space<vmem>>, vector<1x8x8x128xbf16>
    %23 = vector.shape_cast %22 : vector<1x8x8x128xbf16> to vector<8x8x128xbf16>
    %24 = vector.shape_cast %23 : vector<8x8x128xbf16> to vector<64x128xbf16>
    %c3 = arith.constant 3 : index
    %c0_25 = arith.constant 0 : index
    %c0_26 = arith.constant 0 : index
    %25 = vector.load %arg2[%c3, %c0_25, %c0_26] : memref<9x128x128xbf16, #tpu.memory_space<vmem>>, vector<1x128x128xbf16>
    %26 = vector.shape_cast %25 : vector<1x128x128xbf16> to vector<128x128xbf16>
    %cst_27 = arith.constant dense<0.000000e+00> : vector<64x128xf32>
    %27 = tpu.matmul %24, %26, %cst_27 {dimension_numbers = #tpu.dot_dimension_numbers<[1], [0], [0], [1], [0, 0, 1, 1], [], []>} : vector<64x128xbf16>, vector<128x128xbf16>, vector<64x128xf32> -> vector<64x128xf32>
    %28 = arith.addf %21, %27 : vector<64x128xf32>
    %c3_28 = arith.constant 3 : index
    %c0_29 = arith.constant 0 : index
    %c0_30 = arith.constant 0 : index
    %c0_31 = arith.constant 0 : index
    %29 = vector.load %arg1[%c3_28, %c0_29, %c0_30, %c0_31] : memref<4x9x9x128xbf16, #tpu.memory_space<vmem>>, vector<1x8x8x128xbf16>
    %30 = vector.shape_cast %29 : vector<1x8x8x128xbf16> to vector<8x8x128xbf16>
    %31 = vector.shape_cast %30 : vector<8x8x128xbf16> to vector<64x128xbf16>
    %c4 = arith.constant 4 : index
    %c0_32 = arith.constant 0 : index
    %c0_33 = arith.constant 0 : index
    %32 = vector.load %arg2[%c4, %c0_32, %c0_33] : memref<9x128x128xbf16, #tpu.memory_space<vmem>>, vector<1x128x128xbf16>
    %33 = vector.shape_cast %32 : vector<1x128x128xbf16> to vector<128x128xbf16>
    %cst_34 = arith.constant dense<0.000000e+00> : vector<64x128xf32>
    %34 = tpu.matmul %31, %33, %cst_34 {dimension_numbers = #tpu.dot_dimension_numbers<[1], [0], [0], [1], [0, 0, 1, 1], [], []>} : vector<64x128xbf16>, vector<128x128xbf16>, vector<64x128xf32> -> vector<64x128xf32>
    %35 = arith.addf %28, %34 : vector<64x128xf32>
    %c2_35 = arith.constant 2 : index
    %c0_36 = arith.constant 0 : index
    %c1_37 = arith.constant 1 : index
    %c0_38 = arith.constant 0 : index
    %36 = vector.load %arg1[%c2_35, %c0_36, %c1_37, %c0_38] : memref<4x9x9x128xbf16, #tpu.memory_space<vmem>>, vector<1x8x8x128xbf16>
    %37 = vector.shape_cast %36 : vector<1x8x8x128xbf16> to vector<8x8x128xbf16>
    %38 = vector.shape_cast %37 : vector<8x8x128xbf16> to vector<64x128xbf16>
    %c5 = arith.constant 5 : index
    %c0_39 = arith.constant 0 : index
    %c0_40 = arith.constant 0 : index
    %39 = vector.load %arg2[%c5, %c0_39, %c0_40] : memref<9x128x128xbf16, #tpu.memory_space<vmem>>, vector<1x128x128xbf16>
    %40 = vector.shape_cast %39 : vector<1x128x128xbf16> to vector<128x128xbf16>
    %cst_41 = arith.constant dense<0.000000e+00> : vector<64x128xf32>
    %41 = tpu.matmul %38, %40, %cst_41 {dimension_numbers = #tpu.dot_dimension_numbers<[1], [0], [0], [1], [0, 0, 1, 1], [], []>} : vector<64x128xbf16>, vector<128x128xbf16>, vector<64x128xf32> -> vector<64x128xf32>
    %42 = arith.addf %35, %41 : vector<64x128xf32>
    %c0_42 = arith.constant 0 : index
    %c1_43 = arith.constant 1 : index
    %c0_44 = arith.constant 0 : index
    %c0_45 = arith.constant 0 : index
    %43 = vector.load %arg1[%c0_42, %c1_43, %c0_44, %c0_45] : memref<4x9x9x128xbf16, #tpu.memory_space<vmem>>, vector<1x8x8x128xbf16>
    %44 = vector.shape_cast %43 : vector<1x8x8x128xbf16> to vector<8x8x128xbf16>
    %45 = vector.shape_cast %44 : vector<8x8x128xbf16> to vector<64x128xbf16>
    %c6 = arith.constant 6 : index
    %c0_46 = arith.constant 0 : index
    %c0_47 = arith.constant 0 : index
    %46 = vector.load %arg2[%c6, %c0_46, %c0_47] : memref<9x128x128xbf16, #tpu.memory_space<vmem>>, vector<1x128x128xbf16>
    %47 = vector.shape_cast %46 : vector<1x128x128xbf16> to vector<128x128xbf16>
    %cst_48 = arith.constant dense<0.000000e+00> : vector<64x128xf32>
    %48 = tpu.matmul %45, %47, %cst_48 {dimension_numbers = #tpu.dot_dimension_numbers<[1], [0], [0], [1], [0, 0, 1, 1], [], []>} : vector<64x128xbf16>, vector<128x128xbf16>, vector<64x128xf32> -> vector<64x128xf32>
    %49 = arith.addf %42, %48 : vector<64x128xf32>
    %c1_49 = arith.constant 1 : index
    %c1_50 = arith.constant 1 : index
    %c0_51 = arith.constant 0 : index
    %c0_52 = arith.constant 0 : index
    %50 = vector.load %arg1[%c1_49, %c1_50, %c0_51, %c0_52] : memref<4x9x9x128xbf16, #tpu.memory_space<vmem>>, vector<1x8x8x128xbf16>
    %51 = vector.shape_cast %50 : vector<1x8x8x128xbf16> to vector<8x8x128xbf16>
    %52 = vector.shape_cast %51 : vector<8x8x128xbf16> to vector<64x128xbf16>
    %c7 = arith.constant 7 : index
    %c0_53 = arith.constant 0 : index
    %c0_54 = arith.constant 0 : index
    %53 = vector.load %arg2[%c7, %c0_53, %c0_54] : memref<9x128x128xbf16, #tpu.memory_space<vmem>>, vector<1x128x128xbf16>
    %54 = vector.shape_cast %53 : vector<1x128x128xbf16> to vector<128x128xbf16>
    %cst_55 = arith.constant dense<0.000000e+00> : vector<64x128xf32>
    %55 = tpu.matmul %52, %54, %cst_55 {dimension_numbers = #tpu.dot_dimension_numbers<[1], [0], [0], [1], [0, 0, 1, 1], [], []>} : vector<64x128xbf16>, vector<128x128xbf16>, vector<64x128xf32> -> vector<64x128xf32>
    %56 = arith.addf %49, %55 : vector<64x128xf32>
    %c0_56 = arith.constant 0 : index
    %c1_57 = arith.constant 1 : index
    %c1_58 = arith.constant 1 : index
    %c0_59 = arith.constant 0 : index
    %57 = vector.load %arg1[%c0_56, %c1_57, %c1_58, %c0_59] : memref<4x9x9x128xbf16, #tpu.memory_space<vmem>>, vector<1x8x8x128xbf16>
    %58 = vector.shape_cast %57 : vector<1x8x8x128xbf16> to vector<8x8x128xbf16>
    %59 = vector.shape_cast %58 : vector<8x8x128xbf16> to vector<64x128xbf16>
    %c8 = arith.constant 8 : index
    %c0_60 = arith.constant 0 : index
    %c0_61 = arith.constant 0 : index
    %60 = vector.load %arg2[%c8, %c0_60, %c0_61] : memref<9x128x128xbf16, #tpu.memory_space<vmem>>, vector<1x128x128xbf16>
    %61 = vector.shape_cast %60 : vector<1x128x128xbf16> to vector<128x128xbf16>
    %cst_62 = arith.constant dense<0.000000e+00> : vector<64x128xf32>
    %62 = tpu.matmul %59, %61, %cst_62 {dimension_numbers = #tpu.dot_dimension_numbers<[1], [0], [0], [1], [0, 0, 1, 1], [], []>} : vector<64x128xbf16>, vector<128x128xbf16>, vector<64x128xf32> -> vector<64x128xf32>
    %63 = arith.addf %56, %62 : vector<64x128xf32>
    %64 = arith.truncf %63 : vector<64x128xf32> to vector<64x128xbf16>
    %c0_63 = arith.constant 0 : index
    %c0_64 = arith.constant 0 : index
    %c0_65 = arith.constant 0 : index
    %65 = vector.load %arg4[%c0_63, %c0_64, %c0_65] : memref<1x64x128xbf16, #tpu.memory_space<vmem>>, vector<1x64x128xbf16>
    %66 = vector.shape_cast %65 : vector<1x64x128xbf16> to vector<64x128xbf16>
    %67 = vector.shape_cast %64 : vector<64x128xbf16> to vector<1x64x128xbf16>
    tpu.vector_store %arg4[%c0_63, %c0_64, %c0_65], %67 {strides = array<i32>} : memref<1x64x128xbf16, #tpu.memory_space<vmem>>, vector<1x64x128xbf16>,
    %cst_66 = arith.constant dense<0.000000e+00> : vector<128xf32>
    %68 = vector.multi_reduction <add>, %63, %cst_66 [0] : vector<64x128xf32> to vector<128xf32>
    %69 = vector.shape_cast %68 : vector<128xf32> to vector<1x128xf32>
    %cst_67 = arith.constant 1.562500e-02 : f32
    %70 = vector.broadcast %cst_67 : f32 to vector<1x128xf32>
    %71 = arith.mulf %69, %70 : vector<1x128xf32>
    %72 = vector.broadcast %71 : vector<1x128xf32> to vector<64x128xf32>
    %73 = arith.subf %63, %72 : vector<64x128xf32>
    %74 = arith.mulf %73, %73 : vector<64x128xf32>
    %cst_68 = arith.constant dense<0.000000e+00> : vector<128xf32>
    %75 = vector.multi_reduction <add>, %74, %cst_68 [0] : vector<64x128xf32> to vector<128xf32>
    %76 = vector.shape_cast %75 : vector<128xf32> to vector<1x128xf32>
    %77 = tpu.iota {dimensions = array<i32: 0>} : vector<8x128xi32>
    %c0_i32 = arith.constant 0 : i32
    %78 = vector.broadcast %c0_i32 : i32 to vector<8x128xi32>
    %79 = arith.cmpi eq, %77, %78 : vector<8x128xi32>
    %c1_i32 = arith.constant 1 : i32
    %80 = vector.broadcast %c1_i32 : i32 to vector<8x128xi32>
    %81 = arith.cmpi eq, %77, %80 : vector<8x128xi32>
    %cst_69 = arith.constant 0.000000e+00 : f32
    %82 = vector.shape_cast %76 : vector<1x128xf32> to vector<1x128xf32>
    %83 = vector.broadcast %82 : vector<1x128xf32> to vector<8x128xf32>
    %84 = vector.broadcast %cst_69 : f32 to vector<8x128xf32>
    %85 = arith.select %81, %83, %84 : vector<8x128xi1>, vector<8x128xf32>
    %86 = vector.shape_cast %69 : vector<1x128xf32> to vector<1x128xf32>
    %87 = vector.broadcast %86 : vector<1x128xf32> to vector<8x128xf32>
    %88 = arith.select %79, %87, %85 : vector<8x128xi1>, vector<8x128xf32>
    %c0_70 = arith.constant 0 : index
    %c0_71 = arith.constant 0 : index
    %c0_72 = arith.constant 0 : index
    %89 = vector.load %arg5[%c0_70, %c0_71, %c0_72] : memref<1x8x128xf32, #tpu.memory_space<vmem>>, vector<1x8x128xf32>
    %90 = vector.shape_cast %89 : vector<1x8x128xf32> to vector<8x128xf32>
    %91 = vector.shape_cast %88 : vector<8x128xf32> to vector<1x8x128xf32>
    tpu.vector_store %arg5[%c0_70, %c0_71, %c0_72], %91 {strides = array<i32>} : memref<1x8x128xf32, #tpu.memory_space<vmem>>, vector<1x8x128xf32>,
    %c3_73 = arith.constant 3 : index
    %c0_74 = arith.constant 0 : index
    %c0_75 = arith.constant 0 : index
    %c0_76 = arith.constant 0 : index
    %92 = vector.load %arg1[%c3_73, %c0_74, %c0_75, %c0_76] : memref<4x9x9x128xbf16, #tpu.memory_space<vmem>>, vector<1x8x8x128xbf16>
    %93 = vector.shape_cast %92 : vector<1x8x8x128xbf16> to vector<8x8x128xbf16>
    %94 = vector.shape_cast %93 : vector<8x8x128xbf16> to vector<64x128xbf16>
    %c0_77 = arith.constant 0 : index
    %c0_78 = arith.constant 0 : index
    %95 = vector.load %arg3[%c0_77, %c0_78] : memref<128x128xbf16, #tpu.memory_space<vmem>>, vector<128x128xbf16>
    %cst_79 = arith.constant dense<0.000000e+00> : vector<64x128xf32>
    %96 = tpu.matmul %94, %95, %cst_79 {dimension_numbers = #tpu.dot_dimension_numbers<[1], [0], [0], [1], [0, 0, 1, 1], [], []>} : vector<64x128xbf16>, vector<128x128xbf16>, vector<64x128xf32> -> vector<64x128xf32>
    %97 = arith.truncf %96 : vector<64x128xf32> to vector<64x128xbf16>
    %c0_80 = arith.constant 0 : index
    %c0_81 = arith.constant 0 : index
    %c0_82 = arith.constant 0 : index
    %98 = vector.load %arg6[%c0_80, %c0_81, %c0_82] : memref<1x64x128xbf16, #tpu.memory_space<vmem>>, vector<1x64x128xbf16>
    %99 = vector.shape_cast %98 : vector<1x64x128xbf16> to vector<64x128xbf16>
    %100 = vector.shape_cast %97 : vector<64x128xbf16> to vector<1x64x128xbf16>
    tpu.vector_store %arg6[%c0_80, %c0_81, %c0_82], %100 {strides = array<i32>} : memref<1x64x128xbf16, #tpu.memory_space<vmem>>, vector<1x64x128xbf16>,
    %cst_83 = arith.constant dense<0.000000e+00> : vector<128xf32>
    %101 = vector.multi_reduction <add>, %96, %cst_83 [0] : vector<64x128xf32> to vector<128xf32>
    %102 = vector.shape_cast %101 : vector<128xf32> to vector<1x128xf32>
    %cst_84 = arith.constant 1.562500e-02 : f32
    %103 = vector.broadcast %cst_84 : f32 to vector<1x128xf32>
    %104 = arith.mulf %102, %103 : vector<1x128xf32>
    %105 = vector.broadcast %104 : vector<1x128xf32> to vector<64x128xf32>
    %106 = arith.subf %96, %105 : vector<64x128xf32>
    %107 = arith.mulf %106, %106 : vector<64x128xf32>
    %cst_85 = arith.constant dense<0.000000e+00> : vector<128xf32>
    %108 = vector.multi_reduction <add>, %107, %cst_85 [0] : vector<64x128xf32> to vector<128xf32>
    %109 = vector.shape_cast %108 : vector<128xf32> to vector<1x128xf32>
    %110 = tpu.iota {dimensions = array<i32: 0>} : vector<8x128xi32>
    %c0_i32_86 = arith.constant 0 : i32
    %111 = vector.broadcast %c0_i32_86 : i32 to vector<8x128xi32>
    %112 = arith.cmpi eq, %110, %111 : vector<8x128xi32>
    %c1_i32_87 = arith.constant 1 : i32
    %113 = vector.broadcast %c1_i32_87 : i32 to vector<8x128xi32>
    %114 = arith.cmpi eq, %110, %113 : vector<8x128xi32>
    %cst_88 = arith.constant 0.000000e+00 : f32
    %115 = vector.shape_cast %109 : vector<1x128xf32> to vector<1x128xf32>
    %116 = vector.broadcast %115 : vector<1x128xf32> to vector<8x128xf32>
    %117 = vector.broadcast %cst_88 : f32 to vector<8x128xf32>
    %118 = arith.select %114, %116, %117 : vector<8x128xi1>, vector<8x128xf32>
    %119 = vector.shape_cast %102 : vector<1x128xf32> to vector<1x128xf32>
    %120 = vector.broadcast %119 : vector<1x128xf32> to vector<8x128xf32>
    %121 = arith.select %112, %120, %118 : vector<8x128xi1>, vector<8x128xf32>
    %c0_89 = arith.constant 0 : index
    %c0_90 = arith.constant 0 : index
    %c0_91 = arith.constant 0 : index
    %122 = vector.load %arg7[%c0_89, %c0_90, %c0_91] : memref<1x8x128xf32, #tpu.memory_space<vmem>>, vector<1x8x128xf32>
    %123 = vector.shape_cast %122 : vector<1x8x128xf32> to vector<8x128xf32>
    %124 = vector.shape_cast %121 : vector<8x128xf32> to vector<1x8x128xf32>
    tpu.vector_store %arg7[%c0_89, %c0_90, %c0_91], %124 {strides = array<i32>} : memref<1x8x128xf32, #tpu.memory_space<vmem>>, vector<1x8x128xf32>,
    return
  }
  func.func @transform_0(%arg0: i32) -> (i32, i32, i32, i32) {
    %c0_i32 = arith.constant 0 : i32
    %c0_i32_0 = arith.constant 0 : i32
    %c0_i32_1 = arith.constant 0 : i32
    %c0_i32_2 = arith.constant 0 : i32
    return %arg0, %c0_i32, %c0_i32_0, %c0_i32_1 : i32, i32, i32, i32
  }
  func.func @transform_1(%arg0: i32) -> (i32, i32, i32) {
    %c0_i32 = arith.constant 0 : i32
    %c0_i32_0 = arith.constant 0 : i32
    %c0_i32_1 = arith.constant 0 : i32
    %c0_i32_2 = arith.constant 0 : i32
    return %c0_i32, %c0_i32_0, %c0_i32_1 : i32, i32, i32
  }
  func.func @transform_2(%arg0: i32) -> (i32, i32) {
    %c0_i32 = arith.constant 0 : i32
    %c0_i32_0 = arith.constant 0 : i32
    %c0_i32_1 = arith.constant 0 : i32
    return %c0_i32, %c0_i32_0 : i32, i32
  }
  func.func @transform_3(%arg0: i32) -> (i32, i32, i32) {
    %c0_i32 = arith.constant 0 : i32
    %c0_i32_0 = arith.constant 0 : i32
    %c0_i32_1 = arith.constant 0 : i32
    return %arg0, %c0_i32, %c0_i32_0 : i32, i32, i32
  }
  func.func @transform_4(%arg0: i32) -> (i32, i32, i32) {
    %c0_i32 = arith.constant 0 : i32
    %c0_i32_0 = arith.constant 0 : i32
    %c0_i32_1 = arith.constant 0 : i32
    return %arg0, %c0_i32, %c0_i32_0 : i32, i32, i32
  }
  func.func @transform_5(%arg0: i32) -> (i32, i32, i32) {
    %c0_i32 = arith.constant 0 : i32
    %c0_i32_0 = arith.constant 0 : i32
    %c0_i32_1 = arith.constant 0 : i32
    return %arg0, %c0_i32, %c0_i32_0 : i32, i32, i32
  }
  func.func @transform_6(%arg0: i32) -> (i32, i32, i32) {
    %c0_i32 = arith.constant 0 : i32
    %c0_i32_0 = arith.constant 0 : i32
    %c0_i32_1 = arith.constant 0 : i32
    return %arg0, %c0_i32, %c0_i32_0 : i32, i32, i32
  }
}

module attributes {stable_mosaic.version = 11 : i64} {
  func.func @_bn_relu_kernel(%arg0: i32, %arg1: memref<64x128xbf16, #tpu.memory_space<vmem>>, %arg2: memref<1x128xf32, #tpu.memory_space<vmem>>, %arg3: memref<1x128xf32, #tpu.memory_space<vmem>>, %arg4: memref<64x128xbf16, #tpu.memory_space<vmem>>) attributes {dimension_semantics = [#tpu.dimension_semantics<parallel>], iteration_bounds = array<i64: 2>, scalar_prefetch = 0 : i64, scratch_operands = 0 : i64, tpu.core_type = #tpu.core_type<tc>, window_params = [{transform_indices = @transform_0, window_bounds = array<i64: 64, 128>}, {pipeline_mode = #tpu.pipeline_mode<synchronous>, transform_indices = @transform_1, window_bounds = array<i64: 1, 128>}, {pipeline_mode = #tpu.pipeline_mode<synchronous>, transform_indices = @transform_2, window_bounds = array<i64: 1, 128>}, {transform_indices = @transform_3, window_bounds = array<i64: 64, 128>}]} {
    %c0 = arith.constant 0 : index
    %c0_0 = arith.constant 0 : index
    %0 = vector.load %arg1[%c0, %c0_0] : memref<64x128xbf16, #tpu.memory_space<vmem>>, vector<64x128xbf16>
    %1 = arith.extf %0 : vector<64x128xbf16> to vector<64x128xf32>
    %c0_1 = arith.constant 0 : index
    %c0_2 = arith.constant 0 : index
    %2 = vector.load %arg2[%c0_1, %c0_2] : memref<1x128xf32, #tpu.memory_space<vmem>>, vector<1x128xf32>
    %3 = vector.broadcast %2 : vector<1x128xf32> to vector<64x128xf32>
    %4 = arith.mulf %1, %3 : vector<64x128xf32>
    %c0_3 = arith.constant 0 : index
    %c0_4 = arith.constant 0 : index
    %5 = vector.load %arg3[%c0_3, %c0_4] : memref<1x128xf32, #tpu.memory_space<vmem>>, vector<1x128xf32>
    %6 = vector.broadcast %5 : vector<1x128xf32> to vector<64x128xf32>
    %7 = arith.addf %4, %6 : vector<64x128xf32>
    %cst = arith.constant 0.000000e+00 : f32
    %8 = vector.broadcast %cst : f32 to vector<64x128xf32>
    %9 = arith.maximumf %7, %8 : vector<64x128xf32>
    %10 = arith.truncf %9 : vector<64x128xf32> to vector<64x128xbf16>
    %c0_5 = arith.constant 0 : index
    %c0_6 = arith.constant 0 : index
    %11 = vector.load %arg4[%c0_5, %c0_6] : memref<64x128xbf16, #tpu.memory_space<vmem>>, vector<64x128xbf16>
    tpu.vector_store %arg4[%c0_5, %c0_6], %10 {strides = array<i32>} : memref<64x128xbf16, #tpu.memory_space<vmem>>, vector<64x128xbf16>,
    return
  }
  func.func @transform_0(%arg0: i32) -> (i32, i32) {
    %c0_i32 = arith.constant 0 : i32
    %c0_i32_0 = arith.constant 0 : i32
    return %arg0, %c0_i32 : i32, i32
  }
  func.func @transform_1(%arg0: i32) -> (i32, i32) {
    %c0_i32 = arith.constant 0 : i32
    %c0_i32_0 = arith.constant 0 : i32
    %c0_i32_1 = arith.constant 0 : i32
    return %c0_i32, %c0_i32_0 : i32, i32
  }
  func.func @transform_2(%arg0: i32) -> (i32, i32) {
    %c0_i32 = arith.constant 0 : i32
    %c0_i32_0 = arith.constant 0 : i32
    %c0_i32_1 = arith.constant 0 : i32
    return %c0_i32, %c0_i32_0 : i32, i32
  }
  func.func @transform_3(%arg0: i32) -> (i32, i32) {
    %c0_i32 = arith.constant 0 : i32
    %c0_i32_0 = arith.constant 0 : i32
    return %arg0, %c0_i32 : i32, i32
  }
}

module attributes {stable_mosaic.version = 11 : i64} {
  func.func @kernel(%arg0: i32, %arg1: memref<64x128xbf16, #tpu.memory_space<vmem>>, %arg2: memref<1x128xf32, #tpu.memory_space<vmem>>, %arg3: memref<1x128xf32, #tpu.memory_space<vmem>>, %arg4: memref<64x128xbf16, #tpu.memory_space<vmem>>, %arg5: memref<1x128xf32, #tpu.memory_space<vmem>>, %arg6: memref<1x128xf32, #tpu.memory_space<vmem>>, %arg7: memref<64x8xf32, #tpu.memory_space<vmem>>) attributes {dimension_semantics = [#tpu.dimension_semantics<parallel>], iteration_bounds = array<i64: 2>, scalar_prefetch = 0 : i64, scratch_operands = 0 : i64, tpu.core_type = #tpu.core_type<tc>, window_params = [{transform_indices = @transform_0, window_bounds = array<i64: 64, 128>}, {pipeline_mode = #tpu.pipeline_mode<synchronous>, transform_indices = @transform_1, window_bounds = array<i64: 1, 128>}, {pipeline_mode = #tpu.pipeline_mode<synchronous>, transform_indices = @transform_2, window_bounds = array<i64: 1, 128>}, {transform_indices = @transform_3, window_bounds = array<i64: 64, 128>}, {pipeline_mode = #tpu.pipeline_mode<synchronous>, transform_indices = @transform_4, window_bounds = array<i64: 1, 128>}, {pipeline_mode = #tpu.pipeline_mode<synchronous>, transform_indices = @transform_5, window_bounds = array<i64: 1, 128>}, {transform_indices = @transform_6, window_bounds = array<i64: 64, 8>}]} {
    %c0 = arith.constant 0 : index
    %c0_0 = arith.constant 0 : index
    %0 = vector.load %arg1[%c0, %c0_0] : memref<64x128xbf16, #tpu.memory_space<vmem>>, vector<64x128xbf16>
    %1 = arith.extf %0 : vector<64x128xbf16> to vector<64x128xf32>
    %c0_1 = arith.constant 0 : index
    %c0_2 = arith.constant 0 : index
    %2 = vector.load %arg2[%c0_1, %c0_2] : memref<1x128xf32, #tpu.memory_space<vmem>>, vector<1x128xf32>
    %3 = vector.broadcast %2 : vector<1x128xf32> to vector<64x128xf32>
    %4 = arith.mulf %1, %3 : vector<64x128xf32>
    %c0_3 = arith.constant 0 : index
    %c0_4 = arith.constant 0 : index
    %5 = vector.load %arg3[%c0_3, %c0_4] : memref<1x128xf32, #tpu.memory_space<vmem>>, vector<1x128xf32>
    %6 = vector.broadcast %5 : vector<1x128xf32> to vector<64x128xf32>
    %7 = arith.addf %4, %6 : vector<64x128xf32>
    %c0_5 = arith.constant 0 : index
    %c0_6 = arith.constant 0 : index
    %8 = vector.load %arg4[%c0_5, %c0_6] : memref<64x128xbf16, #tpu.memory_space<vmem>>, vector<64x128xbf16>
    %9 = arith.extf %8 : vector<64x128xbf16> to vector<64x128xf32>
    %c0_7 = arith.constant 0 : index
    %c0_8 = arith.constant 0 : index
    %10 = vector.load %arg5[%c0_7, %c0_8] : memref<1x128xf32, #tpu.memory_space<vmem>>, vector<1x128xf32>
    %11 = vector.broadcast %10 : vector<1x128xf32> to vector<64x128xf32>
    %12 = arith.mulf %9, %11 : vector<64x128xf32>
    %13 = arith.addf %7, %12 : vector<64x128xf32>
    %c0_9 = arith.constant 0 : index
    %c0_10 = arith.constant 0 : index
    %14 = vector.load %arg6[%c0_9, %c0_10] : memref<1x128xf32, #tpu.memory_space<vmem>>, vector<1x128xf32>
    %15 = vector.broadcast %14 : vector<1x128xf32> to vector<64x128xf32>
    %16 = arith.addf %13, %15 : vector<64x128xf32>
    %cst = arith.constant 0.000000e+00 : f32
    %17 = vector.broadcast %cst : f32 to vector<64x128xf32>
    %18 = arith.maximumf %16, %17 : vector<64x128xf32>
    %19 = vector.extract_strided_slice %18 {offsets = [0, 0], sizes = [64, 8], strides = [1, 1]} : vector<64x128xf32> to vector<64x8xf32>
    %c0_11 = arith.constant 0 : index
    %c0_12 = arith.constant 0 : index
    %20 = vector.load %arg7[%c0_11, %c0_12] : memref<64x8xf32, #tpu.memory_space<vmem>>, vector<64x8xf32>
    tpu.vector_store %arg7[%c0_11, %c0_12], %19 {strides = array<i32>} : memref<64x8xf32, #tpu.memory_space<vmem>>, vector<64x8xf32>,
    return
  }
  func.func @transform_0(%arg0: i32) -> (i32, i32) {
    %c0_i32 = arith.constant 0 : i32
    %c0_i32_0 = arith.constant 0 : i32
    return %arg0, %c0_i32 : i32, i32
  }
  func.func @transform_1(%arg0: i32) -> (i32, i32) {
    %c0_i32 = arith.constant 0 : i32
    %c0_i32_0 = arith.constant 0 : i32
    %c0_i32_1 = arith.constant 0 : i32
    return %c0_i32, %c0_i32_0 : i32, i32
  }
  func.func @transform_2(%arg0: i32) -> (i32, i32) {
    %c0_i32 = arith.constant 0 : i32
    %c0_i32_0 = arith.constant 0 : i32
    %c0_i32_1 = arith.constant 0 : i32
    return %c0_i32, %c0_i32_0 : i32, i32
  }
  func.func @transform_3(%arg0: i32) -> (i32, i32) {
    %c0_i32 = arith.constant 0 : i32
    %c0_i32_0 = arith.constant 0 : i32
    return %arg0, %c0_i32 : i32, i32
  }
  func.func @transform_4(%arg0: i32) -> (i32, i32) {
    %c0_i32 = arith.constant 0 : i32
    %c0_i32_0 = arith.constant 0 : i32
    %c0_i32_1 = arith.constant 0 : i32
    return %c0_i32, %c0_i32_0 : i32, i32
  }
  func.func @transform_5(%arg0: i32) -> (i32, i32) {
    %c0_i32 = arith.constant 0 : i32
    %c0_i32_0 = arith.constant 0 : i32
    %c0_i32_1 = arith.constant 0 : i32
    return %c0_i32, %c0_i32_0 : i32, i32
  }
  func.func @transform_6(%arg0: i32) -> (i32, i32) {
    %c0_i32 = arith.constant 0 : i32
    %c0_i32_0 = arith.constant 0 : i32
    return %arg0, %c0_i32 : i32, i32
  }
}

module attributes {stable_mosaic.version = 11 : i64} {
  func.func @kernel(%arg0: i32, %arg1: memref<1x10x10x128xbf16, #tpu.memory_space<vmem>>, %arg2: memref<9x128x128xbf16, #tpu.memory_space<vmem>>, %arg3: memref<1x64x128xbf16, #tpu.memory_space<vmem>>, %arg4: memref<1x8x128xf32, #tpu.memory_space<vmem>>) attributes {dimension_semantics = [#tpu.dimension_semantics<parallel>], iteration_bounds = array<i64: 2>, scalar_prefetch = 0 : i64, scratch_operands = 0 : i64, tpu.core_type = #tpu.core_type<tc>, window_params = [{transform_indices = @transform_0, window_bounds = array<i64: 1, 10, 10, 128>}, {pipeline_mode = #tpu.pipeline_mode<synchronous>, transform_indices = @transform_1, window_bounds = array<i64: 9, 128, 128>}, {transform_indices = @transform_2, window_bounds = array<i64: 1, 64, 128>}, {transform_indices = @transform_3, window_bounds = array<i64: 1, 8, 128>}]} {
    %cst = arith.constant 0.000000e+00 : f32
    %0 = vector.broadcast %cst : f32 to vector<64x128xf32>
    %c0 = arith.constant 0 : index
    %c0_0 = arith.constant 0 : index
    %c0_1 = arith.constant 0 : index
    %c0_2 = arith.constant 0 : index
    %1 = vector.load %arg1[%c0, %c0_0, %c0_1, %c0_2] : memref<1x10x10x128xbf16, #tpu.memory_space<vmem>>, vector<1x8x8x128xbf16>
    %2 = vector.shape_cast %1 : vector<1x8x8x128xbf16> to vector<8x8x128xbf16>
    %3 = vector.shape_cast %2 : vector<8x8x128xbf16> to vector<64x128xbf16>
    %c0_3 = arith.constant 0 : index
    %c0_4 = arith.constant 0 : index
    %c0_5 = arith.constant 0 : index
    %4 = vector.load %arg2[%c0_3, %c0_4, %c0_5] : memref<9x128x128xbf16, #tpu.memory_space<vmem>>, vector<1x128x128xbf16>
    %5 = vector.shape_cast %4 : vector<1x128x128xbf16> to vector<128x128xbf16>
    %cst_6 = arith.constant dense<0.000000e+00> : vector<64x128xf32>
    %6 = tpu.matmul %3, %5, %cst_6 {dimension_numbers = #tpu.dot_dimension_numbers<[1], [0], [0], [1], [0, 0, 1, 1], [], []>} : vector<64x128xbf16>, vector<128x128xbf16>, vector<64x128xf32> -> vector<64x128xf32>
    %7 = arith.addf %0, %6 : vector<64x128xf32>
    %c0_7 = arith.constant 0 : index
    %c0_8 = arith.constant 0 : index
    %c1 = arith.constant 1 : index
    %c0_9 = arith.constant 0 : index
    %8 = vector.load %arg1[%c0_7, %c0_8, %c1, %c0_9] : memref<1x10x10x128xbf16, #tpu.memory_space<vmem>>, vector<1x8x8x128xbf16>
    %9 = vector.shape_cast %8 : vector<1x8x8x128xbf16> to vector<8x8x128xbf16>
    %10 = vector.shape_cast %9 : vector<8x8x128xbf16> to vector<64x128xbf16>
    %c1_10 = arith.constant 1 : index
    %c0_11 = arith.constant 0 : index
    %c0_12 = arith.constant 0 : index
    %11 = vector.load %arg2[%c1_10, %c0_11, %c0_12] : memref<9x128x128xbf16, #tpu.memory_space<vmem>>, vector<1x128x128xbf16>
    %12 = vector.shape_cast %11 : vector<1x128x128xbf16> to vector<128x128xbf16>
    %cst_13 = arith.constant dense<0.000000e+00> : vector<64x128xf32>
    %13 = tpu.matmul %10, %12, %cst_13 {dimension_numbers = #tpu.dot_dimension_numbers<[1], [0], [0], [1], [0, 0, 1, 1], [], []>} : vector<64x128xbf16>, vector<128x128xbf16>, vector<64x128xf32> -> vector<64x128xf32>
    %14 = arith.addf %7, %13 : vector<64x128xf32>
    %c0_14 = arith.constant 0 : index
    %c0_15 = arith.constant 0 : index
    %c2 = arith.constant 2 : index
    %c0_16 = arith.constant 0 : index
    %15 = vector.load %arg1[%c0_14, %c0_15, %c2, %c0_16] : memref<1x10x10x128xbf16, #tpu.memory_space<vmem>>, vector<1x8x8x128xbf16>
    %16 = vector.shape_cast %15 : vector<1x8x8x128xbf16> to vector<8x8x128xbf16>
    %17 = vector.shape_cast %16 : vector<8x8x128xbf16> to vector<64x128xbf16>
    %c2_17 = arith.constant 2 : index
    %c0_18 = arith.constant 0 : index
    %c0_19 = arith.constant 0 : index
    %18 = vector.load %arg2[%c2_17, %c0_18, %c0_19] : memref<9x128x128xbf16, #tpu.memory_space<vmem>>, vector<1x128x128xbf16>
    %19 = vector.shape_cast %18 : vector<1x128x128xbf16> to vector<128x128xbf16>
    %cst_20 = arith.constant dense<0.000000e+00> : vector<64x128xf32>
    %20 = tpu.matmul %17, %19, %cst_20 {dimension_numbers = #tpu.dot_dimension_numbers<[1], [0], [0], [1], [0, 0, 1, 1], [], []>} : vector<64x128xbf16>, vector<128x128xbf16>, vector<64x128xf32> -> vector<64x128xf32>
    %21 = arith.addf %14, %20 : vector<64x128xf32>
    %c0_21 = arith.constant 0 : index
    %c1_22 = arith.constant 1 : index
    %c0_23 = arith.constant 0 : index
    %c0_24 = arith.constant 0 : index
    %22 = vector.load %arg1[%c0_21, %c1_22, %c0_23, %c0_24] : memref<1x10x10x128xbf16, #tpu.memory_space<vmem>>, vector<1x8x8x128xbf16>
    %23 = vector.shape_cast %22 : vector<1x8x8x128xbf16> to vector<8x8x128xbf16>
    %24 = vector.shape_cast %23 : vector<8x8x128xbf16> to vector<64x128xbf16>
    %c3 = arith.constant 3 : index
    %c0_25 = arith.constant 0 : index
    %c0_26 = arith.constant 0 : index
    %25 = vector.load %arg2[%c3, %c0_25, %c0_26] : memref<9x128x128xbf16, #tpu.memory_space<vmem>>, vector<1x128x128xbf16>
    %26 = vector.shape_cast %25 : vector<1x128x128xbf16> to vector<128x128xbf16>
    %cst_27 = arith.constant dense<0.000000e+00> : vector<64x128xf32>
    %27 = tpu.matmul %24, %26, %cst_27 {dimension_numbers = #tpu.dot_dimension_numbers<[1], [0], [0], [1], [0, 0, 1, 1], [], []>} : vector<64x128xbf16>, vector<128x128xbf16>, vector<64x128xf32> -> vector<64x128xf32>
    %28 = arith.addf %21, %27 : vector<64x128xf32>
    %c0_28 = arith.constant 0 : index
    %c1_29 = arith.constant 1 : index
    %c1_30 = arith.constant 1 : index
    %c0_31 = arith.constant 0 : index
    %29 = vector.load %arg1[%c0_28, %c1_29, %c1_30, %c0_31] : memref<1x10x10x128xbf16, #tpu.memory_space<vmem>>, vector<1x8x8x128xbf16>
    %30 = vector.shape_cast %29 : vector<1x8x8x128xbf16> to vector<8x8x128xbf16>
    %31 = vector.shape_cast %30 : vector<8x8x128xbf16> to vector<64x128xbf16>
    %c4 = arith.constant 4 : index
    %c0_32 = arith.constant 0 : index
    %c0_33 = arith.constant 0 : index
    %32 = vector.load %arg2[%c4, %c0_32, %c0_33] : memref<9x128x128xbf16, #tpu.memory_space<vmem>>, vector<1x128x128xbf16>
    %33 = vector.shape_cast %32 : vector<1x128x128xbf16> to vector<128x128xbf16>
    %cst_34 = arith.constant dense<0.000000e+00> : vector<64x128xf32>
    %34 = tpu.matmul %31, %33, %cst_34 {dimension_numbers = #tpu.dot_dimension_numbers<[1], [0], [0], [1], [0, 0, 1, 1], [], []>} : vector<64x128xbf16>, vector<128x128xbf16>, vector<64x128xf32> -> vector<64x128xf32>
    %35 = arith.addf %28, %34 : vector<64x128xf32>
    %c0_35 = arith.constant 0 : index
    %c1_36 = arith.constant 1 : index
    %c2_37 = arith.constant 2 : index
    %c0_38 = arith.constant 0 : index
    %36 = vector.load %arg1[%c0_35, %c1_36, %c2_37, %c0_38] : memref<1x10x10x128xbf16, #tpu.memory_space<vmem>>, vector<1x8x8x128xbf16>
    %37 = vector.shape_cast %36 : vector<1x8x8x128xbf16> to vector<8x8x128xbf16>
    %38 = vector.shape_cast %37 : vector<8x8x128xbf16> to vector<64x128xbf16>
    %c5 = arith.constant 5 : index
    %c0_39 = arith.constant 0 : index
    %c0_40 = arith.constant 0 : index
    %39 = vector.load %arg2[%c5, %c0_39, %c0_40] : memref<9x128x128xbf16, #tpu.memory_space<vmem>>, vector<1x128x128xbf16>
    %40 = vector.shape_cast %39 : vector<1x128x128xbf16> to vector<128x128xbf16>
    %cst_41 = arith.constant dense<0.000000e+00> : vector<64x128xf32>
    %41 = tpu.matmul %38, %40, %cst_41 {dimension_numbers = #tpu.dot_dimension_numbers<[1], [0], [0], [1], [0, 0, 1, 1], [], []>} : vector<64x128xbf16>, vector<128x128xbf16>, vector<64x128xf32> -> vector<64x128xf32>
    %42 = arith.addf %35, %41 : vector<64x128xf32>
    %c0_42 = arith.constant 0 : index
    %c2_43 = arith.constant 2 : index
    %c0_44 = arith.constant 0 : index
    %c0_45 = arith.constant 0 : index
    %43 = vector.load %arg1[%c0_42, %c2_43, %c0_44, %c0_45] : memref<1x10x10x128xbf16, #tpu.memory_space<vmem>>, vector<1x8x8x128xbf16>
    %44 = vector.shape_cast %43 : vector<1x8x8x128xbf16> to vector<8x8x128xbf16>
    %45 = vector.shape_cast %44 : vector<8x8x128xbf16> to vector<64x128xbf16>
    %c6 = arith.constant 6 : index
    %c0_46 = arith.constant 0 : index
    %c0_47 = arith.constant 0 : index
    %46 = vector.load %arg2[%c6, %c0_46, %c0_47] : memref<9x128x128xbf16, #tpu.memory_space<vmem>>, vector<1x128x128xbf16>
    %47 = vector.shape_cast %46 : vector<1x128x128xbf16> to vector<128x128xbf16>
    %cst_48 = arith.constant dense<0.000000e+00> : vector<64x128xf32>
    %48 = tpu.matmul %45, %47, %cst_48 {dimension_numbers = #tpu.dot_dimension_numbers<[1], [0], [0], [1], [0, 0, 1, 1], [], []>} : vector<64x128xbf16>, vector<128x128xbf16>, vector<64x128xf32> -> vector<64x128xf32>
    %49 = arith.addf %42, %48 : vector<64x128xf32>
    %c0_49 = arith.constant 0 : index
    %c2_50 = arith.constant 2 : index
    %c1_51 = arith.constant 1 : index
    %c0_52 = arith.constant 0 : index
    %50 = vector.load %arg1[%c0_49, %c2_50, %c1_51, %c0_52] : memref<1x10x10x128xbf16, #tpu.memory_space<vmem>>, vector<1x8x8x128xbf16>
    %51 = vector.shape_cast %50 : vector<1x8x8x128xbf16> to vector<8x8x128xbf16>
    %52 = vector.shape_cast %51 : vector<8x8x128xbf16> to vector<64x128xbf16>
    %c7 = arith.constant 7 : index
    %c0_53 = arith.constant 0 : index
    %c0_54 = arith.constant 0 : index
    %53 = vector.load %arg2[%c7, %c0_53, %c0_54] : memref<9x128x128xbf16, #tpu.memory_space<vmem>>, vector<1x128x128xbf16>
    %54 = vector.shape_cast %53 : vector<1x128x128xbf16> to vector<128x128xbf16>
    %cst_55 = arith.constant dense<0.000000e+00> : vector<64x128xf32>
    %55 = tpu.matmul %52, %54, %cst_55 {dimension_numbers = #tpu.dot_dimension_numbers<[1], [0], [0], [1], [0, 0, 1, 1], [], []>} : vector<64x128xbf16>, vector<128x128xbf16>, vector<64x128xf32> -> vector<64x128xf32>
    %56 = arith.addf %49, %55 : vector<64x128xf32>
    %c0_56 = arith.constant 0 : index
    %c2_57 = arith.constant 2 : index
    %c2_58 = arith.constant 2 : index
    %c0_59 = arith.constant 0 : index
    %57 = vector.load %arg1[%c0_56, %c2_57, %c2_58, %c0_59] : memref<1x10x10x128xbf16, #tpu.memory_space<vmem>>, vector<1x8x8x128xbf16>
    %58 = vector.shape_cast %57 : vector<1x8x8x128xbf16> to vector<8x8x128xbf16>
    %59 = vector.shape_cast %58 : vector<8x8x128xbf16> to vector<64x128xbf16>
    %c8 = arith.constant 8 : index
    %c0_60 = arith.constant 0 : index
    %c0_61 = arith.constant 0 : index
    %60 = vector.load %arg2[%c8, %c0_60, %c0_61] : memref<9x128x128xbf16, #tpu.memory_space<vmem>>, vector<1x128x128xbf16>
    %61 = vector.shape_cast %60 : vector<1x128x128xbf16> to vector<128x128xbf16>
    %cst_62 = arith.constant dense<0.000000e+00> : vector<64x128xf32>
    %62 = tpu.matmul %59, %61, %cst_62 {dimension_numbers = #tpu.dot_dimension_numbers<[1], [0], [0], [1], [0, 0, 1, 1], [], []>} : vector<64x128xbf16>, vector<128x128xbf16>, vector<64x128xf32> -> vector<64x128xf32>
    %63 = arith.addf %56, %62 : vector<64x128xf32>
    %64 = arith.truncf %63 : vector<64x128xf32> to vector<64x128xbf16>
    %c0_63 = arith.constant 0 : index
    %c0_64 = arith.constant 0 : index
    %c0_65 = arith.constant 0 : index
    %65 = vector.load %arg3[%c0_63, %c0_64, %c0_65] : memref<1x64x128xbf16, #tpu.memory_space<vmem>>, vector<1x64x128xbf16>
    %66 = vector.shape_cast %65 : vector<1x64x128xbf16> to vector<64x128xbf16>
    %67 = vector.shape_cast %64 : vector<64x128xbf16> to vector<1x64x128xbf16>
    tpu.vector_store %arg3[%c0_63, %c0_64, %c0_65], %67 {strides = array<i32>} : memref<1x64x128xbf16, #tpu.memory_space<vmem>>, vector<1x64x128xbf16>,
    %cst_66 = arith.constant dense<0.000000e+00> : vector<128xf32>
    %68 = vector.multi_reduction <add>, %63, %cst_66 [0] : vector<64x128xf32> to vector<128xf32>
    %69 = vector.shape_cast %68 : vector<128xf32> to vector<1x128xf32>
    %cst_67 = arith.constant 1.562500e-02 : f32
    %70 = vector.broadcast %cst_67 : f32 to vector<1x128xf32>
    %71 = arith.mulf %69, %70 : vector<1x128xf32>
    %72 = vector.broadcast %71 : vector<1x128xf32> to vector<64x128xf32>
    %73 = arith.subf %63, %72 : vector<64x128xf32>
    %74 = arith.mulf %73, %73 : vector<64x128xf32>
    %cst_68 = arith.constant dense<0.000000e+00> : vector<128xf32>
    %75 = vector.multi_reduction <add>, %74, %cst_68 [0] : vector<64x128xf32> to vector<128xf32>
    %76 = vector.shape_cast %75 : vector<128xf32> to vector<1x128xf32>
    %77 = tpu.iota {dimensions = array<i32: 0>} : vector<8x128xi32>
    %c0_i32 = arith.constant 0 : i32
    %78 = vector.broadcast %c0_i32 : i32 to vector<8x128xi32>
    %79 = arith.cmpi eq, %77, %78 : vector<8x128xi32>
    %c1_i32 = arith.constant 1 : i32
    %80 = vector.broadcast %c1_i32 : i32 to vector<8x128xi32>
    %81 = arith.cmpi eq, %77, %80 : vector<8x128xi32>
    %cst_69 = arith.constant 0.000000e+00 : f32
    %82 = vector.shape_cast %76 : vector<1x128xf32> to vector<1x128xf32>
    %83 = vector.broadcast %82 : vector<1x128xf32> to vector<8x128xf32>
    %84 = vector.broadcast %cst_69 : f32 to vector<8x128xf32>
    %85 = arith.select %81, %83, %84 : vector<8x128xi1>, vector<8x128xf32>
    %86 = vector.shape_cast %69 : vector<1x128xf32> to vector<1x128xf32>
    %87 = vector.broadcast %86 : vector<1x128xf32> to vector<8x128xf32>
    %88 = arith.select %79, %87, %85 : vector<8x128xi1>, vector<8x128xf32>
    %c0_70 = arith.constant 0 : index
    %c0_71 = arith.constant 0 : index
    %c0_72 = arith.constant 0 : index
    %89 = vector.load %arg4[%c0_70, %c0_71, %c0_72] : memref<1x8x128xf32, #tpu.memory_space<vmem>>, vector<1x8x128xf32>
    %90 = vector.shape_cast %89 : vector<1x8x128xf32> to vector<8x128xf32>
    %91 = vector.shape_cast %88 : vector<8x128xf32> to vector<1x8x128xf32>
    tpu.vector_store %arg4[%c0_70, %c0_71, %c0_72], %91 {strides = array<i32>} : memref<1x8x128xf32, #tpu.memory_space<vmem>>, vector<1x8x128xf32>,
    return
  }
  func.func @transform_0(%arg0: i32) -> (i32, i32, i32, i32) {
    %c0_i32 = arith.constant 0 : i32
    %c0_i32_0 = arith.constant 0 : i32
    %c0_i32_1 = arith.constant 0 : i32
    %c0_i32_2 = arith.constant 0 : i32
    return %arg0, %c0_i32, %c0_i32_0, %c0_i32_1 : i32, i32, i32, i32
  }
  func.func @transform_1(%arg0: i32) -> (i32, i32, i32) {
    %c0_i32 = arith.constant 0 : i32
    %c0_i32_0 = arith.constant 0 : i32
    %c0_i32_1 = arith.constant 0 : i32
    %c0_i32_2 = arith.constant 0 : i32
    return %c0_i32, %c0_i32_0, %c0_i32_1 : i32, i32, i32
  }
  func.func @transform_2(%arg0: i32) -> (i32, i32, i32) {
    %c0_i32 = arith.constant 0 : i32
    %c0_i32_0 = arith.constant 0 : i32
    %c0_i32_1 = arith.constant 0 : i32
    return %arg0, %c0_i32, %c0_i32_0 : i32, i32, i32
  }
  func.func @transform_3(%arg0: i32) -> (i32, i32, i32) {
    %c0_i32 = arith.constant 0 : i32
    %c0_i32_0 = arith.constant 0 : i32
    %c0_i32_1 = arith.constant 0 : i32
    return %arg0, %c0_i32, %c0_i32_0 : i32, i32, i32
  }
}

</mosaic_0001>

<llo_original>
// kernel: residual_block.5
$region0: #{residual_block.5}
  #allocation0 [shape = 'u32[]', space=smem, size = 0x4, offset = 0x4, fixed_abs, tag = 'smem constant byte address 0x4 - core index']
  #allocation1 [shape = 'u32[144,128]{1,0:T(1,128)}', space=vmem, size = 0x12000, scoped, tag = 'internal scratch']
  %s0 = inlined_call_operand.vmem [shape: bf16[128,128], index: 0, kind: input, shape index: {}]
  %s1 = inlined_call_operand.vmem [shape: f32[1,128], index: 1, kind: input, shape index: {}]
  %s2 = inlined_call_operand.vmem [shape: f32[1,128], index: 2, kind: input, shape index: {}]
  %s3 = inlined_call_operand.vmem [shape: bf16[128,128], index: 3, kind: output, shape index: {}]
  %s4 = sld [smem:[#allocation0]]
  $region45: #{residual_block.5} parent=0
    _
  %s6 = ssub.s32 1, %s4
  %s7 = scalar_select 0, %s6, %s4
  loop: start=0, step=1, limit=4
  $region2: #{residual_block.5} parent=0 // loop_pre_header
    _
  $region3: #{residual_block.5} parent=0 // loop_header
    %s9 = sphi 0, %s13
    %p10 = scmp.ge.s32.totalorder %s9, 4
    %s19 = sphi 0, %s21
    %s22 = sphi 0, %s19
    %s23 = sphi 0, %s22
    %s39 = sphi 0, %s23
    %s43 = sphi 0, %s43
    %s45 = sphi 0, %s43
    %s46 = sphi 0, %s45
    %s60 = sphi 0, %s46
    %s64 = sphi 0, %s64
    %s66 = sphi 0, %s64
    %s67 = sphi 0, %s66
    %s81 = sphi 0, %s67
    %s87 = sphi 0, %s89
    %s90 = sphi 0, %s87
    %s91 = sphi 0, %s90
    %s107 = sphi 0, %s91
  $region4: #{residual_block.5} parent=0 // loop_header_branch
    %12 = sbr.rel (%p10) target = $region8
  $region5: #{residual_block.5} parent=0 // loop_body
    %s14 = ssub.s32 %s9, 1
    %s15 = ssub.s32 %s9, 2
    %s16 = sadd.s32 %s9, 1
    %s17 = ssub.s32 %s9, %s16
    %p18 = scmp.eq.s32.totalorder %s17, 0
    %s20 = sadd.s32 %s19, 1
    %s21 = scalar_select %p18, %s19, %s20
    %p24 = pneg %p18
    %p25 = scmp.eq.s32.totalorder %s9, 1
    %p26 = por %p24, %p25
    %p27 = scmp.ne.s32.totalorder %s19, %s22
    %p28 = scmp.eq.s32.totalorder %s9, 0
    %p29 = por %p27, %p28
    %p30 = scmp.ne.s32.totalorder %s19, %s22
    %p31 = scmp.eq.s32.totalorder %s14, 1
    %p32 = por %p30, %p31
    %p33 = scmp.ne.s32.totalorder %s22, %s23
    %p34 = scmp.eq.s32.totalorder %s14, 0
    %p35 = por %p33, %p34
    %p36 = scmp.ne.s32.totalorder %s22, %s23
    %p37 = scmp.eq.s32.totalorder %s15, 1
    %p38 = por %p36, %p37
    %p40 = scmp.ne.s32.totalorder %s23, %s39
    %p41 = scmp.eq.s32.totalorder %s15, 0
    %p42 = por %p40, %p41
    %s44 = sadd.s32 %s43, 1
    %p47 = scmp.eq.s32.totalorder %s9, 1
    %p48 = scmp.ne.s32.totalorder %s43, %s45
    %p49 = scmp.eq.s32.totalorder %s9, 0
    %p50 = por %p48, %p49
    %p51 = scmp.ne.s32.totalorder %s43, %s45
    %p52 = scmp.eq.s32.totalorder %s14, 1
    %p53 = por %p51, %p52
    %p54 = scmp.ne.s32.totalorder %s45, %s46
    %p55 = scmp.eq.s32.totalorder %s14, 0
    %p56 = por %p54, %p55
    %p57 = scmp.ne.s32.totalorder %s45, %s46
    %p58 = scmp.eq.s32.totalorder %s15, 1
    %p59 = por %p57, %p58
    %p61 = scmp.ne.s32.totalorder %s46, %s60
    %p62 = scmp.eq.s32.totalorder %s15, 0
    %p63 = por %p61, %p62
    %s65 = sadd.s32 %s64, 1
    %p68 = scmp.eq.s32.totalorder %s9, 1
    %p69 = scmp.ne.s32.totalorder %s64, %s66
    %p70 = scmp.eq.s32.totalorder %s9, 0
    %p71 = por %p69, %p70
    %p72 = scmp.ne.s32.totalorder %s64, %s66
    %p73 = scmp.eq.s32.totalorder %s14, 1
    %p74 = por %p72, %p73
    %p75 = scmp.ne.s32.totalorder %s66, %s67
    %p76 = scmp.eq.s32.totalorder %s14, 0
    %p77 = por %p75, %p76
    %p78 = scmp.ne.s32.totalorder %s66, %s67
    %p79 = scmp.eq.s32.totalorder %s15, 1
    %p80 = por %p78, %p79
    %p82 = scmp.ne.s32.totalorder %s67, %s81
    %p83 = scmp.eq.s32.totalorder %s15, 0
    %p84 = por %p82, %p83
    %s85 = ssub.s32 %s9, %s16
    %p86 = scmp.eq.s32.totalorder %s85, 0
    %s88 = sadd.s32 %s87, 1
    %s89 = scalar_select %p86, %s87, %s88
    %p92 = pneg %p86
    %p93 = scmp.eq.s32.totalorder %s9, 1
    %p94 = por %p92, %p93
    %p95 = scmp.ne.s32.totalorder %s87, %s90
    %p96 = scmp.eq.s32.totalorder %s9, 0
    %p97 = por %p95, %p96
    %p98 = scmp.ne.s32.totalorder %s87, %s90
    %p99 = scmp.eq.s32.totalorder %s14, 1
    %p100 = por %p98, %p99
    %p101 = scmp.ne.s32.totalorder %s90, %s91
    %p102 = scmp.eq.s32.totalorder %s14, 0
    %p103 = por %p101, %p102
    %p104 = scmp.ne.s32.totalorder %s90, %s91
    %p105 = scmp.eq.s32.totalorder %s15, 1
    %p106 = por %p104, %p105
    %p108 = scmp.ne.s32.totalorder %s91, %s107
    %p109 = scmp.eq.s32.totalorder %s15, 0
    %p110 = por %p108, %p109
    %p111 = scmp.le.s32.totalorder 1, %s9
    %p112 = scmp.lt.s32.totalorder %s9, 3
    %p113 = pnand %p111, %p112
    %p114 = pneg %p113
    // Predicated region
    $region9: #{residual_block.5} parent=5 // pred_check
      _
    $region10: #{residual_block.5} parent=5 // pred_check_branch
      %116 = sbr.rel (%p113) target = $region12
    $region11: #{residual_block.5} parent=5 // pred_region
      %s117 = ssub.s32 %s9, 1
      // Predicated region
      $region13: #{residual_block.5} parent=11 // pred_check
        %p118 = pneg %p56
      $region14: #{residual_block.5} parent=11 // pred_check_branch
        %120 = sbr.rel (%p118) target = $region16
      $region15: #{residual_block.5} parent=11 // pred_region
        _
      $region16: #{residual_block.5} parent=11 // pred_fallthru
        _
      // Predicated region
      $region17: #{residual_block.5} parent=11 // pred_check
        %p121 = pneg %p77
      $region18: #{residual_block.5} parent=11 // pred_check_branch
        %123 = sbr.rel (%p121) target = $region20
      $region19: #{residual_block.5} parent=11 // pred_region
        _
      $region20: #{residual_block.5} parent=11 // pred_fallthru
        _
    $region12: #{residual_block.5} parent=5 // pred_fallthru
      _
    %p124 = scmp.lt.s32.totalorder %s9, 2
    // Predicated region
    $region21: #{residual_block.5} parent=5 // pred_check
      %p125 = pneg %p124
    $region22: #{residual_block.5} parent=5 // pred_check_branch
      %127 = sbr.rel (%p125) target = $region24
    $region23: #{residual_block.5} parent=5 // pred_region
      // Predicated region
      $region25: #{residual_block.5} parent=23 // pred_check
        %p128 = pneg %p29
      $region26: #{residual_block.5} parent=23 // pred_check_branch
        %130 = sbr.rel (%p128) target = $region28
      $region27: #{residual_block.5} parent=23 // pred_region
        %s131 = smul.u32 8, %s9
        %p132 = scmp.lt.s32.totalorder %s131, 15
        %s133 = scalar_select %p132, %s131, 15
        %s134 = smul.addr %s133, 4
        %s135 = scalar_lea.vmem %s0, %s134
        %s136 = smul.u32 8, %s9
      $region28: #{residual_block.5} parent=23 // pred_fallthru
        _
    $region24: #{residual_block.5} parent=5 // pred_fallthru
      _
    %p137 = scmp.le.s32.totalorder 1, %s9
    %p138 = scmp.lt.s32.totalorder %s9, 3
    %p139 = pnand %p137, %p138
    %p140 = pneg %p139
    // Predicated region
    $region29: #{residual_block.5} parent=5 // pred_check
      _
    $region30: #{residual_block.5} parent=5 // pred_check_branch
      %142 = sbr.rel (%p139) target = $region32
    $region31: #{residual_block.5} parent=5 // pred_region
      %s143 = ssub.s32 %s9, 1
      %s144 = smul.u32 8, %s14
      %p145 = scmp.lt.s32.totalorder %s144, 15
      %s146 = scalar_select %p145, %s144, 15
      %s147 = smul.addr %s146, 4
      %s148 = scalar_lea.vmem %s0, %s147
      %p149 = pneg %p35
      %p150 = pneg %p32
      %p151 = pneg %p56
      %p152 = pneg %p53
      %p153 = pneg %p77
      %p154 = pneg %p74
      %p155 = pneg %p103
      %p156 = pneg %p100
      %s157 = smul.u32 8, %s14
      %p158 = scmp.lt.s32.totalorder %s157, 15
      %s159 = scalar_select %p158, %s157, 15
      %s160 = smul.addr %s159, 4
      %s161 = scalar_lea.vmem %s3, %s160
      %s162 = smul.u32 8, %s14
      %p163 = scmp.lt.s32.totalorder %s162, 15
      %s164 = scalar_select %p163, %s162, 15
      %s165 = smul.addr %s164, 4
      %s166 = scalar_lea.vmem %s0, %s165
      %s167 = smul.u32 8, %s14
      %s168 = smul.u32 8, %s14
      %p169 = scmp.lt.s32.totalorder %s168, 15
      %s170 = scalar_select %p169, %s168, 15
      %s171 = smul.addr %s170, 4
      %s172 = scalar_lea.vmem %s3, %s171
      %s173 = smul.u32 8, %s14
      %v174 = vld [vmem:[%s166] sm:$0xf]
      %v175 = vld [vmem:[%s166 + $0x4] sm:$0xf]
      %v176 = vld [vmem:[%s166 + $0x8] sm:$0xf]
      %v177 = vld [vmem:[%s166 + $0xc] sm:$0xf]
      %v178 = vld [vmem:[%s166 + $0x10] sm:$0xf]
      %v179 = vld [vmem:[%s166 + $0x14] sm:$0xf]
      %v180 = vld [vmem:[%s166 + $0x18] sm:$0xf]
      %v181 = vld [vmem:[%s166 + $0x1c] sm:$0xf]
      %v182 = vunpack.c.l.bf16 %v174
      %v183 = vunpack.c.l.bf16 %v175
      %v184 = vunpack.c.l.bf16 %v176
      %v185 = vunpack.c.l.bf16 %v177
      %v186 = vunpack.c.l.bf16 %v178
      %v187 = vunpack.c.l.bf16 %v179
      %v188 = vunpack.c.l.bf16 %v180
      %v189 = vunpack.c.l.bf16 %v181
      %v190 = vld [vmem:[%s1] sm:$0x1]
      %v192 = vlaneseq
      %v193 = vshrl.u32 %v192, 7
      %v194 = vsub.s32 0, %v193
      %v195 = vrot.slane %v190, %v194
      %v197 = vmul.f32 %v182, %v195
      %v198 = vmul.f32 %v183, %v195
      %v199 = vmul.f32 %v184, %v195
      %v200 = vmul.f32 %v185, %v195
      %v201 = vmul.f32 %v186, %v195
      %v202 = vmul.f32 %v187, %v195
      %v203 = vmul.f32 %v188, %v195
      %v204 = vmul.f32 %v189, %v195
      %v205 = vld [vmem:[%s2] sm:$0x1]
      %v207 = vlaneseq
      %v208 = vshrl.u32 %v207, 7
      %v209 = vsub.s32 0, %v208
      %v210 = vrot.slane %v205, %v209
      %v212 = vadd.f32 %v197, %v210
      %v213 = vadd.f32 %v198, %v210
      %v214 = vadd.f32 %v199, %v210
      %v215 = vadd.f32 %v200, %v210
      %v216 = vadd.f32 %v201, %v210
      %v217 = vadd.f32 %v202, %v210
      %v218 = vadd.f32 %v203, %v210
      %v219 = vadd.f32 %v204, %v210
      %v220 = vmax.f32 %v212, 0.0
      %v221 = vmax.f32 %v213, 0.0
      %v222 = vmax.f32 %v214, 0.0
      %v223 = vmax.f32 %v215, 0.0
      %v224 = vmax.f32 %v216, 0.0
      %v225 = vmax.f32 %v217, 0.0
      %v226 = vmax.f32 %v218, 0.0
      %v227 = vmax.f32 %v219, 0.0
      %v228 = vpack.c.bf16 %v221, %v220
      %v229 = vpack.c.bf16 %v223, %v222
      %v230 = vpack.c.bf16 %v225, %v224
      %v231 = vpack.c.bf16 %v227, %v226
      %v236 = vunpack.c.l.b16 %v228
      %v237 = vunpack.c.h.b16 %v228
      %v238 = vunpack.c.l.b16 %v229
      %v239 = vunpack.c.h.b16 %v229
      %v240 = vunpack.c.l.b16 %v230
      %v241 = vunpack.c.h.b16 %v230
      %v242 = vunpack.c.l.b16 %v231
      %v243 = vunpack.c.h.b16 %v231
      %v244 = vpack.c.b16 %v236, %v236
      %v245 = vpack.c.b16 %v237, %v237
      %v246 = vpack.c.b16 %v238, %v238
      %v247 = vpack.c.b16 %v239, %v239
      %v248 = vpack.c.b16 %v240, %v240
      %v249 = vpack.c.b16 %v241, %v241
      %v250 = vpack.c.b16 %v242, %v242
      %v251 = vpack.c.b16 %v243, %v243
      %260 = vst [vmem:[%s172] sm:$0xf] %v244
      %261 = vst [vmem:[%s172 + $0x4] sm:$0xf] %v245
      %262 = vst [vmem:[%s172 + $0x8] sm:$0xf] %v246
      %263 = vst [vmem:[%s172 + $0xc] sm:$0xf] %v247
      %264 = vst [vmem:[%s172 + $0x10] sm:$0xf] %v248
      %265 = vst [vmem:[%s172 + $0x14] sm:$0xf] %v249
      %266 = vst [vmem:[%s172 + $0x18] sm:$0xf] %v250
      %267 = vst [vmem:[%s172 + $0x1c] sm:$0xf] %v251
      %s268 = smul.u32 8, %s14
      %p269 = scmp.lt.s32.totalorder %s268, 15
      %s270 = scalar_select %p269, %s268, 15
      %s271 = smul.addr %s270, 4
      %s272 = scalar_lea.vmem %s3, %s271
      // Predicated region
      $region33: #{residual_block.5} parent=31 // pred_check
        %p273 = pneg %p100
      $region34: #{residual_block.5} parent=31 // pred_check_branch
        %275 = sbr.rel (%p273) target = $region36
      $region35: #{residual_block.5} parent=31 // pred_region
        %s276 = smul.u32 8, %s14
      $region36: #{residual_block.5} parent=31 // pred_fallthru
        _
    $region32: #{residual_block.5} parent=5 // pred_fallthru
      _
    %p277 = scmp.le.s32.totalorder 2, %s9
    // Predicated region
    $region37: #{residual_block.5} parent=5 // pred_check
      %p278 = pneg %p277
    $region38: #{residual_block.5} parent=5 // pred_check_branch
      %280 = sbr.rel (%p278) target = $region40
    $region39: #{residual_block.5} parent=5 // pred_region
      %s281 = ssub.s32 %s9, 2
      // Predicated region
      $region41: #{residual_block.5} parent=39 // pred_check
        %p282 = pneg %p106
      $region42: #{residual_block.5} parent=39 // pred_check_branch
        %284 = sbr.rel (%p282) target = $region44
      $region43: #{residual_block.5} parent=39 // pred_region
        %s285 = smul.u32 8, %s15
        %p286 = scmp.lt.s32.totalorder %s285, 15
        %s287 = scalar_select %p286, %s285, 15
        %s288 = smul.addr %s287, 4
        %s289 = scalar_lea.vmem %s3, %s288
      $region44: #{residual_block.5} parent=39 // pred_fallthru
        _
    $region40: #{residual_block.5} parent=5 // pred_fallthru
      _
  $region6: #{residual_block.5} parent=0 // loop_footer
    %s13 = sadd.s32 1, %s9
  $region7: #{residual_block.5} parent=0 // loop_footer_branch
    %8 = sbr.rel target = $region3
  $region8: #{residual_block.5} parent=0 // loop_exit
    _

// kernel: residual_block.7
$region0: #{residual_block.7}
  #allocation0 [shape = 'u32[]', space=smem, size = 0x4, offset = 0x4, fixed_abs, tag = 'smem constant byte address 0x4 - core index']
  #allocation1 [shape = 'u32[144,128]{1,0:T(1,128)}', space=vmem, size = 0x12000, scoped, tag = 'internal scratch']
  %s0 = inlined_call_operand.vmem [shape: bf16[128,128], index: 0, kind: input, shape index: {}]
  %s1 = inlined_call_operand.vmem [shape: f32[1,128], index: 1, kind: input, shape index: {}]
  %s2 = inlined_call_operand.vmem [shape: f32[1,128], index: 2, kind: input, shape index: {}]
  %s3 = inlined_call_operand.vmem [shape: bf16[128,128], index: 3, kind: input, shape index: {}]
  %s4 = inlined_call_operand.vmem [shape: f32[1,128], index: 4, kind: input, shape index: {}]
  %s5 = inlined_call_operand.vmem [shape: f32[1,128], index: 5, kind: input, shape index: {}]
  %s6 = inlined_call_operand.vmem [shape: f32[128,8], index: 6, kind: output, shape index: {}]
  %s7 = sld [smem:[#allocation0]]
  $region57: #{residual_block.7} parent=0
    _
  %s9 = ssub.s32 1, %s7
  %s10 = scalar_select 0, %s9, %s7
  loop: start=0, step=1, limit=4
  $region2: #{residual_block.7} parent=0 // loop_pre_header
    _
  $region3: #{residual_block.7} parent=0 // loop_header
    %s12 = sphi 0, %s16
    %p13 = scmp.ge.s32.totalorder %s12, 4
    %s22 = sphi 0, %s24
    %s25 = sphi 0, %s22
    %s26 = sphi 0, %s25
    %s42 = sphi 0, %s26
    %s46 = sphi 0, %s46
    %s48 = sphi 0, %s46
    %s49 = sphi 0, %s48
    %s63 = sphi 0, %s49
    %s67 = sphi 0, %s67
    %s69 = sphi 0, %s67
    %s70 = sphi 0, %s69
    %s84 = sphi 0, %s70
    %s90 = sphi 0, %s92
    %s93 = sphi 0, %s90
    %s94 = sphi 0, %s93
    %s110 = sphi 0, %s94
    %s114 = sphi 0, %s114
    %s116 = sphi 0, %s114
    %s117 = sphi 0, %s116
    %s131 = sphi 0, %s117
    %s135 = sphi 0, %s135
    %s137 = sphi 0, %s135
    %s138 = sphi 0, %s137
    %s152 = sphi 0, %s138
    %s158 = sphi 0, %s160
    %s161 = sphi 0, %s158
    %s162 = sphi 0, %s161
    %s178 = sphi 0, %s162
  $region4: #{residual_block.7} parent=0 // loop_header_branch
    %15 = sbr.rel (%p13) target = $region8
  $region5: #{residual_block.7} parent=0 // loop_body
    %s17 = ssub.s32 %s12, 1
    %s18 = ssub.s32 %s12, 2
    %s19 = sadd.s32 %s12, 1
    %s20 = ssub.s32 %s12, %s19
    %p21 = scmp.eq.s32.totalorder %s20, 0
    %s23 = sadd.s32 %s22, 1
    %s24 = scalar_select %p21, %s22, %s23
    %p27 = pneg %p21
    %p28 = scmp.eq.s32.totalorder %s12, 1
    %p29 = por %p27, %p28
    %p30 = scmp.ne.s32.totalorder %s22, %s25
    %p31 = scmp.eq.s32.totalorder %s12, 0
    %p32 = por %p30, %p31
    %p33 = scmp.ne.s32.totalorder %s22, %s25
    %p34 = scmp.eq.s32.totalorder %s17, 1
    %p35 = por %p33, %p34
    %p36 = scmp.ne.s32.totalorder %s25, %s26
    %p37 = scmp.eq.s32.totalorder %s17, 0
    %p38 = por %p36, %p37
    %p39 = scmp.ne.s32.totalorder %s25, %s26
    %p40 = scmp.eq.s32.totalorder %s18, 1
    %p41 = por %p39, %p40
    %p43 = scmp.ne.s32.totalorder %s26, %s42
    %p44 = scmp.eq.s32.totalorder %s18, 0
    %p45 = por %p43, %p44
    %s47 = sadd.s32 %s46, 1
    %p50 = scmp.eq.s32.totalorder %s12, 1
    %p51 = scmp.ne.s32.totalorder %s46, %s48
    %p52 = scmp.eq.s32.totalorder %s12, 0
    %p53 = por %p51, %p52
    %p54 = scmp.ne.s32.totalorder %s46, %s48
    %p55 = scmp.eq.s32.totalorder %s17, 1
    %p56 = por %p54, %p55
    %p57 = scmp.ne.s32.totalorder %s48, %s49
    %p58 = scmp.eq.s32.totalorder %s17, 0
    %p59 = por %p57, %p58
    %p60 = scmp.ne.s32.totalorder %s48, %s49
    %p61 = scmp.eq.s32.totalorder %s18, 1
    %p62 = por %p60, %p61
    %p64 = scmp.ne.s32.totalorder %s49, %s63
    %p65 = scmp.eq.s32.totalorder %s18, 0
    %p66 = por %p64, %p65
    %s68 = sadd.s32 %s67, 1
    %p71 = scmp.eq.s32.totalorder %s12, 1
    %p72 = scmp.ne.s32.totalorder %s67, %s69
    %p73 = scmp.eq.s32.totalorder %s12, 0
    %p74 = por %p72, %p73
    %p75 = scmp.ne.s32.totalorder %s67, %s69
    %p76 = scmp.eq.s32.totalorder %s17, 1
    %p77 = por %p75, %p76
    %p78 = scmp.ne.s32.totalorder %s69, %s70
    %p79 = scmp.eq.s32.totalorder %s17, 0
    %p80 = por %p78, %p79
    %p81 = scmp.ne.s32.totalorder %s69, %s70
    %p82 = scmp.eq.s32.totalorder %s18, 1
    %p83 = por %p81, %p82
    %p85 = scmp.ne.s32.totalorder %s70, %s84
    %p86 = scmp.eq.s32.totalorder %s18, 0
    %p87 = por %p85, %p86
    %s88 = ssub.s32 %s12, %s19
    %p89 = scmp.eq.s32.totalorder %s88, 0
    %s91 = sadd.s32 %s90, 1
    %s92 = scalar_select %p89, %s90, %s91
    %p95 = pneg %p89
    %p96 = scmp.eq.s32.totalorder %s12, 1
    %p97 = por %p95, %p96
    %p98 = scmp.ne.s32.totalorder %s90, %s93
    %p99 = scmp.eq.s32.totalorder %s12, 0
    %p100 = por %p98, %p99
    %p101 = scmp.ne.s32.totalorder %s90, %s93
    %p102 = scmp.eq.s32.totalorder %s17, 1
    %p103 = por %p101, %p102
    %p104 = scmp.ne.s32.totalorder %s93, %s94
    %p105 = scmp.eq.s32.totalorder %s17, 0
    %p106 = por %p104, %p105
    %p107 = scmp.ne.s32.totalorder %s93, %s94
    %p108 = scmp.eq.s32.totalorder %s18, 1
    %p109 = por %p107, %p108
    %p111 = scmp.ne.s32.totalorder %s94, %s110
    %p112 = scmp.eq.s32.totalorder %s18, 0
    %p113 = por %p111, %p112
    %s115 = sadd.s32 %s114, 1
    %p118 = scmp.eq.s32.totalorder %s12, 1
    %p119 = scmp.ne.s32.totalorder %s114, %s116
    %p120 = scmp.eq.s32.totalorder %s12, 0
    %p121 = por %p119, %p120
    %p122 = scmp.ne.s32.totalorder %s114, %s116
    %p123 = scmp.eq.s32.totalorder %s17, 1
    %p124 = por %p122, %p123
    %p125 = scmp.ne.s32.totalorder %s116, %s117
    %p126 = scmp.eq.s32.totalorder %s17, 0
    %p127 = por %p125, %p126
    %p128 = scmp.ne.s32.totalorder %s116, %s117
    %p129 = scmp.eq.s32.totalorder %s18, 1
    %p130 = por %p128, %p129
    %p132 = scmp.ne.s32.totalorder %s117, %s131
    %p133 = scmp.eq.s32.totalorder %s18, 0
    %p134 = por %p132, %p133
    %s136 = sadd.s32 %s135, 1
    %p139 = scmp.eq.s32.totalorder %s12, 1
    %p140 = scmp.ne.s32.totalorder %s135, %s137
    %p141 = scmp.eq.s32.totalorder %s12, 0
    %p142 = por %p140, %p141
    %p143 = scmp.ne.s32.totalorder %s135, %s137
    %p144 = scmp.eq.s32.totalorder %s17, 1
    %p145 = por %p143, %p144
    %p146 = scmp.ne.s32.totalorder %s137, %s138
    %p147 = scmp.eq.s32.totalorder %s17, 0
    %p148 = por %p146, %p147
    %p149 = scmp.ne.s32.totalorder %s137, %s138
    %p150 = scmp.eq.s32.totalorder %s18, 1
    %p151 = por %p149, %p150
    %p153 = scmp.ne.s32.totalorder %s138, %s152
    %p154 = scmp.eq.s32.totalorder %s18, 0
    %p155 = por %p153, %p154
    %s156 = ssub.s32 %s12, %s19
    %p157 = scmp.eq.s32.totalorder %s156, 0
    %s159 = sadd.s32 %s158, 1
    %s160 = scalar_select %p157, %s158, %s159
    %p163 = pneg %p157
    %p164 = scmp.eq.s32.totalorder %s12, 1
    %p165 = por %p163, %p164
    %p166 = scmp.ne.s32.totalorder %s158, %s161
    %p167 = scmp.eq.s32.totalorder %s12, 0
    %p168 = por %p166, %p167
    %p169 = scmp.ne.s32.totalorder %s158, %s161
    %p170 = scmp.eq.s32.totalorder %s17, 1
    %p171 = por %p169, %p170
    %p172 = scmp.ne.s32.totalorder %s161, %s162
    %p173 = scmp.eq.s32.totalorder %s17, 0
    %p174 = por %p172, %p173
    %p175 = scmp.ne.s32.totalorder %s161, %s162
    %p176 = scmp.eq.s32.totalorder %s18, 1
    %p177 = por %p175, %p176
    %p179 = scmp.ne.s32.totalorder %s162, %s178
    %p180 = scmp.eq.s32.totalorder %s18, 0
    %p181 = por %p179, %p180
    %p182 = scmp.le.s32.totalorder 1, %s12
    %p183 = scmp.lt.s32.totalorder %s12, 3
    %p184 = pnand %p182, %p183
    %p185 = pneg %p184
    // Predicated region
    $region9: #{residual_block.7} parent=5 // pred_check
      _
    $region10: #{residual_block.7} parent=5 // pred_check_branch
      %187 = sbr.rel (%p184) target = $region12
    $region11: #{residual_block.7} parent=5 // pred_region
      %s188 = ssub.s32 %s12, 1
      // Predicated region
      $region13: #{residual_block.7} parent=11 // pred_check
        %p189 = pneg %p59
      $region14: #{residual_block.7} parent=11 // pred_check_branch
        %191 = sbr.rel (%p189) target = $region16
      $region15: #{residual_block.7} parent=11 // pred_region
        _
      $region16: #{residual_block.7} parent=11 // pred_fallthru
        _
      // Predicated region
      $region17: #{residual_block.7} parent=11 // pred_check
        %p192 = pneg %p80
      $region18: #{residual_block.7} parent=11 // pred_check_branch
        %194 = sbr.rel (%p192) target = $region20
      $region19: #{residual_block.7} parent=11 // pred_region
        _
      $region20: #{residual_block.7} parent=11 // pred_fallthru
        _
      // Predicated region
      $region21: #{residual_block.7} parent=11 // pred_check
        %p195 = pneg %p127
      $region22: #{residual_block.7} parent=11 // pred_check_branch
        %197 = sbr.rel (%p195) target = $region24
      $region23: #{residual_block.7} parent=11 // pred_region
        _
      $region24: #{residual_block.7} parent=11 // pred_fallthru
        _
      // Predicated region
      $region25: #{residual_block.7} parent=11 // pred_check
        %p198 = pneg %p148
      $region26: #{residual_block.7} parent=11 // pred_check_branch
        %200 = sbr.rel (%p198) target = $region28
      $region27: #{residual_block.7} parent=11 // pred_region
        _
      $region28: #{residual_block.7} parent=11 // pred_fallthru
        _
    $region12: #{residual_block.7} parent=5 // pred_fallthru
      _
    %p201 = scmp.lt.s32.totalorder %s12, 2
    // Predicated region
    $region29: #{residual_block.7} parent=5 // pred_check
      %p202 = pneg %p201
    $region30: #{residual_block.7} parent=5 // pred_check_branch
      %204 = sbr.rel (%p202) target = $region32
    $region31: #{residual_block.7} parent=5 // pred_region
      // Predicated region
      $region33: #{residual_block.7} parent=31 // pred_check
        %p205 = pneg %p32
      $region34: #{residual_block.7} parent=31 // pred_check_branch
        %207 = sbr.rel (%p205) target = $region36
      $region35: #{residual_block.7} parent=31 // pred_region
        %s208 = smul.u32 8, %s12
        %p209 = scmp.lt.s32.totalorder %s208, 15
        %s210 = scalar_select %p209, %s208, 15
        %s211 = smul.addr %s210, 4
        %s212 = scalar_lea.vmem %s0, %s211
        %s213 = smul.u32 8, %s12
      $region36: #{residual_block.7} parent=31 // pred_fallthru
        _
      // Predicated region
      $region37: #{residual_block.7} parent=31 // pred_check
        %p214 = pneg %p100
      $region38: #{residual_block.7} parent=31 // pred_check_branch
        %216 = sbr.rel (%p214) target = $region40
      $region39: #{residual_block.7} parent=31 // pred_region
        %s217 = smul.u32 8, %s12
        %p218 = scmp.lt.s32.totalorder %s217, 15
        %s219 = scalar_select %p218, %s217, 15
        %s220 = smul.addr %s219, 4
        %s221 = scalar_lea.vmem %s3, %s220
        %s222 = smul.u32 8, %s12
      $region40: #{residual_block.7} parent=31 // pred_fallthru
        _
    $region32: #{residual_block.7} parent=5 // pred_fallthru
      _
    %p223 = scmp.le.s32.totalorder 1, %s12
    %p224 = scmp.lt.s32.totalorder %s12, 3
    %p225 = pnand %p223, %p224
    %p226 = pneg %p225
    // Predicated region
    $region41: #{residual_block.7} parent=5 // pred_check
      _
    $region42: #{residual_block.7} parent=5 // pred_check_branch
      %228 = sbr.rel (%p225) target = $region44
    $region43: #{residual_block.7} parent=5 // pred_region
      %s229 = ssub.s32 %s12, 1
      %s230 = smul.u32 8, %s17
      %p231 = scmp.lt.s32.totalorder %s230, 15
      %s232 = scalar_select %p231, %s230, 15
      %s233 = smul.addr %s232, 4
      %s234 = scalar_lea.vmem %s0, %s233
      %p235 = pneg %p38
      %p236 = pneg %p35
      %p237 = pneg %p59
      %p238 = pneg %p56
      %p239 = pneg %p80
      %p240 = pneg %p77
      %s241 = smul.u32 8, %s17
      %p242 = scmp.lt.s32.totalorder %s241, 15
      %s243 = scalar_select %p242, %s241, 15
      %s244 = smul.addr %s243, 4
      %s245 = scalar_lea.vmem %s3, %s244
      %p246 = pneg %p106
      %p247 = pneg %p103
      %p248 = pneg %p127
      %p249 = pneg %p124
      %p250 = pneg %p148
      %p251 = pneg %p145
      %p252 = pneg %p174
      %p253 = pneg %p171
      %s254 = smul.u32 8, %s17
      %p255 = scmp.lt.s32.totalorder %s254, 15
      %s256 = scalar_select %p255, %s254, 15
      %s257 = smul.addr %s256, 8
      %s258 = scalar_lea.vmem %s6, %s257
      %s259 = smul.u32 8, %s17
      %p260 = scmp.lt.s32.totalorder %s259, 15
      %s261 = scalar_select %p260, %s259, 15
      %s262 = smul.addr %s261, 4
      %s263 = scalar_lea.vmem %s0, %s262
      %s264 = smul.u32 8, %s17
      %s265 = smul.u32 8, %s17
      %p266 = scmp.lt.s32.totalorder %s265, 15
      %s267 = scalar_select %p266, %s265, 15
      %s268 = smul.addr %s267, 4
      %s269 = scalar_lea.vmem %s3, %s268
      %s270 = smul.u32 8, %s17
      %s271 = smul.u32 8, %s17
      %p272 = scmp.lt.s32.totalorder %s271, 15
      %s273 = scalar_select %p272, %s271, 15
      %s274 = smul.addr %s273, 8
      %s275 = scalar_lea.vmem %s6, %s274
      %s276 = smul.u32 8, %s17
      %v277 = vld [vmem:[%s263] sm:$0xf]
      %v278 = vld [vmem:[%s263 + $0x4] sm:$0xf]
      %v279 = vld [vmem:[%s263 + $0x8] sm:$0xf]
      %v280 = vld [vmem:[%s263 + $0xc] sm:$0xf]
      %v281 = vld [vmem:[%s263 + $0x10] sm:$0xf]
      %v282 = vld [vmem:[%s263 + $0x14] sm:$0xf]
      %v283 = vld [vmem:[%s263 + $0x18] sm:$0xf]
      %v284 = vld [vmem:[%s263 + $0x1c] sm:$0xf]
      %v285 = vunpack.c.l.bf16 %v277
      %v286 = vunpack.c.l.bf16 %v278
      %v287 = vunpack.c.l.bf16 %v279
      %v288 = vunpack.c.l.bf16 %v280
      %v289 = vunpack.c.l.bf16 %v281
      %v290 = vunpack.c.l.bf16 %v282
      %v291 = vunpack.c.l.bf16 %v283
      %v292 = vunpack.c.l.bf16 %v284
      %v293 = vld [vmem:[%s1] sm:$0x1]
      %v295 = vlaneseq
      %v296 = vshrl.u32 %v295, 7
      %v297 = vsub.s32 0, %v296
      %v298 = vrot.slane %v293, %v297
      %v300 = vmul.f32 %v285, %v298
      %v301 = vmul.f32 %v286, %v298
      %v302 = vmul.f32 %v287, %v298
      %v303 = vmul.f32 %v288, %v298
      %v304 = vmul.f32 %v289, %v298
      %v305 = vmul.f32 %v290, %v298
      %v306 = vmul.f32 %v291, %v298
      %v307 = vmul.f32 %v292, %v298
      %v308 = vld [vmem:[%s2] sm:$0x1]
      %v310 = vlaneseq
      %v311 = vshrl.u32 %v310, 7
      %v312 = vsub.s32 0, %v311
      %v313 = vrot.slane %v308, %v312
      %v315 = vadd.f32 %v300, %v313
      %v316 = vadd.f32 %v301, %v313
      %v317 = vadd.f32 %v302, %v313
      %v318 = vadd.f32 %v303, %v313
      %v319 = vadd.f32 %v304, %v313
      %v320 = vadd.f32 %v305, %v313
      %v321 = vadd.f32 %v306, %v313
      %v322 = vadd.f32 %v307, %v313
      %v323 = vld [vmem:[%s269] sm:$0xf]
      %v324 = vld [vmem:[%s269 + $0x4] sm:$0xf]
      %v325 = vld [vmem:[%s269 + $0x8] sm:$0xf]
      %v326 = vld [vmem:[%s269 + $0xc] sm:$0xf]
      %v327 = vld [vmem:[%s269 + $0x10] sm:$0xf]
      %v328 = vld [vmem:[%s269 + $0x14] sm:$0xf]
      %v329 = vld [vmem:[%s269 + $0x18] sm:$0xf]
      %v330 = vld [vmem:[%s269 + $0x1c] sm:$0xf]
      %v331 = vunpack.c.l.bf16 %v323
      %v332 = vunpack.c.l.bf16 %v324
      %v333 = vunpack.c.l.bf16 %v325
      %v334 = vunpack.c.l.bf16 %v326
      %v335 = vunpack.c.l.bf16 %v327
      %v336 = vunpack.c.l.bf16 %v328
      %v337 = vunpack.c.l.bf16 %v329
      %v338 = vunpack.c.l.bf16 %v330
      %v339 = vld [vmem:[%s4] sm:$0x1]
      %v341 = vlaneseq
      %v342 = vshrl.u32 %v341, 7
      %v343 = vsub.s32 0, %v342
      %v344 = vrot.slane %v339, %v343
      %v346 = vmul.f32 %v331, %v344
      %v347 = vmul.f32 %v332, %v344
      %v348 = vmul.f32 %v333, %v344
      %v349 = vmul.f32 %v334, %v344
      %v350 = vmul.f32 %v335, %v344
      %v351 = vmul.f32 %v336, %v344
      %v352 = vmul.f32 %v337, %v344
      %v353 = vmul.f32 %v338, %v344
      %v354 = vadd.f32 %v315, %v346
      %v355 = vadd.f32 %v316, %v347
      %v356 = vadd.f32 %v317, %v348
      %v357 = vadd.f32 %v318, %v349
      %v358 = vadd.f32 %v319, %v350
      %v359 = vadd.f32 %v320, %v351
      %v360 = vadd.f32 %v321, %v352
      %v361 = vadd.f32 %v322, %v353
      %v362 = vld [vmem:[%s5] sm:$0x1]
      %v364 = vlaneseq
      %v365 = vshrl.u32 %v364, 7
      %v366 = vsub.s32 0, %v365
      %v367 = vrot.slane %v362, %v366
      %v369 = vadd.f32 %v354, %v367
      %v370 = vadd.f32 %v355, %v367
      %v371 = vadd.f32 %v356, %v367
      %v372 = vadd.f32 %v357, %v367
      %v373 = vadd.f32 %v358, %v367
      %v374 = vadd.f32 %v359, %v367
      %v375 = vadd.f32 %v360, %v367
      %v376 = vadd.f32 %v361, %v367
      %v377 = vmax.f32 %v369, 0.0
      %v378 = vmax.f32 %v370, 0.0
      %v379 = vmax.f32 %v371, 0.0
      %v380 = vmax.f32 %v372, 0.0
      %v381 = vmax.f32 %v373, 0.0
      %v382 = vmax.f32 %v374, 0.0
      %v383 = vmax.f32 %v375, 0.0
      %v384 = vmax.f32 %v376, 0.0
      %vm385 = vcmask 64512
      %386 = vst.msk [vmem:[%s275] sm:$0xff] %vm385, %v377
      %387 = vst.msk [vmem:[%s275 + $0x8] sm:$0xff] %vm385, %v378
      %388 = vst.msk [vmem:[%s275 + $0x10] sm:$0xff] %vm385, %v379
      %389 = vst.msk [vmem:[%s275 + $0x18] sm:$0xff] %vm385, %v380
      %390 = vst.msk [vmem:[%s275 + $0x20] sm:$0xff] %vm385, %v381
      %391 = vst.msk [vmem:[%s275 + $0x28] sm:$0xff] %vm385, %v382
      %392 = vst.msk [vmem:[%s275 + $0x30] sm:$0xff] %vm385, %v383
      %393 = vst.msk [vmem:[%s275 + $0x38] sm:$0xff] %vm385, %v384
      %s394 = smul.u32 8, %s17
      %p395 = scmp.lt.s32.totalorder %s394, 15
      %s396 = scalar_select %p395, %s394, 15
      %s397 = smul.addr %s396, 8
      %s398 = scalar_lea.vmem %s6, %s397
      // Predicated region
      $region45: #{residual_block.7} parent=43 // pred_check
        %p399 = pneg %p171
      $region46: #{residual_block.7} parent=43 // pred_check_branch
        %401 = sbr.rel (%p399) target = $region48
      $region47: #{residual_block.7} parent=43 // pred_region
        %s402 = smul.u32 8, %s17
      $region48: #{residual_block.7} parent=43 // pred_fallthru
        _
    $region44: #{residual_block.7} parent=5 // pred_fallthru
      _
    %p403 = scmp.le.s32.totalorder 2, %s12
    // Predicated region
    $region49: #{residual_block.7} parent=5 // pred_check
      %p404 = pneg %p403
    $region50: #{residual_block.7} parent=5 // pred_check_branch
      %406 = sbr.rel (%p404) target = $region52
    $region51: #{residual_block.7} parent=5 // pred_region
      %s407 = ssub.s32 %s12, 2
      // Predicated region
      $region53: #{residual_block.7} parent=51 // pred_check
        %p408 = pneg %p177
      $region54: #{residual_block.7} parent=51 // pred_check_branch
        %410 = sbr.rel (%p408) target = $region56
      $region55: #{residual_block.7} parent=51 // pred_region
        %s411 = smul.u32 8, %s18
        %p412 = scmp.lt.s32.totalorder %s411, 15
        %s413 = scalar_select %p412, %s411, 15
        %s414 = smul.addr %s413, 8
        %s415 = scalar_lea.vmem %s6, %s414
      $region56: #{residual_block.7} parent=51 // pred_fallthru
        _
    $region52: #{residual_block.7} parent=5 // pred_fallthru
      _
  $region6: #{residual_block.7} parent=0 // loop_footer
    %s16 = sadd.s32 1, %s12
  $region7: #{residual_block.7} parent=0 // loop_footer_branch
    %11 = sbr.rel target = $region3
  $region8: #{residual_block.7} parent=0 // loop_exit
    _

// kernel: residual_block.4
$region0: #{residual_block.4}
  #allocation0 [shape = 'u32[]', space=smem, size = 0x4, offset = 0x4, fixed_abs, tag = 'smem constant byte address 0x4 - core index']
  #allocation1 [shape = 'u32[144,128]{1,0:T(1,128)}', space=vmem, size = 0x12000, scoped, tag = 'internal scratch']
  %s0 = inlined_call_operand.vmem [shape: bf16[8,9,9,128], index: 0, kind: input, shape index: {}]
  %s1 = inlined_call_operand.vmem [shape: bf16[9,128,128], index: 1, kind: input, shape index: {}]
  %s2 = inlined_call_operand.vmem [shape: bf16[128,128], index: 2, kind: input, shape index: {}]
  %s3 = inlined_call_operand.vmem [shape: bf16[2,64,128], index: 3, kind: output, shape index: {0}]
  %s4 = inlined_call_operand.vmem [shape: f32[2,8,128], index: 4, kind: output, shape index: {1}]
  %s5 = inlined_call_operand.vmem [shape: bf16[2,64,128], index: 5, kind: output, shape index: {2}]
  %s6 = inlined_call_operand.vmem [shape: f32[2,8,128], index: 6, kind: output, shape index: {3}]
  %7 = xla_tuple %s3, %s4, %s5, %s6
  %s8 = sld [smem:[#allocation0]]
  $region69: #{residual_block.4} parent=0
    _
  %s10 = ssub.s32 1, %s8
  %s11 = scalar_select 0, %s10, %s8
  loop: start=0, step=1, limit=4
  $region2: #{residual_block.4} parent=0 // loop_pre_header
    _
  $region3: #{residual_block.4} parent=0 // loop_header
    %s13 = sphi 0, %s17
    %p14 = scmp.ge.s32.totalorder %s13, 4
    %s23 = sphi 0, %s25
    %s26 = sphi 0, %s23
    %s27 = sphi 0, %s26
    %s43 = sphi 0, %s27
    %s47 = sphi 0, %s47
    %s49 = sphi 0, %s47
    %s50 = sphi 0, %s49
    %s64 = sphi 0, %s50
    %s68 = sphi 0, %s68
    %s70 = sphi 0, %s68
    %s71 = sphi 0, %s70
    %s85 = sphi 0, %s71
    %s91 = sphi 0, %s93
    %s94 = sphi 0, %s91
    %s95 = sphi 0, %s94
    %s111 = sphi 0, %s95
    %s117 = sphi 0, %s119
    %s120 = sphi 0, %s117
    %s121 = sphi 0, %s120
    %s137 = sphi 0, %s121
    %s143 = sphi 0, %s145
    %s146 = sphi 0, %s143
    %s147 = sphi 0, %s146
    %s163 = sphi 0, %s147
    %s169 = sphi 0, %s171
    %s172 = sphi 0, %s169
    %s173 = sphi 0, %s172
    %s189 = sphi 0, %s173
  $region4: #{residual_block.4} parent=0 // loop_header_branch
    %16 = sbr.rel (%p14) target = $region8
  $region5: #{residual_block.4} parent=0 // loop_body
    %s18 = ssub.s32 %s13, 1
    %s19 = ssub.s32 %s13, 2
    %s20 = sadd.s32 %s13, 1
    %s21 = ssub.s32 %s13, %s20
    %p22 = scmp.eq.s32.totalorder %s21, 0
    %s24 = sadd.s32 %s23, 1
    %s25 = scalar_select %p22, %s23, %s24
    %p28 = pneg %p22
    %p29 = scmp.eq.s32.totalorder %s13, 1
    %p30 = por %p28, %p29
    %p31 = scmp.ne.s32.totalorder %s23, %s26
    %p32 = scmp.eq.s32.totalorder %s13, 0
    %p33 = por %p31, %p32
    %p34 = scmp.ne.s32.totalorder %s23, %s26
    %p35 = scmp.eq.s32.totalorder %s18, 1
    %p36 = por %p34, %p35
    %p37 = scmp.ne.s32.totalorder %s26, %s27
    %p38 = scmp.eq.s32.totalorder %s18, 0
    %p39 = por %p37, %p38
    %p40 = scmp.ne.s32.totalorder %s26, %s27
    %p41 = scmp.eq.s32.totalorder %s19, 1
    %p42 = por %p40, %p41
    %p44 = scmp.ne.s32.totalorder %s27, %s43
    %p45 = scmp.eq.s32.totalorder %s19, 0
    %p46 = por %p44, %p45
    %s48 = sadd.s32 %s47, 1
    %p51 = scmp.eq.s32.totalorder %s13, 1
    %p52 = scmp.ne.s32.totalorder %s47, %s49
    %p53 = scmp.eq.s32.totalorder %s13, 0
    %p54 = por %p52, %p53
    %p55 = scmp.ne.s32.totalorder %s47, %s49
    %p56 = scmp.eq.s32.totalorder %s18, 1
    %p57 = por %p55, %p56
    %p58 = scmp.ne.s32.totalorder %s49, %s50
    %p59 = scmp.eq.s32.totalorder %s18, 0
    %p60 = por %p58, %p59
    %p61 = scmp.ne.s32.totalorder %s49, %s50
    %p62 = scmp.eq.s32.totalorder %s19, 1
    %p63 = por %p61, %p62
    %p65 = scmp.ne.s32.totalorder %s50, %s64
    %p66 = scmp.eq.s32.totalorder %s19, 0
    %p67 = por %p65, %p66
    %s69 = sadd.s32 %s68, 1
    %p72 = scmp.eq.s32.totalorder %s13, 1
    %p73 = scmp.ne.s32.totalorder %s68, %s70
    %p74 = scmp.eq.s32.totalorder %s13, 0
    %p75 = por %p73, %p74
    %p76 = scmp.ne.s32.totalorder %s68, %s70
    %p77 = scmp.eq.s32.totalorder %s18, 1
    %p78 = por %p76, %p77
    %p79 = scmp.ne.s32.totalorder %s70, %s71
    %p80 = scmp.eq.s32.totalorder %s18, 0
    %p81 = por %p79, %p80
    %p82 = scmp.ne.s32.totalorder %s70, %s71
    %p83 = scmp.eq.s32.totalorder %s19, 1
    %p84 = por %p82, %p83
    %p86 = scmp.ne.s32.totalorder %s71, %s85
    %p87 = scmp.eq.s32.totalorder %s19, 0
    %p88 = por %p86, %p87
    %s89 = ssub.s32 %s13, %s20
    %p90 = scmp.eq.s32.totalorder %s89, 0
    %s92 = sadd.s32 %s91, 1
    %s93 = scalar_select %p90, %s91, %s92
    %p96 = pneg %p90
    %p97 = scmp.eq.s32.totalorder %s13, 1
    %p98 = por %p96, %p97
    %p99 = scmp.ne.s32.totalorder %s91, %s94
    %p100 = scmp.eq.s32.totalorder %s13, 0
    %p101 = por %p99, %p100
    %p102 = scmp.ne.s32.totalorder %s91, %s94
    %p103 = scmp.eq.s32.totalorder %s18, 1
    %p104 = por %p102, %p103
    %p105 = scmp.ne.s32.totalorder %s94, %s95
    %p106 = scmp.eq.s32.totalorder %s18, 0
    %p107 = por %p105, %p106
    %p108 = scmp.ne.s32.totalorder %s94, %s95
    %p109 = scmp.eq.s32.totalorder %s19, 1
    %p110 = por %p108, %p109
    %p112 = scmp.ne.s32.totalorder %s95, %s111
    %p113 = scmp.eq.s32.totalorder %s19, 0
    %p114 = por %p112, %p113
    %s115 = ssub.s32 %s13, %s20
    %p116 = scmp.eq.s32.totalorder %s115, 0
    %s118 = sadd.s32 %s117, 1
    %s119 = scalar_select %p116, %s117, %s118
    %p122 = pneg %p116
    %p123 = scmp.eq.s32.totalorder %s13, 1
    %p124 = por %p122, %p123
    %p125 = scmp.ne.s32.totalorder %s117, %s120
    %p126 = scmp.eq.s32.totalorder %s13, 0
    %p127 = por %p125, %p126
    %p128 = scmp.ne.s32.totalorder %s117, %s120
    %p129 = scmp.eq.s32.totalorder %s18, 1
    %p130 = por %p128, %p129
    %p131 = scmp.ne.s32.totalorder %s120, %s121
    %p132 = scmp.eq.s32.totalorder %s18, 0
    %p133 = por %p131, %p132
    %p134 = scmp.ne.s32.totalorder %s120, %s121
    %p135 = scmp.eq.s32.totalorder %s19, 1
    %p136 = por %p134, %p135
    %p138 = scmp.ne.s32.totalorder %s121, %s137
    %p139 = scmp.eq.s32.totalorder %s19, 0
    %p140 = por %p138, %p139
    %s141 = ssub.s32 %s13, %s20
    %p142 = scmp.eq.s32.totalorder %s141, 0
    %s144 = sadd.s32 %s143, 1
    %s145 = scalar_select %p142, %s143, %s144
    %p148 = pneg %p142
    %p149 = scmp.eq.s32.totalorder %s13, 1
    %p150 = por %p148, %p149
    %p151 = scmp.ne.s32.totalorder %s143, %s146
    %p152 = scmp.eq.s32.totalorder %s13, 0
    %p153 = por %p151, %p152
    %p154 = scmp.ne.s32.totalorder %s143, %s146
    %p155 = scmp.eq.s32.totalorder %s18, 1
    %p156 = por %p154, %p155
    %p157 = scmp.ne.s32.totalorder %s146, %s147
    %p158 = scmp.eq.s32.totalorder %s18, 0
    %p159 = por %p157, %p158
    %p160 = scmp.ne.s32.totalorder %s146, %s147
    %p161 = scmp.eq.s32.totalorder %s19, 1
    %p162 = por %p160, %p161
    %p164 = scmp.ne.s32.totalorder %s147, %s163
    %p165 = scmp.eq.s32.totalorder %s19, 0
    %p166 = por %p164, %p165
    %s167 = ssub.s32 %s13, %s20
    %p168 = scmp.eq.s32.totalorder %s167, 0
    %s170 = sadd.s32 %s169, 1
    %s171 = scalar_select %p168, %s169, %s170
    %p174 = pneg %p168
    %p175 = scmp.eq.s32.totalorder %s13, 1
    %p176 = por %p174, %p175
    %p177 = scmp.ne.s32.totalorder %s169, %s172
    %p178 = scmp.eq.s32.totalorder %s13, 0
    %p179 = por %p177, %p178
    %p180 = scmp.ne.s32.totalorder %s169, %s172
    %p181 = scmp.eq.s32.totalorder %s18, 1
    %p182 = por %p180, %p181
    %p183 = scmp.ne.s32.totalorder %s172, %s173
    %p184 = scmp.eq.s32.totalorder %s18, 0
    %p185 = por %p183, %p184
    %p186 = scmp.ne.s32.totalorder %s172, %s173
    %p187 = scmp.eq.s32.totalorder %s19, 1
    %p188 = por %p186, %p187
    %p190 = scmp.ne.s32.totalorder %s173, %s189
    %p191 = scmp.eq.s32.totalorder %s19, 0
    %p192 = por %p190, %p191
    %p193 = scmp.le.s32.totalorder 1, %s13
    %p194 = scmp.lt.s32.totalorder %s13, 3
    %p195 = pnand %p193, %p194
    %p196 = pneg %p195
    // Predicated region
    $region9: #{residual_block.4} parent=5 // pred_check
      _
    $region10: #{residual_block.4} parent=5 // pred_check_branch
      %198 = sbr.rel (%p195) target = $region12
    $region11: #{residual_block.4} parent=5 // pred_region
      %s199 = ssub.s32 %s13, 1
      // Predicated region
      $region13: #{residual_block.4} parent=11 // pred_check
        %p200 = pneg %p60
      $region14: #{residual_block.4} parent=11 // pred_check_branch
        %202 = sbr.rel (%p200) target = $region16
      $region15: #{residual_block.4} parent=11 // pred_region
        _
      $region16: #{residual_block.4} parent=11 // pred_fallthru
        _
      // Predicated region
      $region17: #{residual_block.4} parent=11 // pred_check
        %p203 = pneg %p81
      $region18: #{residual_block.4} parent=11 // pred_check_branch
        %205 = sbr.rel (%p203) target = $region20
      $region19: #{residual_block.4} parent=11 // pred_region
        _
      $region20: #{residual_block.4} parent=11 // pred_fallthru
        _
    $region12: #{residual_block.4} parent=5 // pred_fallthru
      _
    %p206 = scmp.lt.s32.totalorder %s13, 2
    // Predicated region
    $region21: #{residual_block.4} parent=5 // pred_check
      %p207 = pneg %p206
    $region22: #{residual_block.4} parent=5 // pred_check_branch
      %209 = sbr.rel (%p207) target = $region24
    $region23: #{residual_block.4} parent=5 // pred_region
      // Predicated region
      $region25: #{residual_block.4} parent=23 // pred_check
        %p210 = pneg %p33
      $region26: #{residual_block.4} parent=23 // pred_check_branch
        %212 = sbr.rel (%p210) target = $region28
      $region27: #{residual_block.4} parent=23 // pred_region
        %s213 = smul.u32 4, %s13
        %p214 = scmp.lt.s32.totalorder %s213, 7
        %s215 = scalar_select %p214, %s213, 7
        %s216 = smul.addr %s215, 18
        %s217 = smul.addr %s216, 4
        %s218 = scalar_lea.vmem %s0, %s217
        %s219 = smul.u32 4, %s13
      $region28: #{residual_block.4} parent=23 // pred_fallthru
        _
    $region24: #{residual_block.4} parent=5 // pred_fallthru
      _
    %p220 = scmp.le.s32.totalorder 1, %s13
    %p221 = scmp.lt.s32.totalorder %s13, 3
    %p222 = pnand %p220, %p221
    %p223 = pneg %p222
    // Predicated region
    $region29: #{residual_block.4} parent=5 // pred_check
      _
    $region30: #{residual_block.4} parent=5 // pred_check_branch
      %225 = sbr.rel (%p222) target = $region32
    $region31: #{residual_block.4} parent=5 // pred_region
      %s226 = ssub.s32 %s13, 1
      %s227 = smul.u32 4, %s18
      %p228 = scmp.lt.s32.totalorder %s227, 7
      %s229 = scalar_select %p228, %s227, 7
      %s230 = smul.addr %s229, 18
      %s231 = smul.addr %s230, 4
      %s232 = scalar_lea.vmem %s0, %s231
      %p233 = pneg %p39
      %p234 = pneg %p36
      %p235 = pneg %p60
      %p236 = pneg %p57
      %p237 = pneg %p81
      %p238 = pneg %p78
      %p239 = pneg %p107
      %p240 = pneg %p104
      %p241 = scmp.lt.s32.totalorder %s18, 1
      %s242 = scalar_select %p241, %s18, 1
      %s243 = smul.addr %s242, 8
      %s244 = smul.addr %s243, 4
      %s245 = scalar_lea.vmem %s3, %s244
      %p246 = pneg %p133
      %p247 = pneg %p130
      %p248 = scmp.lt.s32.totalorder %s18, 1
      %s249 = scalar_select %p248, %s18, 1
      %s250 = smul.addr %s249, 8
      %s251 = scalar_lea.vmem %s4, %s250
      %p252 = pneg %p159
      %p253 = pneg %p156
      %p254 = scmp.lt.s32.totalorder %s18, 1
      %s255 = scalar_select %p254, %s18, 1
      %s256 = smul.addr %s255, 8
      %s257 = smul.addr %s256, 4
      %s258 = scalar_lea.vmem %s5, %s257
      %p259 = pneg %p185
      %p260 = pneg %p182
      %p261 = scmp.lt.s32.totalorder %s18, 1
      %s262 = scalar_select %p261, %s18, 1
      %s263 = smul.addr %s262, 8
      %s264 = scalar_lea.vmem %s6, %s263
      %s265 = smul.u32 4, %s18
      %p266 = scmp.lt.s32.totalorder %s265, 7
      %s267 = scalar_select %p266, %s265, 7
      %s268 = smul.addr %s267, 18
      %s269 = smul.addr %s268, 4
      %s270 = scalar_lea.vmem %s0, %s269
      %s271 = smul.u32 4, %s18
      %p272 = scmp.lt.s32.totalorder %s18, 1
      %s273 = scalar_select %p272, %s18, 1
      %s274 = smul.addr %s273, 8
      %s275 = smul.addr %s274, 4
      %s276 = scalar_lea.vmem %s3, %s275
      %p277 = scmp.lt.s32.totalorder %s18, 1
      %s278 = scalar_select %p277, %s18, 1
      %s279 = smul.addr %s278, 8
      %s280 = scalar_lea.vmem %s4, %s279
      %p281 = scmp.lt.s32.totalorder %s18, 1
      %s282 = scalar_select %p281, %s18, 1
      %s283 = smul.addr %s282, 8
      %s284 = smul.addr %s283, 4
      %s285 = scalar_lea.vmem %s5, %s284
      %p286 = scmp.lt.s32.totalorder %s18, 1
      %s287 = scalar_select %p286, %s18, 1
      %s288 = smul.addr %s287, 8
      %s289 = scalar_lea.vmem %s6, %s288
      %v291 = vld [vmem:[%s270] sm:$0xf]
      %v292 = vld [vmem:[%s270 + $0x8] sm:$0xf]
      %v293 = vld [vmem:[%s270 + $0x10] sm:$0xf]
      %v294 = vld [vmem:[%s270 + $0x18] sm:$0xf]
      %v295 = vld [vmem:[%s270 + $0x20] sm:$0xf]
      %v296 = vld [vmem:[%s270 + $0x28] sm:$0xf]
      %v297 = vld [vmem:[%s270 + $0x30] sm:$0xf]
      %v298 = vld [vmem:[%s270 + $0x38] sm:$0xf]
      %v299 = vld [vmem:[%s1] sm:$0xf]
      %v300 = vld [vmem:[%s1 + $0x4] sm:$0xf]
      %v301 = vld [vmem:[%s1 + $0x8] sm:$0xf]
      %v302 = vld [vmem:[%s1 + $0xc] sm:$0xf]
      %v303 = vld [vmem:[%s1 + $0x10] sm:$0xf]
      %v304 = vld [vmem:[%s1 + $0x14] sm:$0xf]
      %v305 = vld [vmem:[%s1 + $0x18] sm:$0xf]
      %v306 = vld [vmem:[%s1 + $0x1c] sm:$0xf]
      %v307 = vld [vmem:[%s1 + $0x20] sm:$0xf]
      %v308 = vld [vmem:[%s1 + $0x24] sm:$0xf]
      %v309 = vld [vmem:[%s1 + $0x28] sm:$0xf]
      %v310 = vld [vmem:[%s1 + $0x2c] sm:$0xf]
      %v311 = vld [vmem:[%s1 + $0x30] sm:$0xf]
      %v312 = vld [vmem:[%s1 + $0x34] sm:$0xf]
      %v313 = vld [vmem:[%s1 + $0x38] sm:$0xf]
      %v314 = vld [vmem:[%s1 + $0x3c] sm:$0xf]
      %s315 = scalar_lea.vmem %s270, 72
      %v316 = vld [vmem:[%s315] sm:$0xf]
      %v317 = vld [vmem:[%s315 + $0x8] sm:$0xf]
      %v318 = vld [vmem:[%s315 + $0x10] sm:$0xf]
      %v319 = vld [vmem:[%s315 + $0x18] sm:$0xf]
      %v320 = vld [vmem:[%s315 + $0x20] sm:$0xf]
      %v321 = vld [vmem:[%s315 + $0x28] sm:$0xf]
      %v322 = vld [vmem:[%s315 + $0x30] sm:$0xf]
      %v323 = vld [vmem:[%s315 + $0x38] sm:$0xf]
      %s324 = scalar_lea.vmem %s1, 64
      %v325 = vld [vmem:[%s324] sm:$0xf]
      %v326 = vld [vmem:[%s324 + $0x4] sm:$0xf]
      %v327 = vld [vmem:[%s324 + $0x8] sm:$0xf]
      %v328 = vld [vmem:[%s324 + $0xc] sm:$0xf]
      %v329 = vld [vmem:[%s324 + $0x10] sm:$0xf]
      %v330 = vld [vmem:[%s324 + $0x14] sm:$0xf]
      %v331 = vld [vmem:[%s324 + $0x18] sm:$0xf]
      %v332 = vld [vmem:[%s324 + $0x1c] sm:$0xf]
      %v333 = vld [vmem:[%s324 + $0x20] sm:$0xf]
      %v334 = vld [vmem:[%s324 + $0x24] sm:$0xf]
      %v335 = vld [vmem:[%s324 + $0x28] sm:$0xf]
      %v336 = vld [vmem:[%s324 + $0x2c] sm:$0xf]
      %v337 = vld [vmem:[%s324 + $0x30] sm:$0xf]
      %v338 = vld [vmem:[%s324 + $0x34] sm:$0xf]
      %v339 = vld [vmem:[%s324 + $0x38] sm:$0xf]
      %v340 = vld [vmem:[%s324 + $0x3c] sm:$0xf]
      %v349 = vunpack.c.l.b16 %v316
      %v350 = vunpack.c.l.b16 %v317
      %v351 = vunpack.c.l.b16 %v318
      %v352 = vunpack.c.l.b16 %v319
      %v353 = vunpack.c.l.b16 %v320
      %v354 = vunpack.c.l.b16 %v321
      %v355 = vunpack.c.l.b16 %v322
      %v356 = vunpack.c.l.b16 %v323
      %v357 = vpack.c.b16 %v350, %v349
      %v358 = vpack.c.b16 %v352, %v351
      %v359 = vpack.c.b16 %v354, %v353
      %v360 = vpack.c.b16 %v356, %v355
      %v381 = vunpack.c.l.b16 %v325
      %v382 = vunpack.c.l.b16 %v326
      %v383 = vunpack.c.l.b16 %v327
      %v384 = vunpack.c.l.b16 %v328
      %v385 = vunpack.c.l.b16 %v329
      %v386 = vunpack.c.l.b16 %v330
      %v387 = vunpack.c.l.b16 %v331
      %v388 = vunpack.c.l.b16 %v332
      %v389 = vunpack.c.l.b16 %v333
      %v390 = vunpack.c.l.b16 %v334
      %v391 = vunpack.c.l.b16 %v335
      %v392 = vunpack.c.l.b16 %v336
      %v393 = vunpack.c.l.b16 %v337
      %v394 = vunpack.c.l.b16 %v338
      %v395 = vunpack.c.l.b16 %v339
      %v396 = vunpack.c.l.b16 %v340
      %v397 = vpack.c.b16 %v382, %v381
      %v398 = vpack.c.b16 %v384, %v383
      %v399 = vpack.c.b16 %v386, %v385
      %v400 = vpack.c.b16 %v388, %v387
      %v401 = vpack.c.b16 %v390, %v389
      %v402 = vpack.c.b16 %v392, %v391
      %v403 = vpack.c.b16 %v394, %v393
      %v404 = vpack.c.b16 %v396, %v395
      %413 = vmatprep.subr.bf16.mxu0 0
      %414 = vmatpush1.bf16.msra.mxu0 %v397
      %415 = vmatprep.subr.bf16.mxu0 0
      %416 = vmatpush1.bf16.msra.mxu0 %v398
      %417 = vmatprep.subr.bf16.mxu0 0
      %418 = vmatpush1.bf16.msra.mxu0 %v399
      %419 = vmatprep.subr.bf16.mxu0 0
      %420 = vmatpush1.bf16.msra.mxu0 %v400
      %421 = vmatprep.subr.bf16.mxu0 0
      %422 = vmatpush1.bf16.msra.mxu0 %v401
      %423 = vmatprep.subr.bf16.mxu0 0
      %424 = vmatpush1.bf16.msra.mxu0 %v402
      %425 = vmatprep.subr.bf16.mxu0 0
      %426 = vmatpush1.bf16.msra.mxu0 %v403
      %427 = vmatprep.subr.bf16.mxu0 0
      %428 = vmatpush1.bf16.msra.mxu0 %v404
      %429 = vmatprep.subr.bf16.mxu0 0
      %430 = vmatpush1.bf16.msra.mxu0 0
      %431 = vmatprep.subr.bf16.mxu0 0
      %432 = vmatpush1.bf16.msra.mxu0 0
      %433 = vmatprep.subr.bf16.mxu0 0
      %434 = vmatpush1.bf16.msra.mxu0 0
      %435 = vmatprep.subr.bf16.mxu0 0
      %436 = vmatpush1.bf16.msra.mxu0 0
      %437 = vmatprep.subr.bf16.mxu0 0
      %438 = vmatpush1.bf16.msra.mxu0 0
      %439 = vmatprep.subr.bf16.mxu0 0
      %440 = vmatpush1.bf16.msra.mxu0 0
      %441 = vmatprep.subr.bf16.mxu0 0
      %442 = vmatpush1.bf16.msra.mxu0 0
      %443 = vmatprep.subr.bf16.mxu0 0
      %444 = vmatpush1.bf16.msra.mxu0 0
      %445 = vmatprep.mubr.bf16.mxu0 0
      %446 = vmatmul.mubr.bf16.gmra.mrb[0].mxu0 %v357
      %v447 = vpop.f32.mrb[0].mxu0
      %v448 = vadd.f32 0.0, %v447
      %v449 = vpop.f32.mrb[0].mxu0
      %v450 = vpop.f32.mrb[0].mxu0
      %v451 = vadd.f32 0.0, %v450
      %v452 = vpop.f32.mrb[0].mxu0
      %453 = vmatprep.mubr.bf16.mxu0 0
      %454 = vmatmul.mubr.bf16.gmra.mrb[0].mxu0 %v358
      %v455 = vpop.f32.mrb[0].mxu0
      %v456 = vadd.f32 0.0, %v455
      %v457 = vpop.f32.mrb[0].mxu0
      %v458 = vpop.f32.mrb[0].mxu0
      %v459 = vadd.f32 0.0, %v458
      %v460 = vpop.f32.mrb[0].mxu0
      %461 = vmatprep.mubr.bf16.mxu0 0
      %462 = vmatmul.mubr.bf16.gmra.mrb[0].mxu0 %v359
      %v463 = vpop.f32.mrb[0].mxu0
      %v464 = vadd.f32 0.0, %v463
      %v465 = vpop.f32.mrb[0].mxu0
      %v466 = vpop.f32.mrb[0].mxu0
      %v467 = vadd.f32 0.0, %v466
      %v468 = vpop.f32.mrb[0].mxu0
      %469 = vmatprep.mubr.bf16.mxu0 0
      %470 = vmatmul.mubr.bf16.gmra.mrb[0].mxu0 %v360
      %v471 = vpop.f32.mrb[0].mxu0
      %v472 = vadd.f32 0.0, %v471
      %v473 = vpop.f32.mrb[0].mxu0
      %v474 = vpop.f32.mrb[0].mxu0
      %v475 = vadd.f32 0.0, %v474
      %v476 = vpop.f32.mrb[0].mxu0
      %477 = vdwg.mxu0
      %v486 = vunpack.c.l.b16 %v291
      %v487 = vunpack.c.l.b16 %v292
      %v488 = vunpack.c.l.b16 %v293
      %v489 = vunpack.c.l.b16 %v294
      %v490 = vunpack.c.l.b16 %v295
      %v491 = vunpack.c.l.b16 %v296
      %v492 = vunpack.c.l.b16 %v297
      %v493 = vunpack.c.l.b16 %v298
      %v494 = vpack.c.b16 %v487, %v486
      %v495 = vpack.c.b16 %v489, %v488
      %v496 = vpack.c.b16 %v491, %v490
      %v497 = vpack.c.b16 %v493, %v492
      %v518 = vunpack.c.l.b16 %v299
      %v519 = vunpack.c.l.b16 %v300
      %v520 = vunpack.c.l.b16 %v301
      %v521 = vunpack.c.l.b16 %v302
      %v522 = vunpack.c.l.b16 %v303
      %v523 = vunpack.c.l.b16 %v304
      %v524 = vunpack.c.l.b16 %v305
      %v525 = vunpack.c.l.b16 %v306
      %v526 = vunpack.c.l.b16 %v307
      %v527 = vunpack.c.l.b16 %v308
      %v528 = vunpack.c.l.b16 %v309
      %v529 = vunpack.c.l.b16 %v310
      %v530 = vunpack.c.l.b16 %v311
      %v531 = vunpack.c.l.b16 %v312
      %v532 = vunpack.c.l.b16 %v313
      %v533 = vunpack.c.l.b16 %v314
      %v534 = vpack.c.b16 %v519, %v518
      %v535 = vpack.c.b16 %v521, %v520
      %v536 = vpack.c.b16 %v523, %v522
      %v537 = vpack.c.b16 %v525, %v524
      %v538 = vpack.c.b16 %v527, %v526
      %v539 = vpack.c.b16 %v529, %v528
      %v540 = vpack.c.b16 %v531, %v530
      %v541 = vpack.c.b16 %v533, %v532
      %550 = vmatprep.subr.bf16.mxu0 0
      %551 = vmatpush1.bf16.msra.mxu0 %v534
      %552 = vmatprep.subr.bf16.mxu0 0
      %553 = vmatpush1.bf16.msra.mxu0 %v535
      %554 = vmatprep.subr.bf16.mxu0 0
      %555 = vmatpush1.bf16.msra.mxu0 %v536
      %556 = vmatprep.subr.bf16.mxu0 0
      %557 = vmatpush1.bf16.msra.mxu0 %v537
      %558 = vmatprep.subr.bf16.mxu0 0
      %559 = vmatpush1.bf16.msra.mxu0 %v538
      %560 = vmatprep.subr.bf16.mxu0 0
      %561 = vmatpush1.bf16.msra.mxu0 %v539
      %562 = vmatprep.subr.bf16.mxu0 0
      %563 = vmatpush1.bf16.msra.mxu0 %v540
      %564 = vmatprep.subr.bf16.mxu0 0
      %565 = vmatpush1.bf16.msra.mxu0 %v541
      %566 = vmatprep.subr.bf16.mxu0 0
      %567 = vmatpush1.bf16.msra.mxu0 0
      %568 = vmatprep.subr.bf16.mxu0 0
      %569 = vmatpush1.bf16.msra.mxu0 0
      %570 = vmatprep.subr.bf16.mxu0 0
      %571 = vmatpush1.bf16.msra.mxu0 0
      %572 = vmatprep.subr.bf16.mxu0 0
      %573 = vmatpush1.bf16.msra.mxu0 0
      %574 = vmatprep.subr.bf16.mxu0 0
      %575 = vmatpush1.bf16.msra.mxu0 0
      %576 = vmatprep.subr.bf16.mxu0 0
      %577 = vmatpush1.bf16.msra.mxu0 0
      %578 = vmatprep.subr.bf16.mxu0 0
      %579 = vmatpush1.bf16.msra.mxu0 0
      %580 = vmatprep.subr.bf16.mxu0 0
      %581 = vmatpush1.bf16.msra.mxu0 0
      %582 = vmatprep.mubr.bf16.mxu0 0
      %583 = vmatmul.mubr.bf16.gmra.mrb[0].mxu0 %v494
      %v584 = vpop.f32.mrb[0].mxu0
      %v585 = vadd.f32 %v448, %v584
      %v586 = vpop.f32.mrb[0].mxu0
      %v587 = vpop.f32.mrb[0].mxu0
      %v588 = vadd.f32 %v451, %v587
      %v589 = vpop.f32.mrb[0].mxu0
      %590 = vmatprep.mubr.bf16.mxu0 0
      %591 = vmatmul.mubr.bf16.gmra.mrb[0].mxu0 %v495
      %v592 = vpop.f32.mrb[0].mxu0
      %v593 = vadd.f32 %v456, %v592
      %v594 = vpop.f32.mrb[0].mxu0
      %v595 = vpop.f32.mrb[0].mxu0
      %v596 = vadd.f32 %v459, %v595
      %v597 = vpop.f32.mrb[0].mxu0
      %598 = vmatprep.mubr.bf16.mxu0 0
      %599 = vmatmul.mubr.bf16.gmra.mrb[0].mxu0 %v496
      %v600 = vpop.f32.mrb[0].mxu0
      %v601 = vadd.f32 %v464, %v600
      %v602 = vpop.f32.mrb[0].mxu0
      %v603 = vpop.f32.mrb[0].mxu0
      %v604 = vadd.f32 %v467, %v603
      %v605 = vpop.f32.mrb[0].mxu0
      %606 = vmatprep.mubr.bf16.mxu0 0
      %607 = vmatmul.mubr.bf16.gmra.mrb[0].mxu0 %v497
      %v608 = vpop.f32.mrb[0].mxu0
      %v609 = vadd.f32 %v472, %v608
      %v610 = vpop.f32.mrb[0].mxu0
      %v611 = vpop.f32.mrb[0].mxu0
      %v612 = vadd.f32 %v475, %v611
      %v613 = vpop.f32.mrb[0].mxu0
      %614 = vdwg.mxu0
      %v615 = vld [vmem:[%s270] sm:$0xf]
      %v616 = vld [vmem:[%s270 + $0x4] sm:$0x1]
      %v617 = vld [vmem:[%s270 + $0x8] sm:$0xf]
      %v618 = vld [vmem:[%s270 + $0xc] sm:$0x1]
      %v619 = vld [vmem:[%s270 + $0x10] sm:$0xf]
      %v620 = vld [vmem:[%s270 + $0x14] sm:$0x1]
      %v621 = vld [vmem:[%s270 + $0x18] sm:$0xf]
      %v622 = vld [vmem:[%s270 + $0x1c] sm:$0x1]
      %v623 = vld [vmem:[%s270 + $0x20] sm:$0xf]
      %v624 = vld [vmem:[%s270 + $0x24] sm:$0x1]
      %v625 = vld [vmem:[%s270 + $0x28] sm:$0xf]
      %v626 = vld [vmem:[%s270 + $0x2c] sm:$0x1]
      %v627 = vld [vmem:[%s270 + $0x30] sm:$0xf]
      %v628 = vld [vmem:[%s270 + $0x34] sm:$0x1]
      %v629 = vld [vmem:[%s270 + $0x38] sm:$0xf]
      %v630 = vld [vmem:[%s270 + $0x3c] sm:$0x1]
      %vm631 = vsmask.f32 3328
      %vm632 = vsmask.f32 7440
      %vm633 = vmor %vm631, %vm632
      %v635 = vshrl.u32 %v615, 16
      %v637 = vrot.slane %v635, 4
      %v638 = vshll.u32 %v615, 16
      %v640 = vrot.slane %v638, 5
      %v641 = vor.u32 %v637, %v640
      %v642 = vrot.slane %v641, 4
      %v644 = vshll.u32 %v616, 16
      %v646 = vrot.slane %v644, 5
      %v647 = vsel %vm633, %v642, %v646
      %v649 = vshrl.u32 %v617, 16
      %v651 = vrot.slane %v649, 4
      %v652 = vshll.u32 %v617, 16
      %v654 = vrot.slane %v652, 5
      %v655 = vor.u32 %v651, %v654
      %v656 = vrot.slane %v655, 4
      %v658 = vshll.u32 %v618, 16
      %v660 = vrot.slane %v658, 5
      %v661 = vsel %vm633, %v656, %v660
      %v663 = vshrl.u32 %v619, 16
      %v665 = vrot.slane %v663, 4
      %v666 = vshll.u32 %v619, 16
      %v668 = vrot.slane %v666, 5
      %v669 = vor.u32 %v665, %v668
      %v670 = vrot.slane %v669, 4
      %v672 = vshll.u32 %v620, 16
      %v674 = vrot.slane %v672, 5
      %v675 = vsel %vm633, %v670, %v674
      %v677 = vshrl.u32 %v621, 16
      %v679 = vrot.slane %v677, 4
      %v680 = vshll.u32 %v621, 16
      %v682 = vrot.slane %v680, 5
      %v683 = vor.u32 %v679, %v682
      %v684 = vrot.slane %v683, 4
      %v686 = vshll.u32 %v622, 16
      %v688 = vrot.slane %v686, 5
      %v689 = vsel %vm633, %v684, %v688
      %v691 = vshrl.u32 %v623, 16
      %v693 = vrot.slane %v691, 4
      %v694 = vshll.u32 %v623, 16
      %v696 = vrot.slane %v694, 5
      %v697 = vor.u32 %v693, %v696
      %v698 = vrot.slane %v697, 4
      %v700 = vshll.u32 %v624, 16
      %v702 = vrot.slane %v700, 5
      %v703 = vsel %vm633, %v698, %v702
      %v705 = vshrl.u32 %v625, 16
      %v707 = vrot.slane %v705, 4
      %v708 = vshll.u32 %v625, 16
      %v710 = vrot.slane %v708, 5
      %v711 = vor.u32 %v707, %v710
      %v712 = vrot.slane %v711, 4
      %v714 = vshll.u32 %v626, 16
      %v716 = vrot.slane %v714, 5
      %v717 = vsel %vm633, %v712, %v716
      %v719 = vshrl.u32 %v627, 16
      %v721 = vrot.slane %v719, 4
      %v722 = vshll.u32 %v627, 16
      %v724 = vrot.slane %v722, 5
      %v725 = vor.u32 %v721, %v724
      %v726 = vrot.slane %v725, 4
      %v728 = vshll.u32 %v628, 16
      %v730 = vrot.slane %v728, 5
      %v731 = vsel %vm633, %v726, %v730
      %v733 = vshrl.u32 %v629, 16
      %v735 = vrot.slane %v733, 4
      %v736 = vshll.u32 %v629, 16
      %v738 = vrot.slane %v736, 5
      %v739 = vor.u32 %v735, %v738
      %v740 = vrot.slane %v739, 4
      %v742 = vshll.u32 %v630, 16
      %v744 = vrot.slane %v742, 5
      %v745 = vsel %vm633, %v740, %v744
      %s746 = scalar_lea.vmem %s1, 128
      %v747 = vld [vmem:[%s746] sm:$0xf]
      %v748 = vld [vmem:[%s746 + $0x4] sm:$0xf]
      %v749 = vld [vmem:[%s746 + $0x8] sm:$0xf]
      %v750 = vld [vmem:[%s746 + $0xc] sm:$0xf]
      %v751 = vld [vmem:[%s746 + $0x10] sm:$0xf]
      %v752 = vld [vmem:[%s746 + $0x14] sm:$0xf]
      %v753 = vld [vmem:[%s746 + $0x18] sm:$0xf]
      %v754 = vld [vmem:[%s746 + $0x1c] sm:$0xf]
      %v755 = vld [vmem:[%s746 + $0x20] sm:$0xf]
      %v756 = vld [vmem:[%s746 + $0x24] sm:$0xf]
      %v757 = vld [vmem:[%s746 + $0x28] sm:$0xf]
      %v758 = vld [vmem:[%s746 + $0x2c] sm:$0xf]
      %v759 = vld [vmem:[%s746 + $0x30] sm:$0xf]
      %v760 = vld [vmem:[%s746 + $0x34] sm:$0xf]
      %v761 = vld [vmem:[%s746 + $0x38] sm:$0xf]
      %v762 = vld [vmem:[%s746 + $0x3c] sm:$0xf]
      %v763 = vunpack.c.l.b16 %v647
      %v764 = vunpack.c.l.b16 %v661
      %v765 = vunpack.c.l.b16 %v675
      %v766 = vunpack.c.l.b16 %v689
      %v767 = vunpack.c.l.b16 %v703
      %v768 = vunpack.c.l.b16 %v717
      %v769 = vunpack.c.l.b16 %v731
      %v770 = vunpack.c.l.b16 %v745
      %v771 = vpack.c.b16 %v764, %v763
      %v772 = vpack.c.b16 %v766, %v765
      %v773 = vpack.c.b16 %v768, %v767
      %v774 = vpack.c.b16 %v770, %v769
      %v795 = vunpack.c.l.b16 %v747
      %v796 = vunpack.c.l.b16 %v748
      %v797 = vunpack.c.l.b16 %v749
      %v798 = vunpack.c.l.b16 %v750
      %v799 = vunpack.c.l.b16 %v751
      %v800 = vunpack.c.l.b16 %v752
      %v801 = vunpack.c.l.b16 %v753
      %v802 = vunpack.c.l.b16 %v754
      %v803 = vunpack.c.l.b16 %v755
      %v804 = vunpack.c.l.b16 %v756
      %v805 = vunpack.c.l.b16 %v757
      %v806 = vunpack.c.l.b16 %v758
      %v807 = vunpack.c.l.b16 %v759
      %v808 = vunpack.c.l.b16 %v760
      %v809 = vunpack.c.l.b16 %v761
      %v810 = vunpack.c.l.b16 %v762
      %v811 = vpack.c.b16 %v796, %v795
      %v812 = vpack.c.b16 %v798, %v797
      %v813 = vpack.c.b16 %v800, %v799
      %v814 = vpack.c.b16 %v802, %v801
      %v815 = vpack.c.b16 %v804, %v803
      %v816 = vpack.c.b16 %v806, %v805
      %v817 = vpack.c.b16 %v808, %v807
      %v818 = vpack.c.b16 %v810, %v809
      %827 = vmatprep.subr.bf16.mxu0 0
      %828 = vmatpush1.bf16.msra.mxu0 %v811
      %829 = vmatprep.subr.bf16.mxu0 0
      %830 = vmatpush1.bf16.msra.mxu0 %v812
      %831 = vmatprep.subr.bf16.mxu0 0
      %832 = vmatpush1.bf16.msra.mxu0 %v813
      %833 = vmatprep.subr.bf16.mxu0 0
      %834 = vmatpush1.bf16.msra.mxu0 %v814
      %835 = vmatprep.subr.bf16.mxu0 0
      %836 = vmatpush1.bf16.msra.mxu0 %v815
      %837 = vmatprep.subr.bf16.mxu0 0
      %838 = vmatpush1.bf16.msra.mxu0 %v816
      %839 = vmatprep.subr.bf16.mxu0 0
      %840 = vmatpush1.bf16.msra.mxu0 %v817
      %841 = vmatprep.subr.bf16.mxu0 0
      %842 = vmatpush1.bf16.msra.mxu0 %v818
      %843 = vmatprep.subr.bf16.mxu0 0
      %844 = vmatpush1.bf16.msra.mxu0 0
      %845 = vmatprep.subr.bf16.mxu0 0
      %846 = vmatpush1.bf16.msra.mxu0 0
      %847 = vmatprep.subr.bf16.mxu0 0
      %848 = vmatpush1.bf16.msra.mxu0 0
      %849 = vmatprep.subr.bf16.mxu0 0
      %850 = vmatpush1.bf16.msra.mxu0 0
      %851 = vmatprep.subr.bf16.mxu0 0
      %852 = vmatpush1.bf16.msra.mxu0 0
      %853 = vmatprep.subr.bf16.mxu0 0
      %854 = vmatpush1.bf16.msra.mxu0 0
      %855 = vmatprep.subr.bf16.mxu0 0
      %856 = vmatpush1.bf16.msra.mxu0 0
      %857 = vmatprep.subr.bf16.mxu0 0
      %858 = vmatpush1.bf16.msra.mxu0 0
      %859 = vmatprep.mubr.bf16.mxu0 0
      %860 = vmatmul.mubr.bf16.gmra.mrb[0].mxu0 %v771
      %v861 = vpop.f32.mrb[0].mxu0
      %v862 = vadd.f32 0.0, %v861
      %v863 = vpop.f32.mrb[0].mxu0
      %v864 = vpop.f32.mrb[0].mxu0
      %v865 = vadd.f32 0.0, %v864
      %v866 = vpop.f32.mrb[0].mxu0
      %867 = vmatprep.mubr.bf16.mxu0 0
      %868 = vmatmul.mubr.bf16.gmra.mrb[0].mxu0 %v772
      %v869 = vpop.f32.mrb[0].mxu0
      %v870 = vadd.f32 0.0, %v869
      %v871 = vpop.f32.mrb[0].mxu0
      %v872 = vpop.f32.mrb[0].mxu0
      %v873 = vadd.f32 0.0, %v872
      %v874 = vpop.f32.mrb[0].mxu0
      %875 = vmatprep.mubr.bf16.mxu0 0
      %876 = vmatmul.mubr.bf16.gmra.mrb[0].mxu0 %v773
      %v877 = vpop.f32.mrb[0].mxu0
      %v878 = vadd.f32 0.0, %v877
      %v879 = vpop.f32.mrb[0].mxu0
      %v880 = vpop.f32.mrb[0].mxu0
      %v881 = vadd.f32 0.0, %v880
      %v882 = vpop.f32.mrb[0].mxu0
      %883 = vmatprep.mubr.bf16.mxu0 0
      %884 = vmatmul.mubr.bf16.gmra.mrb[0].mxu0 %v774
      %v885 = vpop.f32.mrb[0].mxu0
      %v886 = vadd.f32 0.0, %v885
      %v887 = vpop.f32.mrb[0].mxu0
      %v888 = vpop.f32.mrb[0].mxu0
      %v889 = vadd.f32 0.0, %v888
      %v890 = vpop.f32.mrb[0].mxu0
      %891 = vdwg.mxu0
      %v892 = vadd.f32 %v585, %v862
      %v893 = vadd.f32 %v588, %v865
      %v894 = vadd.f32 %v593, %v870
      %v895 = vadd.f32 %v596, %v873
      %v896 = vadd.f32 %v601, %v878
      %v897 = vadd.f32 %v604, %v881
      %v898 = vadd.f32 %v609, %v886
      %v899 = vadd.f32 %v612, %v889
      %s900 = scalar_lea.vmem %s270, 144
      %v901 = vld [vmem:[%s900] sm:$0xf]
      %v902 = vld [vmem:[%s900 + $0x8] sm:$0xf]
      %v903 = vld [vmem:[%s900 + $0x10] sm:$0xf]
      %v904 = vld [vmem:[%s900 + $0x18] sm:$0xf]
      %v905 = vld [vmem:[%s900 + $0x20] sm:$0xf]
      %v906 = vld [vmem:[%s900 + $0x28] sm:$0xf]
      %v907 = vld [vmem:[%s900 + $0x30] sm:$0xf]
      %v908 = vld [vmem:[%s900 + $0x38] sm:$0xf]
      %s909 = scalar_lea.vmem %s1, 192
      %v910 = vld [vmem:[%s909] sm:$0xf]
      %v911 = vld [vmem:[%s909 + $0x4] sm:$0xf]
      %v912 = vld [vmem:[%s909 + $0x8] sm:$0xf]
      %v913 = vld [vmem:[%s909 + $0xc] sm:$0xf]
      %v914 = vld [vmem:[%s909 + $0x10] sm:$0xf]
      %v915 = vld [vmem:[%s909 + $0x14] sm:$0xf]
      %v916 = vld [vmem:[%s909 + $0x18] sm:$0xf]
      %v917 = vld [vmem:[%s909 + $0x1c] sm:$0xf]
      %v918 = vld [vmem:[%s909 + $0x20] sm:$0xf]
      %v919 = vld [vmem:[%s909 + $0x24] sm:$0xf]
      %v920 = vld [vmem:[%s909 + $0x28] sm:$0xf]
      %v921 = vld [vmem:[%s909 + $0x2c] sm:$0xf]
      %v922 = vld [vmem:[%s909 + $0x30] sm:$0xf]
      %v923 = vld [vmem:[%s909 + $0x34] sm:$0xf]
      %v924 = vld [vmem:[%s909 + $0x38] sm:$0xf]
      %v925 = vld [vmem:[%s909 + $0x3c] sm:$0xf]
      %v934 = vunpack.c.l.b16 %v901
      %v935 = vunpack.c.l.b16 %v902
      %v936 = vunpack.c.l.b16 %v903
      %v937 = vunpack.c.l.b16 %v904
      %v938 = vunpack.c.l.b16 %v905
      %v939 = vunpack.c.l.b16 %v906
      %v940 = vunpack.c.l.b16 %v907
      %v941 = vunpack.c.l.b16 %v908
      %v942 = vpack.c.b16 %v935, %v934
      %v943 = vpack.c.b16 %v937, %v936
      %v944 = vpack.c.b16 %v939, %v938
      %v945 = vpack.c.b16 %v941, %v940
      %v966 = vunpack.c.l.b16 %v910
      %v967 = vunpack.c.l.b16 %v911
      %v968 = vunpack.c.l.b16 %v912
      %v969 = vunpack.c.l.b16 %v913
      %v970 = vunpack.c.l.b16 %v914
      %v971 = vunpack.c.l.b16 %v915
      %v972 = vunpack.c.l.b16 %v916
      %v973 = vunpack.c.l.b16 %v917
      %v974 = vunpack.c.l.b16 %v918
      %v975 = vunpack.c.l.b16 %v919
      %v976 = vunpack.c.l.b16 %v920
      %v977 = vunpack.c.l.b16 %v921
      %v978 = vunpack.c.l.b16 %v922
      %v979 = vunpack.c.l.b16 %v923
      %v980 = vunpack.c.l.b16 %v924
      %v981 = vunpack.c.l.b16 %v925
      %v982 = vpack.c.b16 %v967, %v966
      %v983 = vpack.c.b16 %v969, %v968
      %v984 = vpack.c.b16 %v971, %v970
      %v985 = vpack.c.b16 %v973, %v972
      %v986 = vpack.c.b16 %v975, %v974
      %v987 = vpack.c.b16 %v977, %v976
      %v988 = vpack.c.b16 %v979, %v978
      %v989 = vpack.c.b16 %v981, %v980
      %998 = vmatprep.subr.bf16.mxu0 0
      %999 = vmatpush1.bf16.msra.mxu0 %v982
      %1000 = vmatprep.subr.bf16.mxu0 0
      %1001 = vmatpush1.bf16.msra.mxu0 %v983
      %1002 = vmatprep.subr.bf16.mxu0 0
      %1003 = vmatpush1.bf16.msra.mxu0 %v984
      %1004 = vmatprep.subr.bf16.mxu0 0
      %1005 = vmatpush1.bf16.msra.mxu0 %v985
      %1006 = vmatprep.subr.bf16.mxu0 0
      %1007 = vmatpush1.bf16.msra.mxu0 %v986
      %1008 = vmatprep.subr.bf16.mxu0 0
      %1009 = vmatpush1.bf16.msra.mxu0 %v987
      %1010 = vmatprep.subr.bf16.mxu0 0
      %1011 = vmatpush1.bf16.msra.mxu0 %v988
      %1012 = vmatprep.subr.bf16.mxu0 0
      %1013 = vmatpush1.bf16.msra.mxu0 %v989
      %1014 = vmatprep.subr.bf16.mxu0 0
      %1015 = vmatpush1.bf16.msra.mxu0 0
      %1016 = vmatprep.subr.bf16.mxu0 0
      %1017 = vmatpush1.bf16.msra.mxu0 0
      %1018 = vmatprep.subr.bf16.mxu0 0
      %1019 = vmatpush1.bf16.msra.mxu0 0
      %1020 = vmatprep.subr.bf16.mxu0 0
      %1021 = vmatpush1.bf16.msra.mxu0 0
      %1022 = vmatprep.subr.bf16.mxu0 0
      %1023 = vmatpush1.bf16.msra.mxu0 0
      %1024 = vmatprep.subr.bf16.mxu0 0
      %1025 = vmatpush1.bf16.msra.mxu0 0
      %1026 = vmatprep.subr.bf16.mxu0 0
      %1027 = vmatpush1.bf16.msra.mxu0 0
      %1028 = vmatprep.subr.bf16.mxu0 0
      %1029 = vmatpush1.bf16.msra.mxu0 0
      %1030 = vmatprep.mubr.bf16.mxu0 0
      %1031 = vmatmul.mubr.bf16.gmra.mrb[0].mxu0 %v942
      %v1032 = vpop.f32.mrb[0].mxu0
      %v1033 = vadd.f32 0.0, %v1032
      %v1034 = vpop.f32.mrb[0].mxu0
      %v1035 = vpop.f32.mrb[0].mxu0
      %v1036 = vadd.f32 0.0, %v1035
      %v1037 = vpop.f32.mrb[0].mxu0
      %1038 = vmatprep.mubr.bf16.mxu0 0
      %1039 = vmatmul.mubr.bf16.gmra.mrb[0].mxu0 %v943
      %v1040 = vpop.f32.mrb[0].mxu0
      %v1041 = vadd.f32 0.0, %v1040
      %v1042 = vpop.f32.mrb[0].mxu0
      %v1043 = vpop.f32.mrb[0].mxu0
      %v1044 = vadd.f32 0.0, %v1043
      %v1045 = vpop.f32.mrb[0].mxu0
      %1046 = vmatprep.mubr.bf16.mxu0 0
      %1047 = vmatmul.mubr.bf16.gmra.mrb[0].mxu0 %v944
      %v1048 = vpop.f32.mrb[0].mxu0
      %v1049 = vadd.f32 0.0, %v1048
      %v1050 = vpop.f32.mrb[0].mxu0
      %v1051 = vpop.f32.mrb[0].mxu0
      %v1052 = vadd.f32 0.0, %v1051
      %v1053 = vpop.f32.mrb[0].mxu0
      %1054 = vmatprep.mubr.bf16.mxu0 0
      %1055 = vmatmul.mubr.bf16.gmra.mrb[0].mxu0 %v945
      %v1056 = vpop.f32.mrb[0].mxu0
      %v1057 = vadd.f32 0.0, %v1056
      %v1058 = vpop.f32.mrb[0].mxu0
      %v1059 = vpop.f32.mrb[0].mxu0
      %v1060 = vadd.f32 0.0, %v1059
      %v1061 = vpop.f32.mrb[0].mxu0
      %1062 = vdwg.mxu0
      %v1063 = vadd.f32 %v892, %v1033
      %v1064 = vadd.f32 %v893, %v1036
      %v1065 = vadd.f32 %v894, %v1041
      %v1066 = vadd.f32 %v895, %v1044
      %v1067 = vadd.f32 %v896, %v1049
      %v1068 = vadd.f32 %v897, %v1052
      %v1069 = vadd.f32 %v898, %v1057
      %v1070 = vadd.f32 %v899, %v1060
      %s1071 = scalar_lea.vmem %s270, 216
      %v1072 = vld [vmem:[%s1071] sm:$0xf]
      %v1073 = vld [vmem:[%s1071 + $0x8] sm:$0xf]
      %v1074 = vld [vmem:[%s1071 + $0x10] sm:$0xf]
      %v1075 = vld [vmem:[%s1071 + $0x18] sm:$0xf]
      %v1076 = vld [vmem:[%s1071 + $0x20] sm:$0xf]
      %v1077 = vld [vmem:[%s1071 + $0x28] sm:$0xf]
      %v1078 = vld [vmem:[%s1071 + $0x30] sm:$0xf]
      %v1079 = vld [vmem:[%s1071 + $0x38] sm:$0xf]
      %s1080 = scalar_lea.vmem %s1, 256
      %v1081 = vld [vmem:[%s1080] sm:$0xf]
      %v1082 = vld [vmem:[%s1080 + $0x4] sm:$0xf]
      %v1083 = vld [vmem:[%s1080 + $0x8] sm:$0xf]
      %v1084 = vld [vmem:[%s1080 + $0xc] sm:$0xf]
      %v1085 = vld [vmem:[%s1080 + $0x10] sm:$0xf]
      %v1086 = vld [vmem:[%s1080 + $0x14] sm:$0xf]
      %v1087 = vld [vmem:[%s1080 + $0x18] sm:$0xf]
      %v1088 = vld [vmem:[%s1080 + $0x1c] sm:$0xf]
      %v1089 = vld [vmem:[%s1080 + $0x20] sm:$0xf]
      %v1090 = vld [vmem:[%s1080 + $0x24] sm:$0xf]
      %v1091 = vld [vmem:[%s1080 + $0x28] sm:$0xf]
      %v1092 = vld [vmem:[%s1080 + $0x2c] sm:$0xf]
      %v1093 = vld [vmem:[%s1080 + $0x30] sm:$0xf]
      %v1094 = vld [vmem:[%s1080 + $0x34] sm:$0xf]
      %v1095 = vld [vmem:[%s1080 + $0x38] sm:$0xf]
      %v1096 = vld [vmem:[%s1080 + $0x3c] sm:$0xf]
      %v1105 = vunpack.c.l.b16 %v1072
      %v1106 = vunpack.c.l.b16 %v1073
      %v1107 = vunpack.c.l.b16 %v1074
      %v1108 = vunpack.c.l.b16 %v1075
      %v1109 = vunpack.c.l.b16 %v1076
      %v1110 = vunpack.c.l.b16 %v1077
      %v1111 = vunpack.c.l.b16 %v1078
      %v1112 = vunpack.c.l.b16 %v1079
      %v1113 = vpack.c.b16 %v1106, %v1105
      %v1114 = vpack.c.b16 %v1108, %v1107
      %v1115 = vpack.c.b16 %v1110, %v1109
      %v1116 = vpack.c.b16 %v1112, %v1111
      %v1137 = vunpack.c.l.b16 %v1081
      %v1138 = vunpack.c.l.b16 %v1082
      %v1139 = vunpack.c.l.b16 %v1083
      %v1140 = vunpack.c.l.b16 %v1084
      %v1141 = vunpack.c.l.b16 %v1085
      %v1142 = vunpack.c.l.b16 %v1086
      %v1143 = vunpack.c.l.b16 %v1087
      %v1144 = vunpack.c.l.b16 %v1088
      %v1145 = vunpack.c.l.b16 %v1089
      %v1146 = vunpack.c.l.b16 %v1090
      %v1147 = vunpack.c.l.b16 %v1091
      %v1148 = vunpack.c.l.b16 %v1092
      %v1149 = vunpack.c.l.b16 %v1093
      %v1150 = vunpack.c.l.b16 %v1094
      %v1151 = vunpack.c.l.b16 %v1095
      %v1152 = vunpack.c.l.b16 %v1096
      %v1153 = vpack.c.b16 %v1138, %v1137
      %v1154 = vpack.c.b16 %v1140, %v1139
      %v1155 = vpack.c.b16 %v1142, %v1141
      %v1156 = vpack.c.b16 %v1144, %v1143
      %v1157 = vpack.c.b16 %v1146, %v1145
      %v1158 = vpack.c.b16 %v1148, %v1147
      %v1159 = vpack.c.b16 %v1150, %v1149
      %v1160 = vpack.c.b16 %v1152, %v1151
      %1169 = vmatprep.subr.bf16.mxu0 0
      %1170 = vmatpush1.bf16.msra.mxu0 %v1153
      %1171 = vmatprep.subr.bf16.mxu0 0
      %1172 = vmatpush1.bf16.msra.mxu0 %v1154
      %1173 = vmatprep.subr.bf16.mxu0 0
      %1174 = vmatpush1.bf16.msra.mxu0 %v1155
      %1175 = vmatprep.subr.bf16.mxu0 0
      %1176 = vmatpush1.bf16.msra.mxu0 %v1156
      %1177 = vmatprep.subr.bf16.mxu0 0
      %1178 = vmatpush1.bf16.msra.mxu0 %v1157
      %1179 = vmatprep.subr.bf16.mxu0 0
      %1180 = vmatpush1.bf16.msra.mxu0 %v1158
      %1181 = vmatprep.subr.bf16.mxu0 0
      %1182 = vmatpush1.bf16.msra.mxu0 %v1159
      %1183 = vmatprep.subr.bf16.mxu0 0
      %1184 = vmatpush1.bf16.msra.mxu0 %v1160
      %1185 = vmatprep.subr.bf16.mxu0 0
      %1186 = vmatpush1.bf16.msra.mxu0 0
      %1187 = vmatprep.subr.bf16.mxu0 0
      %1188 = vmatpush1.bf16.msra.mxu0 0
      %1189 = vmatprep.subr.bf16.mxu0 0
      %1190 = vmatpush1.bf16.msra.mxu0 0
      %1191 = vmatprep.subr.bf16.mxu0 0
      %1192 = vmatpush1.bf16.msra.mxu0 0
      %1193 = vmatprep.subr.bf16.mxu0 0
      %1194 = vmatpush1.bf16.msra.mxu0 0
      %1195 = vmatprep.subr.bf16.mxu0 0
      %1196 = vmatpush1.bf16.msra.mxu0 0
      %1197 = vmatprep.subr.bf16.mxu0 0
      %1198 = vmatpush1.bf16.msra.mxu0 0
      %1199 = vmatprep.subr.bf16.mxu0 0
      %1200 = vmatpush1.bf16.msra.mxu0 0
      %1201 = vmatprep.mubr.bf16.mxu0 0
      %1202 = vmatmul.mubr.bf16.gmra.mrb[0].mxu0 %v1113
      %v1203 = vpop.f32.mrb[0].mxu0
      %v1204 = vadd.f32 0.0, %v1203
      %v1205 = vpop.f32.mrb[0].mxu0
      %v1206 = vpop.f32.mrb[0].mxu0
      %v1207 = vadd.f32 0.0, %v1206
      %v1208 = vpop.f32.mrb[0].mxu0
      %1209 = vmatprep.mubr.bf16.mxu0 0
      %1210 = vmatmul.mubr.bf16.gmra.mrb[0].mxu0 %v1114
      %v1211 = vpop.f32.mrb[0].mxu0
      %v1212 = vadd.f32 0.0, %v1211
      %v1213 = vpop.f32.mrb[0].mxu0
      %v1214 = vpop.f32.mrb[0].mxu0
      %v1215 = vadd.f32 0.0, %v1214
      %v1216 = vpop.f32.mrb[0].mxu0
      %1217 = vmatprep.mubr.bf16.mxu0 0
      %1218 = vmatmul.mubr.bf16.gmra.mrb[0].mxu0 %v1115
      %v1219 = vpop.f32.mrb[0].mxu0
      %v1220 = vadd.f32 0.0, %v1219
      %v1221 = vpop.f32.mrb[0].mxu0
      %v1222 = vpop.f32.mrb[0].mxu0
      %v1223 = vadd.f32 0.0, %v1222
      %v1224 = vpop.f32.mrb[0].mxu0
      %1225 = vmatprep.mubr.bf16.mxu0 0
      %1226 = vmatmul.mubr.bf16.gmra.mrb[0].mxu0 %v1116
      %v1227 = vpop.f32.mrb[0].mxu0
      %v1228 = vadd.f32 0.0, %v1227
      %v1229 = vpop.f32.mrb[0].mxu0
      %v1230 = vpop.f32.mrb[0].mxu0
      %v1231 = vadd.f32 0.0, %v1230
      %v1232 = vpop.f32.mrb[0].mxu0
      %1233 = vdwg.mxu0
      %v1234 = vadd.f32 %v1063, %v1204
      %v1235 = vadd.f32 %v1064, %v1207
      %v1236 = vadd.f32 %v1065, %v1212
      %v1237 = vadd.f32 %v1066, %v1215
      %v1238 = vadd.f32 %v1067, %v1220
      %v1239 = vadd.f32 %v1068, %v1223
      %v1240 = vadd.f32 %v1069, %v1228
      %v1241 = vadd.f32 %v1070, %v1231
      %v1242 = vld [vmem:[%s900] sm:$0xf]
      %v1243 = vld [vmem:[%s900 + $0x4] sm:$0x1]
      %v1244 = vld [vmem:[%s900 + $0x8] sm:$0xf]
      %v1245 = vld [vmem:[%s900 + $0xc] sm:$0x1]
      %v1246 = vld [vmem:[%s900 + $0x10] sm:$0xf]
      %v1247 = vld [vmem:[%s900 + $0x14] sm:$0x1]
      %v1248 = vld [vmem:[%s900 + $0x18] sm:$0xf]
      %v1249 = vld [vmem:[%s900 + $0x1c] sm:$0x1]
      %v1250 = vld [vmem:[%s900 + $0x20] sm:$0xf]
      %v1251 = vld [vmem:[%s900 + $0x24] sm:$0x1]
      %v1252 = vld [vmem:[%s900 + $0x28] sm:$0xf]
      %v1253 = vld [vmem:[%s900 + $0x2c] sm:$0x1]
      %v1254 = vld [vmem:[%s900 + $0x30] sm:$0xf]
      %v1255 = vld [vmem:[%s900 + $0x34] sm:$0x1]
      %v1256 = vld [vmem:[%s900 + $0x38] sm:$0xf]
      %v1257 = vld [vmem:[%s900 + $0x3c] sm:$0x1]
      %v1259 = vshrl.u32 %v1242, 16
      %v1261 = vrot.slane %v1259, 4
      %v1262 = vshll.u32 %v1242, 16
      %v1264 = vrot.slane %v1262, 5
      %v1265 = vor.u32 %v1261, %v1264
      %v1266 = vrot.slane %v1265, 4
      %v1268 = vshll.u32 %v1243, 16
      %v1270 = vrot.slane %v1268, 5
      %v1271 = vsel %vm633, %v1266, %v1270
      %v1273 = vshrl.u32 %v1244, 16
      %v1275 = vrot.slane %v1273, 4
      %v1276 = vshll.u32 %v1244, 16
      %v1278 = vrot.slane %v1276, 5
      %v1279 = vor.u32 %v1275, %v1278
      %v1280 = vrot.slane %v1279, 4
      %v1282 = vshll.u32 %v1245, 16
      %v1284 = vrot.slane %v1282, 5
      %v1285 = vsel %vm633, %v1280, %v1284
      %v1287 = vshrl.u32 %v1246, 16
      %v1289 = vrot.slane %v1287, 4
      %v1290 = vshll.u32 %v1246, 16
      %v1292 = vrot.slane %v1290, 5
      %v1293 = vor.u32 %v1289, %v1292
      %v1294 = vrot.slane %v1293, 4
      %v1296 = vshll.u32 %v1247, 16
      %v1298 = vrot.slane %v1296, 5
      %v1299 = vsel %vm633, %v1294, %v1298
      %v1301 = vshrl.u32 %v1248, 16
      %v1303 = vrot.slane %v1301, 4
      %v1304 = vshll.u32 %v1248, 16
      %v1306 = vrot.slane %v1304, 5
      %v1307 = vor.u32 %v1303, %v1306
      %v1308 = vrot.slane %v1307, 4
      %v1310 = vshll.u32 %v1249, 16
      %v1312 = vrot.slane %v1310, 5
      %v1313 = vsel %vm633, %v1308, %v1312
      %v1315 = vshrl.u32 %v1250, 16
      %v1317 = vrot.slane %v1315, 4
      %v1318 = vshll.u32 %v1250, 16
      %v1320 = vrot.slane %v1318, 5
      %v1321 = vor.u32 %v1317, %v1320
      %v1322 = vrot.slane %v1321, 4
      %v1324 = vshll.u32 %v1251, 16
      %v1326 = vrot.slane %v1324, 5
      %v1327 = vsel %vm633, %v1322, %v1326
      %v1329 = vshrl.u32 %v1252, 16
      %v1331 = vrot.slane %v1329, 4
      %v1332 = vshll.u32 %v1252, 16
      %v1334 = vrot.slane %v1332, 5
      %v1335 = vor.u32 %v1331, %v1334
      %v1336 = vrot.slane %v1335, 4
      %v1338 = vshll.u32 %v1253, 16
      %v1340 = vrot.slane %v1338, 5
      %v1341 = vsel %vm633, %v1336, %v1340
      %v1343 = vshrl.u32 %v1254, 16
      %v1345 = vrot.slane %v1343, 4
      %v1346 = vshll.u32 %v1254, 16
      %v1348 = vrot.slane %v1346, 5
      %v1349 = vor.u32 %v1345, %v1348
      %v1350 = vrot.slane %v1349, 4
      %v1352 = vshll.u32 %v1255, 16
      %v1354 = vrot.slane %v1352, 5
      %v1355 = vsel %vm633, %v1350, %v1354
      %v1357 = vshrl.u32 %v1256, 16
      %v1359 = vrot.slane %v1357, 4
      %v1360 = vshll.u32 %v1256, 16
      %v1362 = vrot.slane %v1360, 5
      %v1363 = vor.u32 %v1359, %v1362
      %v1364 = vrot.slane %v1363, 4
      %v1366 = vshll.u32 %v1257, 16
      %v1368 = vrot.slane %v1366, 5
      %v1369 = vsel %vm633, %v1364, %v1368
      %s1370 = scalar_lea.vmem %s1, 320
      %v1371 = vld [vmem:[%s1370] sm:$0xf]
      %v1372 = vld [vmem:[%s1370 + $0x4] sm:$0xf]
      %v1373 = vld [vmem:[%s1370 + $0x8] sm:$0xf]
      %v1374 = vld [vmem:[%s1370 + $0xc] sm:$0xf]
      %v1375 = vld [vmem:[%s1370 + $0x10] sm:$0xf]
      %v1376 = vld [vmem:[%s1370 + $0x14] sm:$0xf]
      %v1377 = vld [vmem:[%s1370 + $0x18] sm:$0xf]
      %v1378 = vld [vmem:[%s1370 + $0x1c] sm:$0xf]
      %v1379 = vld [vmem:[%s1370 + $0x20] sm:$0xf]
      %v1380 = vld [vmem:[%s1370 + $0x24] sm:$0xf]
      %v1381 = vld [vmem:[%s1370 + $0x28] sm:$0xf]
      %v1382 = vld [vmem:[%s1370 + $0x2c] sm:$0xf]
      %v1383 = vld [vmem:[%s1370 + $0x30] sm:$0xf]
      %v1384 = vld [vmem:[%s1370 + $0x34] sm:$0xf]
      %v1385 = vld [vmem:[%s1370 + $0x38] sm:$0xf]
      %v1386 = vld [vmem:[%s1370 + $0x3c] sm:$0xf]
      %v1387 = vunpack.c.l.b16 %v1271
      %v1388 = vunpack.c.l.b16 %v1285
      %v1389 = vunpack.c.l.b16 %v1299
      %v1390 = vunpack.c.l.b16 %v1313
      %v1391 = vunpack.c.l.b16 %v1327
      %v1392 = vunpack.c.l.b16 %v1341
      %v1393 = vunpack.c.l.b16 %v1355
      %v1394 = vunpack.c.l.b16 %v1369
      %v1395 = vpack.c.b16 %v1388, %v1387
      %v1396 = vpack.c.b16 %v1390, %v1389
      %v1397 = vpack.c.b16 %v1392, %v1391
      %v1398 = vpack.c.b16 %v1394, %v1393
      %v1419 = vunpack.c.l.b16 %v1371
      %v1420 = vunpack.c.l.b16 %v1372
      %v1421 = vunpack.c.l.b16 %v1373
      %v1422 = vunpack.c.l.b16 %v1374
      %v1423 = vunpack.c.l.b16 %v1375
      %v1424 = vunpack.c.l.b16 %v1376
      %v1425 = vunpack.c.l.b16 %v1377
      %v1426 = vunpack.c.l.b16 %v1378
      %v1427 = vunpack.c.l.b16 %v1379
      %v1428 = vunpack.c.l.b16 %v1380
      %v1429 = vunpack.c.l.b16 %v1381
      %v1430 = vunpack.c.l.b16 %v1382
      %v1431 = vunpack.c.l.b16 %v1383
      %v1432 = vunpack.c.l.b16 %v1384
      %v1433 = vunpack.c.l.b16 %v1385
      %v1434 = vunpack.c.l.b16 %v1386
      %v1435 = vpack.c.b16 %v1420, %v1419
      %v1436 = vpack.c.b16 %v1422, %v1421
      %v1437 = vpack.c.b16 %v1424, %v1423
      %v1438 = vpack.c.b16 %v1426, %v1425
      %v1439 = vpack.c.b16 %v1428, %v1427
      %v1440 = vpack.c.b16 %v1430, %v1429
      %v1441 = vpack.c.b16 %v1432, %v1431
      %v1442 = vpack.c.b16 %v1434, %v1433
      %1451 = vmatprep.subr.bf16.mxu0 0
      %1452 = vmatpush1.bf16.msra.mxu0 %v1435
      %1453 = vmatprep.subr.bf16.mxu0 0
      %1454 = vmatpush1.bf16.msra.mxu0 %v1436
      %1455 = vmatprep.subr.bf16.mxu0 0
      %1456 = vmatpush1.bf16.msra.mxu0 %v1437
      %1457 = vmatprep.subr.bf16.mxu0 0
      %1458 = vmatpush1.bf16.msra.mxu0 %v1438
      %1459 = vmatprep.subr.bf16.mxu0 0
      %1460 = vmatpush1.bf16.msra.mxu0 %v1439
      %1461 = vmatprep.subr.bf16.mxu0 0
      %1462 = vmatpush1.bf16.msra.mxu0 %v1440
      %1463 = vmatprep.subr.bf16.mxu0 0
      %1464 = vmatpush1.bf16.msra.mxu0 %v1441
      %1465 = vmatprep.subr.bf16.mxu0 0
      %1466 = vmatpush1.bf16.msra.mxu0 %v1442
      %1467 = vmatprep.subr.bf16.mxu0 0
      %1468 = vmatpush1.bf16.msra.mxu0 0
      %1469 = vmatprep.subr.bf16.mxu0 0
      %1470 = vmatpush1.bf16.msra.mxu0 0
      %1471 = vmatprep.subr.bf16.mxu0 0
      %1472 = vmatpush1.bf16.msra.mxu0 0
      %1473 = vmatprep.subr.bf16.mxu0 0
      %1474 = vmatpush1.bf16.msra.mxu0 0
      %1475 = vmatprep.subr.bf16.mxu0 0
      %1476 = vmatpush1.bf16.msra.mxu0 0
      %1477 = vmatprep.subr.bf16.mxu0 0
      %1478 = vmatpush1.bf16.msra.mxu0 0
      %1479 = vmatprep.subr.bf16.mxu0 0
      %1480 = vmatpush1.bf16.msra.mxu0 0
      %1481 = vmatprep.subr.bf16.mxu0 0
      %1482 = vmatpush1.bf16.msra.mxu0 0
      %1483 = vmatprep.mubr.bf16.mxu0 0
      %1484 = vmatmul.mubr.bf16.gmra.mrb[0].mxu0 %v1395
      %v1485 = vpop.f32.mrb[0].mxu0
      %v1486 = vadd.f32 0.0, %v1485
      %v1487 = vpop.f32.mrb[0].mxu0
      %v1488 = vpop.f32.mrb[0].mxu0
      %v1489 = vadd.f32 0.0, %v1488
      %v1490 = vpop.f32.mrb[0].mxu0
      %1491 = vmatprep.mubr.bf16.mxu0 0
      %1492 = vmatmul.mubr.bf16.gmra.mrb[0].mxu0 %v1396
      %v1493 = vpop.f32.mrb[0].mxu0
      %v1494 = vadd.f32 0.0, %v1493
      %v1495 = vpop.f32.mrb[0].mxu0
      %v1496 = vpop.f32.mrb[0].mxu0
      %v1497 = vadd.f32 0.0, %v1496
      %v1498 = vpop.f32.mrb[0].mxu0
      %1499 = vmatprep.mubr.bf16.mxu0 0
      %1500 = vmatmul.mubr.bf16.gmra.mrb[0].mxu0 %v1397
      %v1501 = vpop.f32.mrb[0].mxu0
      %v1502 = vadd.f32 0.0, %v1501
      %v1503 = vpop.f32.mrb[0].mxu0
      %v1504 = vpop.f32.mrb[0].mxu0
      %v1505 = vadd.f32 0.0, %v1504
      %v1506 = vpop.f32.mrb[0].mxu0
      %1507 = vmatprep.mubr.bf16.mxu0 0
      %1508 = vmatmul.mubr.bf16.gmra.mrb[0].mxu0 %v1398
      %v1509 = vpop.f32.mrb[0].mxu0
      %v1510 = vadd.f32 0.0, %v1509
      %v1511 = vpop.f32.mrb[0].mxu0
      %v1512 = vpop.f32.mrb[0].mxu0
      %v1513 = vadd.f32 0.0, %v1512
      %v1514 = vpop.f32.mrb[0].mxu0
      %1515 = vdwg.mxu0
      %v1516 = vadd.f32 %v1234, %v1486
      %v1517 = vadd.f32 %v1235, %v1489
      %v1518 = vadd.f32 %v1236, %v1494
      %v1519 = vadd.f32 %v1237, %v1497
      %v1520 = vadd.f32 %v1238, %v1502
      %v1521 = vadd.f32 %v1239, %v1505
      %v1522 = vadd.f32 %v1240, %v1510
      %v1523 = vadd.f32 %v1241, %v1513
      %s1524 = scalar_lea.vmem %s270, 8
      %v1525 = vld [vmem:[%s1524] sm:$0xf]
      %v1526 = vld [vmem:[%s1524 + $0x8] sm:$0xf]
      %v1527 = vld [vmem:[%s1524 + $0x10] sm:$0xf]
      %v1528 = vld [vmem:[%s1524 + $0x18] sm:$0xf]
      %v1529 = vld [vmem:[%s1524 + $0x20] sm:$0xf]
      %v1530 = vld [vmem:[%s1524 + $0x28] sm:$0xf]
      %v1531 = vld [vmem:[%s1524 + $0x30] sm:$0xf]
      %v1532 = vld [vmem:[%s1524 + $0x38] sm:$0xf]
      %s1533 = scalar_lea.vmem %s1, 384
      %v1534 = vld [vmem:[%s1533] sm:$0xf]
      %v1535 = vld [vmem:[%s1533 + $0x4] sm:$0xf]
      %v1536 = vld [vmem:[%s1533 + $0x8] sm:$0xf]
      %v1537 = vld [vmem:[%s1533 + $0xc] sm:$0xf]
      %v1538 = vld [vmem:[%s1533 + $0x10] sm:$0xf]
      %v1539 = vld [vmem:[%s1533 + $0x14] sm:$0xf]
      %v1540 = vld [vmem:[%s1533 + $0x18] sm:$0xf]
      %v1541 = vld [vmem:[%s1533 + $0x1c] sm:$0xf]
      %v1542 = vld [vmem:[%s1533 + $0x20] sm:$0xf]
      %v1543 = vld [vmem:[%s1533 + $0x24] sm:$0xf]
      %v1544 = vld [vmem:[%s1533 + $0x28] sm:$0xf]
      %v1545 = vld [vmem:[%s1533 + $0x2c] sm:$0xf]
      %v1546 = vld [vmem:[%s1533 + $0x30] sm:$0xf]
      %v1547 = vld [vmem:[%s1533 + $0x34] sm:$0xf]
      %v1548 = vld [vmem:[%s1533 + $0x38] sm:$0xf]
      %v1549 = vld [vmem:[%s1533 + $0x3c] sm:$0xf]
      %v1558 = vunpack.c.l.b16 %v1525
      %v1559 = vunpack.c.l.b16 %v1526
      %v1560 = vunpack.c.l.b16 %v1527
      %v1561 = vunpack.c.l.b16 %v1528
      %v1562 = vunpack.c.l.b16 %v1529
      %v1563 = vunpack.c.l.b16 %v1530
      %v1564 = vunpack.c.l.b16 %v1531
      %v1565 = vunpack.c.l.b16 %v1532
      %v1566 = vpack.c.b16 %v1559, %v1558
      %v1567 = vpack.c.b16 %v1561, %v1560
      %v1568 = vpack.c.b16 %v1563, %v1562
      %v1569 = vpack.c.b16 %v1565, %v1564
      %v1590 = vunpack.c.l.b16 %v1534
      %v1591 = vunpack.c.l.b16 %v1535
      %v1592 = vunpack.c.l.b16 %v1536
      %v1593 = vunpack.c.l.b16 %v1537
      %v1594 = vunpack.c.l.b16 %v1538
      %v1595 = vunpack.c.l.b16 %v1539
      %v1596 = vunpack.c.l.b16 %v1540
      %v1597 = vunpack.c.l.b16 %v1541
      %v1598 = vunpack.c.l.b16 %v1542
      %v1599 = vunpack.c.l.b16 %v1543
      %v1600 = vunpack.c.l.b16 %v1544
      %v1601 = vunpack.c.l.b16 %v1545
      %v1602 = vunpack.c.l.b16 %v1546
      %v1603 = vunpack.c.l.b16 %v1547
      %v1604 = vunpack.c.l.b16 %v1548
      %v1605 = vunpack.c.l.b16 %v1549
      %v1606 = vpack.c.b16 %v1591, %v1590
      %v1607 = vpack.c.b16 %v1593, %v1592
      %v1608 = vpack.c.b16 %v1595, %v1594
      %v1609 = vpack.c.b16 %v1597, %v1596
      %v1610 = vpack.c.b16 %v1599, %v1598
      %v1611 = vpack.c.b16 %v1601, %v1600
      %v1612 = vpack.c.b16 %v1603, %v1602
      %v1613 = vpack.c.b16 %v1605, %v1604
      %1622 = vmatprep.subr.bf16.mxu0 0
      %1623 = vmatpush1.bf16.msra.mxu0 %v1606
      %1624 = vmatprep.subr.bf16.mxu0 0
      %1625 = vmatpush1.bf16.msra.mxu0 %v1607
      %1626 = vmatprep.subr.bf16.mxu0 0
      %1627 = vmatpush1.bf16.msra.mxu0 %v1608
      %1628 = vmatprep.subr.bf16.mxu0 0
      %1629 = vmatpush1.bf16.msra.mxu0 %v1609
      %1630 = vmatprep.subr.bf16.mxu0 0
      %1631 = vmatpush1.bf16.msra.mxu0 %v1610
      %1632 = vmatprep.subr.bf16.mxu0 0
      %1633 = vmatpush1.bf16.msra.mxu0 %v1611
      %1634 = vmatprep.subr.bf16.mxu0 0
      %1635 = vmatpush1.bf16.msra.mxu0 %v1612
      %1636 = vmatprep.subr.bf16.mxu0 0
      %1637 = vmatpush1.bf16.msra.mxu0 %v1613
      %1638 = vmatprep.subr.bf16.mxu0 0
      %1639 = vmatpush1.bf16.msra.mxu0 0
      %1640 = vmatprep.subr.bf16.mxu0 0
      %1641 = vmatpush1.bf16.msra.mxu0 0
      %1642 = vmatprep.subr.bf16.mxu0 0
      %1643 = vmatpush1.bf16.msra.mxu0 0
      %1644 = vmatprep.subr.bf16.mxu0 0
      %1645 = vmatpush1.bf16.msra.mxu0 0
      %1646 = vmatprep.subr.bf16.mxu0 0
      %1647 = vmatpush1.bf16.msra.mxu0 0
      %1648 = vmatprep.subr.bf16.mxu0 0
      %1649 = vmatpush1.bf16.msra.mxu0 0
      %1650 = vmatprep.subr.bf16.mxu0 0
      %1651 = vmatpush1.bf16.msra.mxu0 0
      %1652 = vmatprep.subr.bf16.mxu0 0
      %1653 = vmatpush1.bf16.msra.mxu0 0
      %1654 = vmatprep.mubr.bf16.mxu0 0
      %1655 = vmatmul.mubr.bf16.gmra.mrb[0].mxu0 %v1566
      %v1656 = vpop.f32.mrb[0].mxu0
      %v1657 = vadd.f32 0.0, %v1656
      %v1658 = vpop.f32.mrb[0].mxu0
      %v1659 = vpop.f32.mrb[0].mxu0
      %v1660 = vadd.f32 0.0, %v1659
      %v1661 = vpop.f32.mrb[0].mxu0
      %1662 = vmatprep.mubr.bf16.mxu0 0
      %1663 = vmatmul.mubr.bf16.gmra.mrb[0].mxu0 %v1567
      %v1664 = vpop.f32.mrb[0].mxu0
      %v1665 = vadd.f32 0.0, %v1664
      %v1666 = vpop.f32.mrb[0].mxu0
      %v1667 = vpop.f32.mrb[0].mxu0
      %v1668 = vadd.f32 0.0, %v1667
      %v1669 = vpop.f32.mrb[0].mxu0
      %1670 = vmatprep.mubr.bf16.mxu0 0
      %1671 = vmatmul.mubr.bf16.gmra.mrb[0].mxu0 %v1568
      %v1672 = vpop.f32.mrb[0].mxu0
      %v1673 = vadd.f32 0.0, %v1672
      %v1674 = vpop.f32.mrb[0].mxu0
      %v1675 = vpop.f32.mrb[0].mxu0
      %v1676 = vadd.f32 0.0, %v1675
      %v1677 = vpop.f32.mrb[0].mxu0
      %1678 = vmatprep.mubr.bf16.mxu0 0
      %1679 = vmatmul.mubr.bf16.gmra.mrb[0].mxu0 %v1569
      %v1680 = vpop.f32.mrb[0].mxu0
      %v1681 = vadd.f32 0.0, %v1680
      %v1682 = vpop.f32.mrb[0].mxu0
      %v1683 = vpop.f32.mrb[0].mxu0
      %v1684 = vadd.f32 0.0, %v1683
      %v1685 = vpop.f32.mrb[0].mxu0
      %1686 = vdwg.mxu0
      %v1687 = vadd.f32 %v1516, %v1657
      %v1688 = vadd.f32 %v1517, %v1660
      %v1689 = vadd.f32 %v1518, %v1665
      %v1690 = vadd.f32 %v1519, %v1668
      %v1691 = vadd.f32 %v1520, %v1673
      %v1692 = vadd.f32 %v1521, %v1676
      %v1693 = vadd.f32 %v1522, %v1681
      %v1694 = vadd.f32 %v1523, %v1684
      %s1695 = scalar_lea.vmem %s270, 80
      %v1696 = vld [vmem:[%s1695] sm:$0xf]
      %v1697 = vld [vmem:[%s1695 + $0x8] sm:$0xf]
      %v1698 = vld [vmem:[%s1695 + $0x10] sm:$0xf]
      %v1699 = vld [vmem:[%s1695 + $0x18] sm:$0xf]
      %v1700 = vld [vmem:[%s1695 + $0x20] sm:$0xf]
      %v1701 = vld [vmem:[%s1695 + $0x28] sm:$0xf]
      %v1702 = vld [vmem:[%s1695 + $0x30] sm:$0xf]
      %v1703 = vld [vmem:[%s1695 + $0x38] sm:$0xf]
      %s1704 = scalar_lea.vmem %s1, 448
      %v1705 = vld [vmem:[%s1704] sm:$0xf]
      %v1706 = vld [vmem:[%s1704 + $0x4] sm:$0xf]
      %v1707 = vld [vmem:[%s1704 + $0x8] sm:$0xf]
      %v1708 = vld [vmem:[%s1704 + $0xc] sm:$0xf]
      %v1709 = vld [vmem:[%s1704 + $0x10] sm:$0xf]
      %v1710 = vld [vmem:[%s1704 + $0x14] sm:$0xf]
      %v1711 = vld [vmem:[%s1704 + $0x18] sm:$0xf]
      %v1712 = vld [vmem:[%s1704 + $0x1c] sm:$0xf]
      %v1713 = vld [vmem:[%s1704 + $0x20] sm:$0xf]
      %v1714 = vld [vmem:[%s1704 + $0x24] sm:$0xf]
      %v1715 = vld [vmem:[%s1704 + $0x28] sm:$0xf]
      %v1716 = vld [vmem:[%s1704 + $0x2c] sm:$0xf]
      %v1717 = vld [vmem:[%s1704 + $0x30] sm:$0xf]
      %v1718 = vld [vmem:[%s1704 + $0x34] sm:$0xf]
      %v1719 = vld [vmem:[%s1704 + $0x38] sm:$0xf]
      %v1720 = vld [vmem:[%s1704 + $0x3c] sm:$0xf]
      %v1729 = vunpack.c.l.b16 %v1696
      %v1730 = vunpack.c.l.b16 %v1697
      %v1731 = vunpack.c.l.b16 %v1698
      %v1732 = vunpack.c.l.b16 %v1699
      %v1733 = vunpack.c.l.b16 %v1700
      %v1734 = vunpack.c.l.b16 %v1701
      %v1735 = vunpack.c.l.b16 %v1702
      %v1736 = vunpack.c.l.b16 %v1703
      %v1737 = vpack.c.b16 %v1730, %v1729
      %v1738 = vpack.c.b16 %v1732, %v1731
      %v1739 = vpack.c.b16 %v1734, %v1733
      %v1740 = vpack.c.b16 %v1736, %v1735
      %v1761 = vunpack.c.l.b16 %v1705
      %v1762 = vunpack.c.l.b16 %v1706
      %v1763 = vunpack.c.l.b16 %v1707
      %v1764 = vunpack.c.l.b16 %v1708
      %v1765 = vunpack.c.l.b16 %v1709
      %v1766 = vunpack.c.l.b16 %v1710
      %v1767 = vunpack.c.l.b16 %v1711
      %v1768 = vunpack.c.l.b16 %v1712
      %v1769 = vunpack.c.l.b16 %v1713
      %v1770 = vunpack.c.l.b16 %v1714
      %v1771 = vunpack.c.l.b16 %v1715
      %v1772 = vunpack.c.l.b16 %v1716
      %v1773 = vunpack.c.l.b16 %v1717
      %v1774 = vunpack.c.l.b16 %v1718
      %v1775 = vunpack.c.l.b16 %v1719
      %v1776 = vunpack.c.l.b16 %v1720
      %v1777 = vpack.c.b16 %v1762, %v1761
      %v1778 = vpack.c.b16 %v1764, %v1763
      %v1779 = vpack.c.b16 %v1766, %v1765
      %v1780 = vpack.c.b16 %v1768, %v1767
      %v1781 = vpack.c.b16 %v1770, %v1769
      %v1782 = vpack.c.b16 %v1772, %v1771
      %v1783 = vpack.c.b16 %v1774, %v1773
      %v1784 = vpack.c.b16 %v1776, %v1775
      %1793 = vmatprep.subr.bf16.mxu0 0
      %1794 = vmatpush1.bf16.msra.mxu0 %v1777
      %1795 = vmatprep.subr.bf16.mxu0 0
      %1796 = vmatpush1.bf16.msra.mxu0 %v1778
      %1797 = vmatprep.subr.bf16.mxu0 0
      %1798 = vmatpush1.bf16.msra.mxu0 %v1779
      %1799 = vmatprep.subr.bf16.mxu0 0
      %1800 = vmatpush1.bf16.msra.mxu0 %v1780
      %1801 = vmatprep.subr.bf16.mxu0 0
      %1802 = vmatpush1.bf16.msra.mxu0 %v1781
      %1803 = vmatprep.subr.bf16.mxu0 0
      %1804 = vmatpush1.bf16.msra.mxu0 %v1782
      %1805 = vmatprep.subr.bf16.mxu0 0
      %1806 = vmatpush1.bf16.msra.mxu0 %v1783
      %1807 = vmatprep.subr.bf16.mxu0 0
      %1808 = vmatpush1.bf16.msra.mxu0 %v1784
      %1809 = vmatprep.subr.bf16.mxu0 0
      %1810 = vmatpush1.bf16.msra.mxu0 0
      %1811 = vmatprep.subr.bf16.mxu0 0
      %1812 = vmatpush1.bf16.msra.mxu0 0
      %1813 = vmatprep.subr.bf16.mxu0 0
      %1814 = vmatpush1.bf16.msra.mxu0 0
      %1815 = vmatprep.subr.bf16.mxu0 0
      %1816 = vmatpush1.bf16.msra.mxu0 0
      %1817 = vmatprep.subr.bf16.mxu0 0
      %1818 = vmatpush1.bf16.msra.mxu0 0
      %1819 = vmatprep.subr.bf16.mxu0 0
      %1820 = vmatpush1.bf16.msra.mxu0 0
      %1821 = vmatprep.subr.bf16.mxu0 0
      %1822 = vmatpush1.bf16.msra.mxu0 0
      %1823 = vmatprep.subr.bf16.mxu0 0
      %1824 = vmatpush1.bf16.msra.mxu0 0
      %1825 = vmatprep.mubr.bf16.mxu0 0
      %1826 = vmatmul.mubr.bf16.gmra.mrb[0].mxu0 %v1737
      %v1827 = vpop.f32.mrb[0].mxu0
      %v1828 = vadd.f32 0.0, %v1827
      %v1829 = vpop.f32.mrb[0].mxu0
      %v1830 = vpop.f32.mrb[0].mxu0
      %v1831 = vadd.f32 0.0, %v1830
      %v1832 = vpop.f32.mrb[0].mxu0
      %1833 = vmatprep.mubr.bf16.mxu0 0
      %1834 = vmatmul.mubr.bf16.gmra.mrb[0].mxu0 %v1738
      %v1835 = vpop.f32.mrb[0].mxu0
      %v1836 = vadd.f32 0.0, %v1835
      %v1837 = vpop.f32.mrb[0].mxu0
      %v1838 = vpop.f32.mrb[0].mxu0
      %v1839 = vadd.f32 0.0, %v1838
      %v1840 = vpop.f32.mrb[0].mxu0
      %1841 = vmatprep.mubr.bf16.mxu0 0
      %1842 = vmatmul.mubr.bf16.gmra.mrb[0].mxu0 %v1739
      %v1843 = vpop.f32.mrb[0].mxu0
      %v1844 = vadd.f32 0.0, %v1843
      %v1845 = vpop.f32.mrb[0].mxu0
      %v1846 = vpop.f32.mrb[0].mxu0
      %v1847 = vadd.f32 0.0, %v1846
      %v1848 = vpop.f32.mrb[0].mxu0
      %1849 = vmatprep.mubr.bf16.mxu0 0
      %1850 = vmatmul.mubr.bf16.gmra.mrb[0].mxu0 %v1740
      %v1851 = vpop.f32.mrb[0].mxu0
      %v1852 = vadd.f32 0.0, %v1851
      %v1853 = vpop.f32.mrb[0].mxu0
      %v1854 = vpop.f32.mrb[0].mxu0
      %v1855 = vadd.f32 0.0, %v1854
      %v1856 = vpop.f32.mrb[0].mxu0
      %1857 = vdwg.mxu0
      %v1858 = vadd.f32 %v1687, %v1828
      %v1859 = vadd.f32 %v1688, %v1831
      %v1860 = vadd.f32 %v1689, %v1836
      %v1861 = vadd.f32 %v1690, %v1839
      %v1862 = vadd.f32 %v1691, %v1844
      %v1863 = vadd.f32 %v1692, %v1847
      %v1864 = vadd.f32 %v1693, %v1852
      %v1865 = vadd.f32 %v1694, %v1855
      %v1866 = vld [vmem:[%s1524] sm:$0xf]
      %v1867 = vld [vmem:[%s1524 + $0x4] sm:$0x1]
      %v1868 = vld [vmem:[%s1524 + $0x8] sm:$0xf]
      %v1869 = vld [vmem:[%s1524 + $0xc] sm:$0x1]
      %v1870 = vld [vmem:[%s1524 + $0x10] sm:$0xf]
      %v1871 = vld [vmem:[%s1524 + $0x14] sm:$0x1]
      %v1872 = vld [vmem:[%s1524 + $0x18] sm:$0xf]
      %v1873 = vld [vmem:[%s1524 + $0x1c] sm:$0x1]
      %v1874 = vld [vmem:[%s1524 + $0x20] sm:$0xf]
      %v1875 = vld [vmem:[%s1524 + $0x24] sm:$0x1]
      %v1876 = vld [vmem:[%s1524 + $0x28] sm:$0xf]
      %v1877 = vld [vmem:[%s1524 + $0x2c] sm:$0x1]
      %v1878 = vld [vmem:[%s1524 + $0x30] sm:$0xf]
      %v1879 = vld [vmem:[%s1524 + $0x34] sm:$0x1]
      %v1880 = vld [vmem:[%s1524 + $0x38] sm:$0xf]
      %v1881 = vld [vmem:[%s1524 + $0x3c] sm:$0x1]
      %v1883 = vshrl.u32 %v1866, 16
      %v1885 = vrot.slane %v1883, 4
      %v1886 = vshll.u32 %v1866, 16
      %v1888 = vrot.slane %v1886, 5
      %v1889 = vor.u32 %v1885, %v1888
      %v1890 = vrot.slane %v1889, 4
      %v1892 = vshll.u32 %v1867, 16
      %v1894 = vrot.slane %v1892, 5
      %v1895 = vsel %vm633, %v1890, %v1894
      %v1897 = vshrl.u32 %v1868, 16
      %v1899 = vrot.slane %v1897, 4
      %v1900 = vshll.u32 %v1868, 16
      %v1902 = vrot.slane %v1900, 5
      %v1903 = vor.u32 %v1899, %v1902
      %v1904 = vrot.slane %v1903, 4
      %v1906 = vshll.u32 %v1869, 16
      %v1908 = vrot.slane %v1906, 5
      %v1909 = vsel %vm633, %v1904, %v1908
      %v1911 = vshrl.u32 %v1870, 16
      %v1913 = vrot.slane %v1911, 4
      %v1914 = vshll.u32 %v1870, 16
      %v1916 = vrot.slane %v1914, 5
      %v1917 = vor.u32 %v1913, %v1916
      %v1918 = vrot.slane %v1917, 4
      %v1920 = vshll.u32 %v1871, 16
      %v1922 = vrot.slane %v1920, 5
      %v1923 = vsel %vm633, %v1918, %v1922
      %v1925 = vshrl.u32 %v1872, 16
      %v1927 = vrot.slane %v1925, 4
      %v1928 = vshll.u32 %v1872, 16
      %v1930 = vrot.slane %v1928, 5
      %v1931 = vor.u32 %v1927, %v1930
      %v1932 = vrot.slane %v1931, 4
      %v1934 = vshll.u32 %v1873, 16
      %v1936 = vrot.slane %v1934, 5
      %v1937 = vsel %vm633, %v1932, %v1936
      %v1939 = vshrl.u32 %v1874, 16
      %v1941 = vrot.slane %v1939, 4
      %v1942 = vshll.u32 %v1874, 16
      %v1944 = vrot.slane %v1942, 5
      %v1945 = vor.u32 %v1941, %v1944
      %v1946 = vrot.slane %v1945, 4
      %v1948 = vshll.u32 %v1875, 16
      %v1950 = vrot.slane %v1948, 5
      %v1951 = vsel %vm633, %v1946, %v1950
      %v1953 = vshrl.u32 %v1876, 16
      %v1955 = vrot.slane %v1953, 4
      %v1956 = vshll.u32 %v1876, 16
      %v1958 = vrot.slane %v1956, 5
      %v1959 = vor.u32 %v1955, %v1958
      %v1960 = vrot.slane %v1959, 4
      %v1962 = vshll.u32 %v1877, 16
      %v1964 = vrot.slane %v1962, 5
      %v1965 = vsel %vm633, %v1960, %v1964
      %v1967 = vshrl.u32 %v1878, 16
      %v1969 = vrot.slane %v1967, 4
      %v1970 = vshll.u32 %v1878, 16
      %v1972 = vrot.slane %v1970, 5
      %v1973 = vor.u32 %v1969, %v1972
      %v1974 = vrot.slane %v1973, 4
      %v1976 = vshll.u32 %v1879, 16
      %v1978 = vrot.slane %v1976, 5
      %v1979 = vsel %vm633, %v1974, %v1978
      %v1981 = vshrl.u32 %v1880, 16
      %v1983 = vrot.slane %v1981, 4
      %v1984 = vshll.u32 %v1880, 16
      %v1986 = vrot.slane %v1984, 5
      %v1987 = vor.u32 %v1983, %v1986
      %v1988 = vrot.slane %v1987, 4
      %v1990 = vshll.u32 %v1881, 16
      %v1992 = vrot.slane %v1990, 5
      %v1993 = vsel %vm633, %v1988, %v1992
      %s1994 = scalar_lea.vmem %s1, 512
      %v1995 = vld [vmem:[%s1994] sm:$0xf]
      %v1996 = vld [vmem:[%s1994 + $0x4] sm:$0xf]
      %v1997 = vld [vmem:[%s1994 + $0x8] sm:$0xf]
      %v1998 = vld [vmem:[%s1994 + $0xc] sm:$0xf]
      %v1999 = vld [vmem:[%s1994 + $0x10] sm:$0xf]
      %v2000 = vld [vmem:[%s1994 + $0x14] sm:$0xf]
      %v2001 = vld [vmem:[%s1994 + $0x18] sm:$0xf]
      %v2002 = vld [vmem:[%s1994 + $0x1c] sm:$0xf]
      %v2003 = vld [vmem:[%s1994 + $0x20] sm:$0xf]
      %v2004 = vld [vmem:[%s1994 + $0x24] sm:$0xf]
      %v2005 = vld [vmem:[%s1994 + $0x28] sm:$0xf]
      %v2006 = vld [vmem:[%s1994 + $0x2c] sm:$0xf]
      %v2007 = vld [vmem:[%s1994 + $0x30] sm:$0xf]
      %v2008 = vld [vmem:[%s1994 + $0x34] sm:$0xf]
      %v2009 = vld [vmem:[%s1994 + $0x38] sm:$0xf]
      %v2010 = vld [vmem:[%s1994 + $0x3c] sm:$0xf]
      %v2011 = vunpack.c.l.b16 %v1895
      %v2012 = vunpack.c.l.b16 %v1909
      %v2013 = vunpack.c.l.b16 %v1923
      %v2014 = vunpack.c.l.b16 %v1937
      %v2015 = vunpack.c.l.b16 %v1951
      %v2016 = vunpack.c.l.b16 %v1965
      %v2017 = vunpack.c.l.b16 %v1979
      %v2018 = vunpack.c.l.b16 %v1993
      %v2019 = vpack.c.b16 %v2012, %v2011
      %v2020 = vpack.c.b16 %v2014, %v2013
      %v2021 = vpack.c.b16 %v2016, %v2015
      %v2022 = vpack.c.b16 %v2018, %v2017
      %v2043 = vunpack.c.l.b16 %v1995
      %v2044 = vunpack.c.l.b16 %v1996
      %v2045 = vunpack.c.l.b16 %v1997
      %v2046 = vunpack.c.l.b16 %v1998
      %v2047 = vunpack.c.l.b16 %v1999
      %v2048 = vunpack.c.l.b16 %v2000
      %v2049 = vunpack.c.l.b16 %v2001
      %v2050 = vunpack.c.l.b16 %v2002
      %v2051 = vunpack.c.l.b16 %v2003
      %v2052 = vunpack.c.l.b16 %v2004
      %v2053 = vunpack.c.l.b16 %v2005
      %v2054 = vunpack.c.l.b16 %v2006
      %v2055 = vunpack.c.l.b16 %v2007
      %v2056 = vunpack.c.l.b16 %v2008
      %v2057 = vunpack.c.l.b16 %v2009
      %v2058 = vunpack.c.l.b16 %v2010
      %v2059 = vpack.c.b16 %v2044, %v2043
      %v2060 = vpack.c.b16 %v2046, %v2045
      %v2061 = vpack.c.b16 %v2048, %v2047
      %v2062 = vpack.c.b16 %v2050, %v2049
      %v2063 = vpack.c.b16 %v2052, %v2051
      %v2064 = vpack.c.b16 %v2054, %v2053
      %v2065 = vpack.c.b16 %v2056, %v2055
      %v2066 = vpack.c.b16 %v2058, %v2057
      %2075 = vmatprep.subr.bf16.mxu0 0
      %2076 = vmatpush1.bf16.msra.mxu0 %v2059
      %2077 = vmatprep.subr.bf16.mxu0 0
      %2078 = vmatpush1.bf16.msra.mxu0 %v2060
      %2079 = vmatprep.subr.bf16.mxu0 0
      %2080 = vmatpush1.bf16.msra.mxu0 %v2061
      %2081 = vmatprep.subr.bf16.mxu0 0
      %2082 = vmatpush1.bf16.msra.mxu0 %v2062
      %2083 = vmatprep.subr.bf16.mxu0 0
      %2084 = vmatpush1.bf16.msra.mxu0 %v2063
      %2085 = vmatprep.subr.bf16.mxu0 0
      %2086 = vmatpush1.bf16.msra.mxu0 %v2064
      %2087 = vmatprep.subr.bf16.mxu0 0
      %2088 = vmatpush1.bf16.msra.mxu0 %v2065
      %2089 = vmatprep.subr.bf16.mxu0 0
      %2090 = vmatpush1.bf16.msra.mxu0 %v2066
      %2091 = vmatprep.subr.bf16.mxu0 0
      %2092 = vmatpush1.bf16.msra.mxu0 0
      %2093 = vmatprep.subr.bf16.mxu0 0
      %2094 = vmatpush1.bf16.msra.mxu0 0
      %2095 = vmatprep.subr.bf16.mxu0 0
      %2096 = vmatpush1.bf16.msra.mxu0 0
      %2097 = vmatprep.subr.bf16.mxu0 0
      %2098 = vmatpush1.bf16.msra.mxu0 0
      %2099 = vmatprep.subr.bf16.mxu0 0
      %2100 = vmatpush1.bf16.msra.mxu0 0
      %2101 = vmatprep.subr.bf16.mxu0 0
      %2102 = vmatpush1.bf16.msra.mxu0 0
      %2103 = vmatprep.subr.bf16.mxu0 0
      %2104 = vmatpush1.bf16.msra.mxu0 0
      %2105 = vmatprep.subr.bf16.mxu0 0
      %2106 = vmatpush1.bf16.msra.mxu0 0
      %2107 = vmatprep.mubr.bf16.mxu0 0
      %2108 = vmatmul.mubr.bf16.gmra.mrb[0].mxu0 %v2019
      %v2109 = vpop.f32.mrb[0].mxu0
      %v2110 = vadd.f32 0.0, %v2109
      %v2111 = vpop.f32.mrb[0].mxu0
      %v2112 = vpop.f32.mrb[0].mxu0
      %v2113 = vadd.f32 0.0, %v2112
      %v2114 = vpop.f32.mrb[0].mxu0
      %2115 = vmatprep.mubr.bf16.mxu0 0
      %2116 = vmatmul.mubr.bf16.gmra.mrb[0].mxu0 %v2020
      %v2117 = vpop.f32.mrb[0].mxu0
      %v2118 = vadd.f32 0.0, %v2117
      %v2119 = vpop.f32.mrb[0].mxu0
      %v2120 = vpop.f32.mrb[0].mxu0
      %v2121 = vadd.f32 0.0, %v2120
      %v2122 = vpop.f32.mrb[0].mxu0
      %2123 = vmatprep.mubr.bf16.mxu0 0
      %2124 = vmatmul.mubr.bf16.gmra.mrb[0].mxu0 %v2021
      %v2125 = vpop.f32.mrb[0].mxu0
      %v2126 = vadd.f32 0.0, %v2125
      %v2127 = vpop.f32.mrb[0].mxu0
      %v2128 = vpop.f32.mrb[0].mxu0
      %v2129 = vadd.f32 0.0, %v2128
      %v2130 = vpop.f32.mrb[0].mxu0
      %2131 = vmatprep.mubr.bf16.mxu0 0
      %2132 = vmatmul.mubr.bf16.gmra.mrb[0].mxu0 %v2022
      %v2133 = vpop.f32.mrb[0].mxu0
      %v2134 = vadd.f32 0.0, %v2133
      %v2135 = vpop.f32.mrb[0].mxu0
      %v2136 = vpop.f32.mrb[0].mxu0
      %v2137 = vadd.f32 0.0, %v2136
      %v2138 = vpop.f32.mrb[0].mxu0
      %2139 = vdwg.mxu0
      %v2140 = vadd.f32 %v1858, %v2110
      %v2141 = vadd.f32 %v1859, %v2113
      %v2142 = vadd.f32 %v1860, %v2118
      %v2143 = vadd.f32 %v1861, %v2121
      %v2144 = vadd.f32 %v1862, %v2126
      %v2145 = vadd.f32 %v1863, %v2129
      %v2146 = vadd.f32 %v1864, %v2134
      %v2147 = vadd.f32 %v1865, %v2137
      %v2148 = vpack.c.bf16 %v2141, %v2140
      %v2149 = vpack.c.bf16 %v2143, %v2142
      %v2150 = vpack.c.bf16 %v2145, %v2144
      %v2151 = vpack.c.bf16 %v2147, %v2146
      %v2156 = vunpack.c.l.b16 %v2148
      %v2157 = vunpack.c.h.b16 %v2148
      %v2158 = vunpack.c.l.b16 %v2149
      %v2159 = vunpack.c.h.b16 %v2149
      %v2160 = vunpack.c.l.b16 %v2150
      %v2161 = vunpack.c.h.b16 %v2150
      %v2162 = vunpack.c.l.b16 %v2151
      %v2163 = vunpack.c.h.b16 %v2151
      %v2164 = vpack.c.b16 %v2156, %v2156
      %v2165 = vpack.c.b16 %v2157, %v2157
      %v2166 = vpack.c.b16 %v2158, %v2158
      %v2167 = vpack.c.b16 %v2159, %v2159
      %v2168 = vpack.c.b16 %v2160, %v2160
      %v2169 = vpack.c.b16 %v2161, %v2161
      %v2170 = vpack.c.b16 %v2162, %v2162
      %v2171 = vpack.c.b16 %v2163, %v2163
      %2180 = vst [vmem:[%s276] sm:$0xf] %v2164
      %2181 = vst [vmem:[%s276 + $0x4] sm:$0xf] %v2165
      %2182 = vst [vmem:[%s276 + $0x8] sm:$0xf] %v2166
      %2183 = vst [vmem:[%s276 + $0xc] sm:$0xf] %v2167
      %2184 = vst [vmem:[%s276 + $0x10] sm:$0xf] %v2168
      %2185 = vst [vmem:[%s276 + $0x14] sm:$0xf] %v2169
      %2186 = vst [vmem:[%s276 + $0x18] sm:$0xf] %v2170
      %2187 = vst [vmem:[%s276 + $0x1c] sm:$0xf] %v2171
      %v2188 = vadd.f32 %v2140, %v2141
      %v2189 = vadd.f32 %v2188, %v2142
      %v2190 = vadd.f32 %v2189, %v2143
      %v2191 = vadd.f32 %v2190, %v2144
      %v2192 = vadd.f32 %v2191, %v2145
      %v2193 = vadd.f32 %v2192, %v2146
      %v2194 = vadd.f32 %v2193, %v2147
      %v2195 = vrot.slane %v2194, 4
      %v2196 = vadd.f32 %v2194, %v2195
      %v2197 = vrot.slane %v2196, 2
      %v2198 = vadd.f32 %v2196, %v2197
      %v2199 = vrot.slane %v2198, 1
      %v2200 = vadd.f32 %v2198, %v2199
      %v2201 = vmul.f32 %v2200, 0.015625
      %v2202 = vsub.f32 %v2140, %v2201
      %v2203 = vsub.f32 %v2141, %v2201
      %v2204 = vsub.f32 %v2142, %v2201
      %v2205 = vsub.f32 %v2143, %v2201
      %v2206 = vsub.f32 %v2144, %v2201
      %v2207 = vsub.f32 %v2145, %v2201
      %v2208 = vsub.f32 %v2146, %v2201
      %v2209 = vsub.f32 %v2147, %v2201
      %v2210 = vmul.f32 %v2202, %v2202
      %v2211 = vmul.f32 %v2203, %v2203
      %v2212 = vmul.f32 %v2204, %v2204
      %v2213 = vmul.f32 %v2205, %v2205
      %v2214 = vmul.f32 %v2206, %v2206
      %v2215 = vmul.f32 %v2207, %v2207
      %v2216 = vmul.f32 %v2208, %v2208
      %v2217 = vmul.f32 %v2209, %v2209
      %v2218 = vadd.f32 %v2210, %v2211
      %v2219 = vadd.f32 %v2218, %v2212
      %v2220 = vadd.f32 %v2219, %v2213
      %v2221 = vadd.f32 %v2220, %v2214
      %v2222 = vadd.f32 %v2221, %v2215
      %v2223 = vadd.f32 %v2222, %v2216
      %v2224 = vadd.f32 %v2223, %v2217
      %v2225 = vrot.slane %v2224, 4
      %v2226 = vadd.f32 %v2224, %v2225
      %v2227 = vrot.slane %v2226, 2
      %v2228 = vadd.f32 %v2226, %v2227
      %v2229 = vrot.slane %v2228, 1
      %v2230 = vadd.f32 %v2228, %v2229
      %v2231 = vlaneseq
      %v2232 = vshrl.u32 %v2231, 7
      %vm2233 = vcmp.eq.s32.totalorder %v2232, 0
      %vm2234 = vcmp.eq.s32.totalorder %v2232, 1
      %v2235 = vsel %vm2234, %v2230, 0.0
      %v2236 = vsel %vm2233, %v2200, %v2235
      %2237 = vst [vmem:[%s280] sm:$0xff] %v2236
      %v2238 = vld [vmem:[%s1071] sm:$0xf]
      %v2239 = vld [vmem:[%s1071 + $0x8] sm:$0xf]
      %v2240 = vld [vmem:[%s1071 + $0x10] sm:$0xf]
      %v2241 = vld [vmem:[%s1071 + $0x18] sm:$0xf]
      %v2242 = vld [vmem:[%s1071 + $0x20] sm:$0xf]
      %v2243 = vld [vmem:[%s1071 + $0x28] sm:$0xf]
      %v2244 = vld [vmem:[%s1071 + $0x30] sm:$0xf]
      %v2245 = vld [vmem:[%s1071 + $0x38] sm:$0xf]
      %v2246 = vld [vmem:[%s2] sm:$0xf]
      %v2247 = vld [vmem:[%s2 + $0x4] sm:$0xf]
      %v2248 = vld [vmem:[%s2 + $0x8] sm:$0xf]
      %v2249 = vld [vmem:[%s2 + $0xc] sm:$0xf]
      %v2250 = vld [vmem:[%s2 + $0x10] sm:$0xf]
      %v2251 = vld [vmem:[%s2 + $0x14] sm:$0xf]
      %v2252 = vld [vmem:[%s2 + $0x18] sm:$0xf]
      %v2253 = vld [vmem:[%s2 + $0x1c] sm:$0xf]
      %v2254 = vld [vmem:[%s2 + $0x20] sm:$0xf]
      %v2255 = vld [vmem:[%s2 + $0x24] sm:$0xf]
      %v2256 = vld [vmem:[%s2 + $0x28] sm:$0xf]
      %v2257 = vld [vmem:[%s2 + $0x2c] sm:$0xf]
      %v2258 = vld [vmem:[%s2 + $0x30] sm:$0xf]
      %v2259 = vld [vmem:[%s2 + $0x34] sm:$0xf]
      %v2260 = vld [vmem:[%s2 + $0x38] sm:$0xf]
      %v2261 = vld [vmem:[%s2 + $0x3c] sm:$0xf]
      %v2270 = vunpack.c.l.b16 %v2238
      %v2271 = vunpack.c.l.b16 %v2239
      %v2272 = vunpack.c.l.b16 %v2240
      %v2273 = vunpack.c.l.b16 %v2241
      %v2274 = vunpack.c.l.b16 %v2242
      %v2275 = vunpack.c.l.b16 %v2243
      %v2276 = vunpack.c.l.b16 %v2244
      %v2277 = vunpack.c.l.b16 %v2245
      %v2278 = vpack.c.b16 %v2271, %v2270
      %v2279 = vpack.c.b16 %v2273, %v2272
      %v2280 = vpack.c.b16 %v2275, %v2274
      %v2281 = vpack.c.b16 %v2277, %v2276
      %v2302 = vunpack.c.l.b16 %v2246
      %v2303 = vunpack.c.l.b16 %v2247
      %v2304 = vunpack.c.l.b16 %v2248
      %v2305 = vunpack.c.l.b16 %v2249
      %v2306 = vunpack.c.l.b16 %v2250
      %v2307 = vunpack.c.l.b16 %v2251
      %v2308 = vunpack.c.l.b16 %v2252
      %v2309 = vunpack.c.l.b16 %v2253
      %v2310 = vunpack.c.l.b16 %v2254
      %v2311 = vunpack.c.l.b16 %v2255
      %v2312 = vunpack.c.l.b16 %v2256
      %v2313 = vunpack.c.l.b16 %v2257
      %v2314 = vunpack.c.l.b16 %v2258
      %v2315 = vunpack.c.l.b16 %v2259
      %v2316 = vunpack.c.l.b16 %v2260
      %v2317 = vunpack.c.l.b16 %v2261
      %v2318 = vpack.c.b16 %v2303, %v2302
      %v2319 = vpack.c.b16 %v2305, %v2304
      %v2320 = vpack.c.b16 %v2307, %v2306
      %v2321 = vpack.c.b16 %v2309, %v2308
      %v2322 = vpack.c.b16 %v2311, %v2310
      %v2323 = vpack.c.b16 %v2313, %v2312
      %v2324 = vpack.c.b16 %v2315, %v2314
      %v2325 = vpack.c.b16 %v2317, %v2316
      %2334 = vmatprep.subr.bf16.mxu0 0
      %2335 = vmatpush1.bf16.msra.mxu0 %v2318
      %2336 = vmatprep.subr.bf16.mxu0 0
      %2337 = vmatpush1.bf16.msra.mxu0 %v2319
      %2338 = vmatprep.subr.bf16.mxu0 0
      %2339 = vmatpush1.bf16.msra.mxu0 %v2320
      %2340 = vmatprep.subr.bf16.mxu0 0
      %2341 = vmatpush1.bf16.msra.mxu0 %v2321
      %2342 = vmatprep.subr.bf16.mxu0 0
      %2343 = vmatpush1.bf16.msra.mxu0 %v2322
      %2344 = vmatprep.subr.bf16.mxu0 0
      %2345 = vmatpush1.bf16.msra.mxu0 %v2323
      %2346 = vmatprep.subr.bf16.mxu0 0
      %2347 = vmatpush1.bf16.msra.mxu0 %v2324
      %2348 = vmatprep.subr.bf16.mxu0 0
      %2349 = vmatpush1.bf16.msra.mxu0 %v2325
      %2350 = vmatprep.subr.bf16.mxu0 0
      %2351 = vmatpush1.bf16.msra.mxu0 0
      %2352 = vmatprep.subr.bf16.mxu0 0
      %2353 = vmatpush1.bf16.msra.mxu0 0
      %2354 = vmatprep.subr.bf16.mxu0 0
      %2355 = vmatpush1.bf16.msra.mxu0 0
      %2356 = vmatprep.subr.bf16.mxu0 0
      %2357 = vmatpush1.bf16.msra.mxu0 0
      %2358 = vmatprep.subr.bf16.mxu0 0
      %2359 = vmatpush1.bf16.msra.mxu0 0
      %2360 = vmatprep.subr.bf16.mxu0 0
      %2361 = vmatpush1.bf16.msra.mxu0 0
      %2362 = vmatprep.subr.bf16.mxu0 0
      %2363 = vmatpush1.bf16.msra.mxu0 0
      %2364 = vmatprep.subr.bf16.mxu0 0
      %2365 = vmatpush1.bf16.msra.mxu0 0
      %2366 = vmatprep.mubr.bf16.mxu0 0
      %2367 = vmatmul.mubr.bf16.gmra.mrb[0].mxu0 %v2278
      %v2368 = vpop.f32.mrb[0].mxu0
      %v2369 = vadd.f32 0.0, %v2368
      %v2370 = vpop.f32.mrb[0].mxu0
      %v2371 = vpop.f32.mrb[0].mxu0
      %v2372 = vadd.f32 0.0, %v2371
      %v2373 = vpop.f32.mrb[0].mxu0
      %2374 = vmatprep.mubr.bf16.mxu0 0
      %2375 = vmatmul.mubr.bf16.gmra.mrb[0].mxu0 %v2279
      %v2376 = vpop.f32.mrb[0].mxu0
      %v2377 = vadd.f32 0.0, %v2376
      %v2378 = vpop.f32.mrb[0].mxu0
      %v2379 = vpop.f32.mrb[0].mxu0
      %v2380 = vadd.f32 0.0, %v2379
      %v2381 = vpop.f32.mrb[0].mxu0
      %2382 = vmatprep.mubr.bf16.mxu0 0
      %2383 = vmatmul.mubr.bf16.gmra.mrb[0].mxu0 %v2280
      %v2384 = vpop.f32.mrb[0].mxu0
      %v2385 = vadd.f32 0.0, %v2384
      %v2386 = vpop.f32.mrb[0].mxu0
      %v2387 = vpop.f32.mrb[0].mxu0
      %v2388 = vadd.f32 0.0, %v2387
      %v2389 = vpop.f32.mrb[0].mxu0
      %2390 = vmatprep.mubr.bf16.mxu0 0
      %2391 = vmatmul.mubr.bf16.gmra.mrb[0].mxu0 %v2281
      %v2392 = vpop.f32.mrb[0].mxu0
      %v2393 = vadd.f32 0.0, %v2392
      %v2394 = vpop.f32.mrb[0].mxu0
      %v2395 = vpop.f32.mrb[0].mxu0
      %v2396 = vadd.f32 0.0, %v2395
      %v2397 = vpop.f32.mrb[0].mxu0
      %2398 = vdwg.mxu0
      %v2399 = vpack.c.bf16 %v2372, %v2369
      %v2400 = vpack.c.bf16 %v2380, %v2377
      %v2401 = vpack.c.bf16 %v2388, %v2385
      %v2402 = vpack.c.bf16 %v2396, %v2393
      %v2407 = vunpack.c.l.b16 %v2399
      %v2408 = vunpack.c.h.b16 %v2399
      %v2409 = vunpack.c.l.b16 %v2400
      %v2410 = vunpack.c.h.b16 %v2400
      %v2411 = vunpack.c.l.b16 %v2401
      %v2412 = vunpack.c.h.b16 %v2401
      %v2413 = vunpack.c.l.b16 %v2402
      %v2414 = vunpack.c.h.b16 %v2402
      %v2415 = vpack.c.b16 %v2407, %v2407
      %v2416 = vpack.c.b16 %v2408, %v2408
      %v2417 = vpack.c.b16 %v2409, %v2409
      %v2418 = vpack.c.b16 %v2410, %v2410
      %v2419 = vpack.c.b16 %v2411, %v2411
      %v2420 = vpack.c.b16 %v2412, %v2412
      %v2421 = vpack.c.b16 %v2413, %v2413
      %v2422 = vpack.c.b16 %v2414, %v2414
      %2431 = vst [vmem:[%s285] sm:$0xf] %v2415
      %2432 = vst [vmem:[%s285 + $0x4] sm:$0xf] %v2416
      %2433 = vst [vmem:[%s285 + $0x8] sm:$0xf] %v2417
      %2434 = vst [vmem:[%s285 + $0xc] sm:$0xf] %v2418
      %2435 = vst [vmem:[%s285 + $0x10] sm:$0xf] %v2419
      %2436 = vst [vmem:[%s285 + $0x14] sm:$0xf] %v2420
      %2437 = vst [vmem:[%s285 + $0x18] sm:$0xf] %v2421
      %2438 = vst [vmem:[%s285 + $0x1c] sm:$0xf] %v2422
      %v2439 = vadd.f32 %v2369, %v2372
      %v2440 = vadd.f32 %v2439, %v2377
      %v2441 = vadd.f32 %v2440, %v2380
      %v2442 = vadd.f32 %v2441, %v2385
      %v2443 = vadd.f32 %v2442, %v2388
      %v2444 = vadd.f32 %v2443, %v2393
      %v2445 = vadd.f32 %v2444, %v2396
      %v2446 = vrot.slane %v2445, 4
      %v2447 = vadd.f32 %v2445, %v2446
      %v2448 = vrot.slane %v2447, 2
      %v2449 = vadd.f32 %v2447, %v2448
      %v2450 = vrot.slane %v2449, 1
      %v2451 = vadd.f32 %v2449, %v2450
      %v2452 = vmul.f32 %v2451, 0.015625
      %v2453 = vsub.f32 %v2369, %v2452
      %v2454 = vsub.f32 %v2372, %v2452
      %v2455 = vsub.f32 %v2377, %v2452
      %v2456 = vsub.f32 %v2380, %v2452
      %v2457 = vsub.f32 %v2385, %v2452
      %v2458 = vsub.f32 %v2388, %v2452
      %v2459 = vsub.f32 %v2393, %v2452
      %v2460 = vsub.f32 %v2396, %v2452
      %v2461 = vmul.f32 %v2453, %v2453
      %v2462 = vmul.f32 %v2454, %v2454
      %v2463 = vmul.f32 %v2455, %v2455
      %v2464 = vmul.f32 %v2456, %v2456
      %v2465 = vmul.f32 %v2457, %v2457
      %v2466 = vmul.f32 %v2458, %v2458
      %v2467 = vmul.f32 %v2459, %v2459
      %v2468 = vmul.f32 %v2460, %v2460
      %v2469 = vadd.f32 %v2461, %v2462
      %v2470 = vadd.f32 %v2469, %v2463
      %v2471 = vadd.f32 %v2470, %v2464
      %v2472 = vadd.f32 %v2471, %v2465
      %v2473 = vadd.f32 %v2472, %v2466
      %v2474 = vadd.f32 %v2473, %v2467
      %v2475 = vadd.f32 %v2474, %v2468
      %v2476 = vrot.slane %v2475, 4
      %v2477 = vadd.f32 %v2475, %v2476
      %v2478 = vrot.slane %v2477, 2
      %v2479 = vadd.f32 %v2477, %v2478
      %v2480 = vrot.slane %v2479, 1
      %v2481 = vadd.f32 %v2479, %v2480
      %v2482 = vsel %vm2234, %v2481, 0.0
      %v2483 = vsel %vm2233, %v2451, %v2482
      %2484 = vst [vmem:[%s289] sm:$0xff] %v2483
      %p2485 = scmp.lt.s32.totalorder %s18, 1
      %s2486 = scalar_select %p2485, %s18, 1
      %s2487 = smul.addr %s2486, 8
      %s2488 = smul.addr %s2487, 4
      %s2489 = scalar_lea.vmem %s3, %s2488
      %p2490 = scmp.lt.s32.totalorder %s18, 1
      %s2491 = scalar_select %p2490, %s18, 1
      %s2492 = smul.addr %s2491, 8
      %s2493 = scalar_lea.vmem %s4, %s2492
      %p2494 = scmp.lt.s32.totalorder %s18, 1
      %s2495 = scalar_select %p2494, %s18, 1
      %s2496 = smul.addr %s2495, 8
      %s2497 = smul.addr %s2496, 4
      %s2498 = scalar_lea.vmem %s5, %s2497
      %p2499 = scmp.lt.s32.totalorder %s18, 1
      %s2500 = scalar_select %p2499, %s18, 1
      %s2501 = smul.addr %s2500, 8
      %s2502 = scalar_lea.vmem %s6, %s2501
      // Predicated region
      $region33: #{residual_block.4} parent=31 // pred_check
        %p2503 = pneg %p104
      $region34: #{residual_block.4} parent=31 // pred_check_branch
        %2505 = sbr.rel (%p2503) target = $region36
      $region35: #{residual_block.4} parent=31 // pred_region
        _
      $region36: #{residual_block.4} parent=31 // pred_fallthru
        _
      // Predicated region
      $region37: #{residual_block.4} parent=31 // pred_check
        %p2506 = pneg %p130
      $region38: #{residual_block.4} parent=31 // pred_check_branch
        %2508 = sbr.rel (%p2506) target = $region40
      $region39: #{residual_block.4} parent=31 // pred_region
        _
      $region40: #{residual_block.4} parent=31 // pred_fallthru
        _
      // Predicated region
      $region41: #{residual_block.4} parent=31 // pred_check
        %p2509 = pneg %p156
      $region42: #{residual_block.4} parent=31 // pred_check_branch
        %2511 = sbr.rel (%p2509) target = $region44
      $region43: #{residual_block.4} parent=31 // pred_region
        _
      $region44: #{residual_block.4} parent=31 // pred_fallthru
        _
      // Predicated region
      $region45: #{residual_block.4} parent=31 // pred_check
        %p2512 = pneg %p182
      $region46: #{residual_block.4} parent=31 // pred_check_branch
        %2514 = sbr.rel (%p2512) target = $region48
      $region47: #{residual_block.4} parent=31 // pred_region
        _
      $region48: #{residual_block.4} parent=31 // pred_fallthru
        _
    $region32: #{residual_block.4} parent=5 // pred_fallthru
      _
    %p2515 = scmp.le.s32.totalorder 2, %s13
    // Predicated region
    $region49: #{residual_block.4} parent=5 // pred_check
      %p2516 = pneg %p2515
    $region50: #{residual_block.4} parent=5 // pred_check_branch
      %2518 = sbr.rel (%p2516) target = $region52
    $region51: #{residual_block.4} parent=5 // pred_region
      %s2519 = ssub.s32 %s13, 2
      // Predicated region
      $region53: #{residual_block.4} parent=51 // pred_check
        %p2520 = pneg %p110
      $region54: #{residual_block.4} parent=51 // pred_check_branch
        %2522 = sbr.rel (%p2520) target = $region56
      $region55: #{residual_block.4} parent=51 // pred_region
        %p2523 = scmp.lt.s32.totalorder %s19, 1
        %s2524 = scalar_select %p2523, %s19, 1
        %s2525 = smul.addr %s2524, 8
        %s2526 = smul.addr %s2525, 4
        %s2527 = scalar_lea.vmem %s3, %s2526
      $region56: #{residual_block.4} parent=51 // pred_fallthru
        _
      // Predicated region
      $region57: #{residual_block.4} parent=51 // pred_check
        %p2528 = pneg %p136
      $region58: #{residual_block.4} parent=51 // pred_check_branch
        %2530 = sbr.rel (%p2528) target = $region60
      $region59: #{residual_block.4} parent=51 // pred_region
        %p2531 = scmp.lt.s32.totalorder %s19, 1
        %s2532 = scalar_select %p2531, %s19, 1
        %s2533 = smul.addr %s2532, 8
        %s2534 = scalar_lea.vmem %s4, %s2533
      $region60: #{residual_block.4} parent=51 // pred_fallthru
        _
      // Predicated region
      $region61: #{residual_block.4} parent=51 // pred_check
        %p2535 = pneg %p162
      $region62: #{residual_block.4} parent=51 // pred_check_branch
        %2537 = sbr.rel (%p2535) target = $region64
      $region63: #{residual_block.4} parent=51 // pred_region
        %p2538 = scmp.lt.s32.totalorder %s19, 1
        %s2539 = scalar_select %p2538, %s19, 1
        %s2540 = smul.addr %s2539, 8
        %s2541 = smul.addr %s2540, 4
        %s2542 = scalar_lea.vmem %s5, %s2541
      $region64: #{residual_block.4} parent=51 // pred_fallthru
        _
      // Predicated region
      $region65: #{residual_block.4} parent=51 // pred_check
        %p2543 = pneg %p188
      $region66: #{residual_block.4} parent=51 // pred_check_branch
        %2545 = sbr.rel (%p2543) target = $region68
      $region67: #{residual_block.4} parent=51 // pred_region
        %p2546 = scmp.lt.s32.totalorder %s19, 1
        %s2547 = scalar_select %p2546, %s19, 1
        %s2548 = smul.addr %s2547, 8
        %s2549 = scalar_lea.vmem %s6, %s2548
      $region68: #{residual_block.4} parent=51 // pred_fallthru
        _
    $region52: #{residual_block.4} parent=5 // pred_fallthru
      _
  $region6: #{residual_block.4} parent=0 // loop_footer
    %s17 = sadd.s32 1, %s13
  $region7: #{residual_block.4} parent=0 // loop_footer_branch
    %12 = sbr.rel target = $region3
  $region8: #{residual_block.4} parent=0 // loop_exit
    _

// kernel: residual_block.6
$region0: #{residual_block.6}
  #allocation0 [shape = 'u32[]', space=smem, size = 0x4, offset = 0x4, fixed_abs, tag = 'smem constant byte address 0x4 - core index']
  #allocation1 [shape = 'u32[144,128]{1,0:T(1,128)}', space=vmem, size = 0x12000, scoped, tag = 'internal scratch']
  %s0 = inlined_call_operand.vmem [shape: bf16[2,10,10,128], index: 0, kind: input, shape index: {}]
  %s1 = inlined_call_operand.vmem [shape: bf16[9,128,128], index: 1, kind: input, shape index: {}]
  %s2 = inlined_call_operand.vmem [shape: bf16[2,64,128], index: 2, kind: output, shape index: {0}]
  %s3 = inlined_call_operand.vmem [shape: f32[2,8,128], index: 3, kind: output, shape index: {1}]
  %4 = xla_tuple %s2, %s3
  %s5 = sld [smem:[#allocation0]]
  $region49: #{residual_block.6} parent=0
    _
  %s7 = ssub.s32 1, %s5
  %s8 = scalar_select 0, %s7, %s5
  loop: start=0, step=1, limit=4
  $region2: #{residual_block.6} parent=0 // loop_pre_header
    _
  $region3: #{residual_block.6} parent=0 // loop_header
    %s10 = sphi 0, %s14
    %p11 = scmp.ge.s32.totalorder %s10, 4
    %s20 = sphi 0, %s22
    %s23 = sphi 0, %s20
    %s24 = sphi 0, %s23
    %s40 = sphi 0, %s24
    %s44 = sphi 0, %s44
    %s46 = sphi 0, %s44
    %s47 = sphi 0, %s46
    %s61 = sphi 0, %s47
    %s67 = sphi 0, %s69
    %s70 = sphi 0, %s67
    %s71 = sphi 0, %s70
    %s87 = sphi 0, %s71
    %s93 = sphi 0, %s95
    %s96 = sphi 0, %s93
    %s97 = sphi 0, %s96
    %s113 = sphi 0, %s97
  $region4: #{residual_block.6} parent=0 // loop_header_branch
    %13 = sbr.rel (%p11) target = $region8
  $region5: #{residual_block.6} parent=0 // loop_body
    %s15 = ssub.s32 %s10, 1
    %s16 = ssub.s32 %s10, 2
    %s17 = sadd.s32 %s10, 1
    %s18 = ssub.s32 %s10, %s17
    %p19 = scmp.eq.s32.totalorder %s18, 0
    %s21 = sadd.s32 %s20, 1
    %s22 = scalar_select %p19, %s20, %s21
    %p25 = pneg %p19
    %p26 = scmp.eq.s32.totalorder %s10, 1
    %p27 = por %p25, %p26
    %p28 = scmp.ne.s32.totalorder %s20, %s23
    %p29 = scmp.eq.s32.totalorder %s10, 0
    %p30 = por %p28, %p29
    %p31 = scmp.ne.s32.totalorder %s20, %s23
    %p32 = scmp.eq.s32.totalorder %s15, 1
    %p33 = por %p31, %p32
    %p34 = scmp.ne.s32.totalorder %s23, %s24
    %p35 = scmp.eq.s32.totalorder %s15, 0
    %p36 = por %p34, %p35
    %p37 = scmp.ne.s32.totalorder %s23, %s24
    %p38 = scmp.eq.s32.totalorder %s16, 1
    %p39 = por %p37, %p38
    %p41 = scmp.ne.s32.totalorder %s24, %s40
    %p42 = scmp.eq.s32.totalorder %s16, 0
    %p43 = por %p41, %p42
    %s45 = sadd.s32 %s44, 1
    %p48 = scmp.eq.s32.totalorder %s10, 1
    %p49 = scmp.ne.s32.totalorder %s44, %s46
    %p50 = scmp.eq.s32.totalorder %s10, 0
    %p51 = por %p49, %p50
    %p52 = scmp.ne.s32.totalorder %s44, %s46
    %p53 = scmp.eq.s32.totalorder %s15, 1
    %p54 = por %p52, %p53
    %p55 = scmp.ne.s32.totalorder %s46, %s47
    %p56 = scmp.eq.s32.totalorder %s15, 0
    %p57 = por %p55, %p56
    %p58 = scmp.ne.s32.totalorder %s46, %s47
    %p59 = scmp.eq.s32.totalorder %s16, 1
    %p60 = por %p58, %p59
    %p62 = scmp.ne.s32.totalorder %s47, %s61
    %p63 = scmp.eq.s32.totalorder %s16, 0
    %p64 = por %p62, %p63
    %s65 = ssub.s32 %s10, %s17
    %p66 = scmp.eq.s32.totalorder %s65, 0
    %s68 = sadd.s32 %s67, 1
    %s69 = scalar_select %p66, %s67, %s68
    %p72 = pneg %p66
    %p73 = scmp.eq.s32.totalorder %s10, 1
    %p74 = por %p72, %p73
    %p75 = scmp.ne.s32.totalorder %s67, %s70
    %p76 = scmp.eq.s32.totalorder %s10, 0
    %p77 = por %p75, %p76
    %p78 = scmp.ne.s32.totalorder %s67, %s70
    %p79 = scmp.eq.s32.totalorder %s15, 1
    %p80 = por %p78, %p79
    %p81 = scmp.ne.s32.totalorder %s70, %s71
    %p82 = scmp.eq.s32.totalorder %s15, 0
    %p83 = por %p81, %p82
    %p84 = scmp.ne.s32.totalorder %s70, %s71
    %p85 = scmp.eq.s32.totalorder %s16, 1
    %p86 = por %p84, %p85
    %p88 = scmp.ne.s32.totalorder %s71, %s87
    %p89 = scmp.eq.s32.totalorder %s16, 0
    %p90 = por %p88, %p89
    %s91 = ssub.s32 %s10, %s17
    %p92 = scmp.eq.s32.totalorder %s91, 0
    %s94 = sadd.s32 %s93, 1
    %s95 = scalar_select %p92, %s93, %s94
    %p98 = pneg %p92
    %p99 = scmp.eq.s32.totalorder %s10, 1
    %p100 = por %p98, %p99
    %p101 = scmp.ne.s32.totalorder %s93, %s96
    %p102 = scmp.eq.s32.totalorder %s10, 0
    %p103 = por %p101, %p102
    %p104 = scmp.ne.s32.totalorder %s93, %s96
    %p105 = scmp.eq.s32.totalorder %s15, 1
    %p106 = por %p104, %p105
    %p107 = scmp.ne.s32.totalorder %s96, %s97
    %p108 = scmp.eq.s32.totalorder %s15, 0
    %p109 = por %p107, %p108
    %p110 = scmp.ne.s32.totalorder %s96, %s97
    %p111 = scmp.eq.s32.totalorder %s16, 1
    %p112 = por %p110, %p111
    %p114 = scmp.ne.s32.totalorder %s97, %s113
    %p115 = scmp.eq.s32.totalorder %s16, 0
    %p116 = por %p114, %p115
    %p117 = scmp.le.s32.totalorder 1, %s10
    %p118 = scmp.lt.s32.totalorder %s10, 3
    %p119 = pnand %p117, %p118
    %p120 = pneg %p119
    // Predicated region
    $region9: #{residual_block.6} parent=5 // pred_check
      _
    $region10: #{residual_block.6} parent=5 // pred_check_branch
      %122 = sbr.rel (%p119) target = $region12
    $region11: #{residual_block.6} parent=5 // pred_region
      %s123 = ssub.s32 %s10, 1
      // Predicated region
      $region13: #{residual_block.6} parent=11 // pred_check
        %p124 = pneg %p57
      $region14: #{residual_block.6} parent=11 // pred_check_branch
        %126 = sbr.rel (%p124) target = $region16
      $region15: #{residual_block.6} parent=11 // pred_region
        _
      $region16: #{residual_block.6} parent=11 // pred_fallthru
        _
    $region12: #{residual_block.6} parent=5 // pred_fallthru
      _
    %p127 = scmp.lt.s32.totalorder %s10, 2
    // Predicated region
    $region17: #{residual_block.6} parent=5 // pred_check
      %p128 = pneg %p127
    $region18: #{residual_block.6} parent=5 // pred_check_branch
      %130 = sbr.rel (%p128) target = $region20
    $region19: #{residual_block.6} parent=5 // pred_region
      // Predicated region
      $region21: #{residual_block.6} parent=19 // pred_check
        %p131 = pneg %p30
      $region22: #{residual_block.6} parent=19 // pred_check_branch
        %133 = sbr.rel (%p131) target = $region24
      $region23: #{residual_block.6} parent=19 // pred_region
        %p134 = scmp.lt.s32.totalorder %s10, 1
        %s135 = scalar_select %p134, %s10, 1
        %s136 = smul.addr %s135, 20
        %s137 = smul.addr %s136, 4
        %s138 = scalar_lea.vmem %s0, %s137
      $region24: #{residual_block.6} parent=19 // pred_fallthru
        _
    $region20: #{residual_block.6} parent=5 // pred_fallthru
      _
    %p139 = scmp.le.s32.totalorder 1, %s10
    %p140 = scmp.lt.s32.totalorder %s10, 3
    %p141 = pnand %p139, %p140
    %p142 = pneg %p141
    // Predicated region
    $region25: #{residual_block.6} parent=5 // pred_check
      _
    $region26: #{residual_block.6} parent=5 // pred_check_branch
      %144 = sbr.rel (%p141) target = $region28
    $region27: #{residual_block.6} parent=5 // pred_region
      %s145 = ssub.s32 %s10, 1
      %p146 = scmp.lt.s32.totalorder %s15, 1
      %s147 = scalar_select %p146, %s15, 1
      %s148 = smul.addr %s147, 20
      %s149 = smul.addr %s148, 4
      %s150 = scalar_lea.vmem %s0, %s149
      %p151 = pneg %p36
      %p152 = pneg %p33
      %p153 = pneg %p57
      %p154 = pneg %p54
      %p155 = pneg %p83
      %p156 = pneg %p80
      %p157 = scmp.lt.s32.totalorder %s15, 1
      %s158 = scalar_select %p157, %s15, 1
      %s159 = smul.addr %s158, 8
      %s160 = smul.addr %s159, 4
      %s161 = scalar_lea.vmem %s2, %s160
      %p162 = pneg %p109
      %p163 = pneg %p106
      %p164 = scmp.lt.s32.totalorder %s15, 1
      %s165 = scalar_select %p164, %s15, 1
      %s166 = smul.addr %s165, 8
      %s167 = scalar_lea.vmem %s3, %s166
      %p168 = scmp.lt.s32.totalorder %s15, 1
      %s169 = scalar_select %p168, %s15, 1
      %s170 = smul.addr %s169, 20
      %s171 = smul.addr %s170, 4
      %s172 = scalar_lea.vmem %s0, %s171
      %p173 = scmp.lt.s32.totalorder %s15, 1
      %s174 = scalar_select %p173, %s15, 1
      %s175 = smul.addr %s174, 8
      %s176 = smul.addr %s175, 4
      %s177 = scalar_lea.vmem %s2, %s176
      %p178 = scmp.lt.s32.totalorder %s15, 1
      %s179 = scalar_select %p178, %s15, 1
      %s180 = smul.addr %s179, 8
      %s181 = scalar_lea.vmem %s3, %s180
      %v183 = vld [vmem:[%s172] sm:$0xf]
      %v184 = vld [vmem:[%s172 + $0x8] sm:$0xf]
      %v185 = vld [vmem:[%s172 + $0x10] sm:$0xf]
      %v186 = vld [vmem:[%s172 + $0x18] sm:$0xf]
      %v187 = vld [vmem:[%s172 + $0x20] sm:$0xf]
      %v188 = vld [vmem:[%s172 + $0x28] sm:$0xf]
      %v189 = vld [vmem:[%s172 + $0x30] sm:$0xf]
      %v190 = vld [vmem:[%s172 + $0x38] sm:$0xf]
      %v191 = vld [vmem:[%s1] sm:$0xf]
      %v192 = vld [vmem:[%s1 + $0x4] sm:$0xf]
      %v193 = vld [vmem:[%s1 + $0x8] sm:$0xf]
      %v194 = vld [vmem:[%s1 + $0xc] sm:$0xf]
      %v195 = vld [vmem:[%s1 + $0x10] sm:$0xf]
      %v196 = vld [vmem:[%s1 + $0x14] sm:$0xf]
      %v197 = vld [vmem:[%s1 + $0x18] sm:$0xf]
      %v198 = vld [vmem:[%s1 + $0x1c] sm:$0xf]
      %v199 = vld [vmem:[%s1 + $0x20] sm:$0xf]
      %v200 = vld [vmem:[%s1 + $0x24] sm:$0xf]
      %v201 = vld [vmem:[%s1 + $0x28] sm:$0xf]
      %v202 = vld [vmem:[%s1 + $0x2c] sm:$0xf]
      %v203 = vld [vmem:[%s1 + $0x30] sm:$0xf]
      %v204 = vld [vmem:[%s1 + $0x34] sm:$0xf]
      %v205 = vld [vmem:[%s1 + $0x38] sm:$0xf]
      %v206 = vld [vmem:[%s1 + $0x3c] sm:$0xf]
      %v207 = vld [vmem:[%s172 + $0x4] sm:$0x1]
      %v208 = vld [vmem:[%s172 + $0xc] sm:$0x1]
      %v209 = vld [vmem:[%s172 + $0x14] sm:$0x1]
      %v210 = vld [vmem:[%s172 + $0x1c] sm:$0x1]
      %v211 = vld [vmem:[%s172 + $0x24] sm:$0x1]
      %v212 = vld [vmem:[%s172 + $0x2c] sm:$0x1]
      %v213 = vld [vmem:[%s172 + $0x34] sm:$0x1]
      %v214 = vld [vmem:[%s172 + $0x3c] sm:$0x1]
      %vm215 = vsmask.f32 3328
      %vm216 = vsmask.f32 7440
      %vm217 = vmor %vm215, %vm216
      %v219 = vshrl.u32 %v183, 16
      %v221 = vrot.slane %v219, 4
      %v222 = vshll.u32 %v183, 16
      %v224 = vrot.slane %v222, 5
      %v225 = vor.u32 %v221, %v224
      %v226 = vrot.slane %v225, 4
      %v228 = vshll.u32 %v207, 16
      %v230 = vrot.slane %v228, 5
      %v231 = vsel %vm217, %v226, %v230
      %v233 = vshrl.u32 %v184, 16
      %v235 = vrot.slane %v233, 4
      %v236 = vshll.u32 %v184, 16
      %v238 = vrot.slane %v236, 5
      %v239 = vor.u32 %v235, %v238
      %v240 = vrot.slane %v239, 4
      %v242 = vshll.u32 %v208, 16
      %v244 = vrot.slane %v242, 5
      %v245 = vsel %vm217, %v240, %v244
      %v247 = vshrl.u32 %v185, 16
      %v249 = vrot.slane %v247, 4
      %v250 = vshll.u32 %v185, 16
      %v252 = vrot.slane %v250, 5
      %v253 = vor.u32 %v249, %v252
      %v254 = vrot.slane %v253, 4
      %v256 = vshll.u32 %v209, 16
      %v258 = vrot.slane %v256, 5
      %v259 = vsel %vm217, %v254, %v258
      %v261 = vshrl.u32 %v186, 16
      %v263 = vrot.slane %v261, 4
      %v264 = vshll.u32 %v186, 16
      %v266 = vrot.slane %v264, 5
      %v267 = vor.u32 %v263, %v266
      %v268 = vrot.slane %v267, 4
      %v270 = vshll.u32 %v210, 16
      %v272 = vrot.slane %v270, 5
      %v273 = vsel %vm217, %v268, %v272
      %v275 = vshrl.u32 %v187, 16
      %v277 = vrot.slane %v275, 4
      %v278 = vshll.u32 %v187, 16
      %v280 = vrot.slane %v278, 5
      %v281 = vor.u32 %v277, %v280
      %v282 = vrot.slane %v281, 4
      %v284 = vshll.u32 %v211, 16
      %v286 = vrot.slane %v284, 5
      %v287 = vsel %vm217, %v282, %v286
      %v289 = vshrl.u32 %v188, 16
      %v291 = vrot.slane %v289, 4
      %v292 = vshll.u32 %v188, 16
      %v294 = vrot.slane %v292, 5
      %v295 = vor.u32 %v291, %v294
      %v296 = vrot.slane %v295, 4
      %v298 = vshll.u32 %v212, 16
      %v300 = vrot.slane %v298, 5
      %v301 = vsel %vm217, %v296, %v300
      %v303 = vshrl.u32 %v189, 16
      %v305 = vrot.slane %v303, 4
      %v306 = vshll.u32 %v189, 16
      %v308 = vrot.slane %v306, 5
      %v309 = vor.u32 %v305, %v308
      %v310 = vrot.slane %v309, 4
      %v312 = vshll.u32 %v213, 16
      %v314 = vrot.slane %v312, 5
      %v315 = vsel %vm217, %v310, %v314
      %v317 = vshrl.u32 %v190, 16
      %v319 = vrot.slane %v317, 4
      %v320 = vshll.u32 %v190, 16
      %v322 = vrot.slane %v320, 5
      %v323 = vor.u32 %v319, %v322
      %v324 = vrot.slane %v323, 4
      %v326 = vshll.u32 %v214, 16
      %v328 = vrot.slane %v326, 5
      %v329 = vsel %vm217, %v324, %v328
      %s330 = scalar_lea.vmem %s1, 64
      %v331 = vld [vmem:[%s330] sm:$0xf]
      %v332 = vld [vmem:[%s330 + $0x4] sm:$0xf]
      %v333 = vld [vmem:[%s330 + $0x8] sm:$0xf]
      %v334 = vld [vmem:[%s330 + $0xc] sm:$0xf]
      %v335 = vld [vmem:[%s330 + $0x10] sm:$0xf]
      %v336 = vld [vmem:[%s330 + $0x14] sm:$0xf]
      %v337 = vld [vmem:[%s330 + $0x18] sm:$0xf]
      %v338 = vld [vmem:[%s330 + $0x1c] sm:$0xf]
      %v339 = vld [vmem:[%s330 + $0x20] sm:$0xf]
      %v340 = vld [vmem:[%s330 + $0x24] sm:$0xf]
      %v341 = vld [vmem:[%s330 + $0x28] sm:$0xf]
      %v342 = vld [vmem:[%s330 + $0x2c] sm:$0xf]
      %v343 = vld [vmem:[%s330 + $0x30] sm:$0xf]
      %v344 = vld [vmem:[%s330 + $0x34] sm:$0xf]
      %v345 = vld [vmem:[%s330 + $0x38] sm:$0xf]
      %v346 = vld [vmem:[%s330 + $0x3c] sm:$0xf]
      %v347 = vunpack.c.l.b16 %v231
      %v348 = vunpack.c.l.b16 %v245
      %v349 = vunpack.c.l.b16 %v259
      %v350 = vunpack.c.l.b16 %v273
      %v351 = vunpack.c.l.b16 %v287
      %v352 = vunpack.c.l.b16 %v301
      %v353 = vunpack.c.l.b16 %v315
      %v354 = vunpack.c.l.b16 %v329
      %v355 = vpack.c.b16 %v348, %v347
      %v356 = vpack.c.b16 %v350, %v349
      %v357 = vpack.c.b16 %v352, %v351
      %v358 = vpack.c.b16 %v354, %v353
      %v379 = vunpack.c.l.b16 %v331
      %v380 = vunpack.c.l.b16 %v332
      %v381 = vunpack.c.l.b16 %v333
      %v382 = vunpack.c.l.b16 %v334
      %v383 = vunpack.c.l.b16 %v335
      %v384 = vunpack.c.l.b16 %v336
      %v385 = vunpack.c.l.b16 %v337
      %v386 = vunpack.c.l.b16 %v338
      %v387 = vunpack.c.l.b16 %v339
      %v388 = vunpack.c.l.b16 %v340
      %v389 = vunpack.c.l.b16 %v341
      %v390 = vunpack.c.l.b16 %v342
      %v391 = vunpack.c.l.b16 %v343
      %v392 = vunpack.c.l.b16 %v344
      %v393 = vunpack.c.l.b16 %v345
      %v394 = vunpack.c.l.b16 %v346
      %v395 = vpack.c.b16 %v380, %v379
      %v396 = vpack.c.b16 %v382, %v381
      %v397 = vpack.c.b16 %v384, %v383
      %v398 = vpack.c.b16 %v386, %v385
      %v399 = vpack.c.b16 %v388, %v387
      %v400 = vpack.c.b16 %v390, %v389
      %v401 = vpack.c.b16 %v392, %v391
      %v402 = vpack.c.b16 %v394, %v393
      %411 = vmatprep.subr.bf16.mxu0 0
      %412 = vmatpush1.bf16.msra.mxu0 %v395
      %413 = vmatprep.subr.bf16.mxu0 0
      %414 = vmatpush1.bf16.msra.mxu0 %v396
      %415 = vmatprep.subr.bf16.mxu0 0
      %416 = vmatpush1.bf16.msra.mxu0 %v397
      %417 = vmatprep.subr.bf16.mxu0 0
      %418 = vmatpush1.bf16.msra.mxu0 %v398
      %419 = vmatprep.subr.bf16.mxu0 0
      %420 = vmatpush1.bf16.msra.mxu0 %v399
      %421 = vmatprep.subr.bf16.mxu0 0
      %422 = vmatpush1.bf16.msra.mxu0 %v400
      %423 = vmatprep.subr.bf16.mxu0 0
      %424 = vmatpush1.bf16.msra.mxu0 %v401
      %425 = vmatprep.subr.bf16.mxu0 0
      %426 = vmatpush1.bf16.msra.mxu0 %v402
      %427 = vmatprep.subr.bf16.mxu0 0
      %428 = vmatpush1.bf16.msra.mxu0 0
      %429 = vmatprep.subr.bf16.mxu0 0
      %430 = vmatpush1.bf16.msra.mxu0 0
      %431 = vmatprep.subr.bf16.mxu0 0
      %432 = vmatpush1.bf16.msra.mxu0 0
      %433 = vmatprep.subr.bf16.mxu0 0
      %434 = vmatpush1.bf16.msra.mxu0 0
      %435 = vmatprep.subr.bf16.mxu0 0
      %436 = vmatpush1.bf16.msra.mxu0 0
      %437 = vmatprep.subr.bf16.mxu0 0
      %438 = vmatpush1.bf16.msra.mxu0 0
      %439 = vmatprep.subr.bf16.mxu0 0
      %440 = vmatpush1.bf16.msra.mxu0 0
      %441 = vmatprep.subr.bf16.mxu0 0
      %442 = vmatpush1.bf16.msra.mxu0 0
      %443 = vmatprep.mubr.bf16.mxu0 0
      %444 = vmatmul.mubr.bf16.gmra.mrb[0].mxu0 %v355
      %v445 = vpop.f32.mrb[0].mxu0
      %v446 = vadd.f32 0.0, %v445
      %v447 = vpop.f32.mrb[0].mxu0
      %v448 = vpop.f32.mrb[0].mxu0
      %v449 = vadd.f32 0.0, %v448
      %v450 = vpop.f32.mrb[0].mxu0
      %451 = vmatprep.mubr.bf16.mxu0 0
      %452 = vmatmul.mubr.bf16.gmra.mrb[0].mxu0 %v356
      %v453 = vpop.f32.mrb[0].mxu0
      %v454 = vadd.f32 0.0, %v453
      %v455 = vpop.f32.mrb[0].mxu0
      %v456 = vpop.f32.mrb[0].mxu0
      %v457 = vadd.f32 0.0, %v456
      %v458 = vpop.f32.mrb[0].mxu0
      %459 = vmatprep.mubr.bf16.mxu0 0
      %460 = vmatmul.mubr.bf16.gmra.mrb[0].mxu0 %v357
      %v461 = vpop.f32.mrb[0].mxu0
      %v462 = vadd.f32 0.0, %v461
      %v463 = vpop.f32.mrb[0].mxu0
      %v464 = vpop.f32.mrb[0].mxu0
      %v465 = vadd.f32 0.0, %v464
      %v466 = vpop.f32.mrb[0].mxu0
      %467 = vmatprep.mubr.bf16.mxu0 0
      %468 = vmatmul.mubr.bf16.gmra.mrb[0].mxu0 %v358
      %v469 = vpop.f32.mrb[0].mxu0
      %v470 = vadd.f32 0.0, %v469
      %v471 = vpop.f32.mrb[0].mxu0
      %v472 = vpop.f32.mrb[0].mxu0
      %v473 = vadd.f32 0.0, %v472
      %v474 = vpop.f32.mrb[0].mxu0
      %475 = vdwg.mxu0
      %v484 = vunpack.c.l.b16 %v183
      %v485 = vunpack.c.l.b16 %v184
      %v486 = vunpack.c.l.b16 %v185
      %v487 = vunpack.c.l.b16 %v186
      %v488 = vunpack.c.l.b16 %v187
      %v489 = vunpack.c.l.b16 %v188
      %v490 = vunpack.c.l.b16 %v189
      %v491 = vunpack.c.l.b16 %v190
      %v492 = vpack.c.b16 %v485, %v484
      %v493 = vpack.c.b16 %v487, %v486
      %v494 = vpack.c.b16 %v489, %v488
      %v495 = vpack.c.b16 %v491, %v490
      %v516 = vunpack.c.l.b16 %v191
      %v517 = vunpack.c.l.b16 %v192
      %v518 = vunpack.c.l.b16 %v193
      %v519 = vunpack.c.l.b16 %v194
      %v520 = vunpack.c.l.b16 %v195
      %v521 = vunpack.c.l.b16 %v196
      %v522 = vunpack.c.l.b16 %v197
      %v523 = vunpack.c.l.b16 %v198
      %v524 = vunpack.c.l.b16 %v199
      %v525 = vunpack.c.l.b16 %v200
      %v526 = vunpack.c.l.b16 %v201
      %v527 = vunpack.c.l.b16 %v202
      %v528 = vunpack.c.l.b16 %v203
      %v529 = vunpack.c.l.b16 %v204
      %v530 = vunpack.c.l.b16 %v205
      %v531 = vunpack.c.l.b16 %v206
      %v532 = vpack.c.b16 %v517, %v516
      %v533 = vpack.c.b16 %v519, %v518
      %v534 = vpack.c.b16 %v521, %v520
      %v535 = vpack.c.b16 %v523, %v522
      %v536 = vpack.c.b16 %v525, %v524
      %v537 = vpack.c.b16 %v527, %v526
      %v538 = vpack.c.b16 %v529, %v528
      %v539 = vpack.c.b16 %v531, %v530
      %548 = vmatprep.subr.bf16.mxu0 0
      %549 = vmatpush1.bf16.msra.mxu0 %v532
      %550 = vmatprep.subr.bf16.mxu0 0
      %551 = vmatpush1.bf16.msra.mxu0 %v533
      %552 = vmatprep.subr.bf16.mxu0 0
      %553 = vmatpush1.bf16.msra.mxu0 %v534
      %554 = vmatprep.subr.bf16.mxu0 0
      %555 = vmatpush1.bf16.msra.mxu0 %v535
      %556 = vmatprep.subr.bf16.mxu0 0
      %557 = vmatpush1.bf16.msra.mxu0 %v536
      %558 = vmatprep.subr.bf16.mxu0 0
      %559 = vmatpush1.bf16.msra.mxu0 %v537
      %560 = vmatprep.subr.bf16.mxu0 0
      %561 = vmatpush1.bf16.msra.mxu0 %v538
      %562 = vmatprep.subr.bf16.mxu0 0
      %563 = vmatpush1.bf16.msra.mxu0 %v539
      %564 = vmatprep.subr.bf16.mxu0 0
      %565 = vmatpush1.bf16.msra.mxu0 0
      %566 = vmatprep.subr.bf16.mxu0 0
      %567 = vmatpush1.bf16.msra.mxu0 0
      %568 = vmatprep.subr.bf16.mxu0 0
      %569 = vmatpush1.bf16.msra.mxu0 0
      %570 = vmatprep.subr.bf16.mxu0 0
      %571 = vmatpush1.bf16.msra.mxu0 0
      %572 = vmatprep.subr.bf16.mxu0 0
      %573 = vmatpush1.bf16.msra.mxu0 0
      %574 = vmatprep.subr.bf16.mxu0 0
      %575 = vmatpush1.bf16.msra.mxu0 0
      %576 = vmatprep.subr.bf16.mxu0 0
      %577 = vmatpush1.bf16.msra.mxu0 0
      %578 = vmatprep.subr.bf16.mxu0 0
      %579 = vmatpush1.bf16.msra.mxu0 0
      %580 = vmatprep.mubr.bf16.mxu0 0
      %581 = vmatmul.mubr.bf16.gmra.mrb[0].mxu0 %v492
      %v582 = vpop.f32.mrb[0].mxu0
      %v583 = vadd.f32 %v446, %v582
      %v584 = vpop.f32.mrb[0].mxu0
      %v585 = vpop.f32.mrb[0].mxu0
      %v586 = vadd.f32 %v449, %v585
      %v587 = vpop.f32.mrb[0].mxu0
      %588 = vmatprep.mubr.bf16.mxu0 0
      %589 = vmatmul.mubr.bf16.gmra.mrb[0].mxu0 %v493
      %v590 = vpop.f32.mrb[0].mxu0
      %v591 = vadd.f32 %v454, %v590
      %v592 = vpop.f32.mrb[0].mxu0
      %v593 = vpop.f32.mrb[0].mxu0
      %v594 = vadd.f32 %v457, %v593
      %v595 = vpop.f32.mrb[0].mxu0
      %596 = vmatprep.mubr.bf16.mxu0 0
      %597 = vmatmul.mubr.bf16.gmra.mrb[0].mxu0 %v494
      %v598 = vpop.f32.mrb[0].mxu0
      %v599 = vadd.f32 %v462, %v598
      %v600 = vpop.f32.mrb[0].mxu0
      %v601 = vpop.f32.mrb[0].mxu0
      %v602 = vadd.f32 %v465, %v601
      %v603 = vpop.f32.mrb[0].mxu0
      %604 = vmatprep.mubr.bf16.mxu0 0
      %605 = vmatmul.mubr.bf16.gmra.mrb[0].mxu0 %v495
      %v606 = vpop.f32.mrb[0].mxu0
      %v607 = vadd.f32 %v470, %v606
      %v608 = vpop.f32.mrb[0].mxu0
      %v609 = vpop.f32.mrb[0].mxu0
      %v610 = vadd.f32 %v473, %v609
      %v611 = vpop.f32.mrb[0].mxu0
      %612 = vdwg.mxu0
      %v613 = vld [vmem:[%s172] sm:$0xe]
      %v614 = vld [vmem:[%s172 + $0x8] sm:$0xe]
      %v615 = vld [vmem:[%s172 + $0x10] sm:$0xe]
      %v616 = vld [vmem:[%s172 + $0x18] sm:$0xe]
      %v617 = vld [vmem:[%s172 + $0x20] sm:$0xe]
      %v618 = vld [vmem:[%s172 + $0x28] sm:$0xe]
      %v619 = vld [vmem:[%s172 + $0x30] sm:$0xe]
      %v620 = vld [vmem:[%s172 + $0x38] sm:$0xe]
      %vm637 = vcmask 1042432
      %vm638 = vcmask 1046532
      %vm639 = vmor %vm637, %vm638
      %v640 = vrot.slane %v613, 5
      %v641 = vrot.slane %v640, 4
      %v642 = vrot.slane %v207, 5
      %v643 = vsel %vm639, %v641, %v642
      %v644 = vrot.slane %v614, 5
      %v645 = vrot.slane %v644, 4
      %v646 = vrot.slane %v208, 5
      %v647 = vsel %vm639, %v645, %v646
      %v648 = vrot.slane %v615, 5
      %v649 = vrot.slane %v648, 4
      %v650 = vrot.slane %v209, 5
      %v651 = vsel %vm639, %v649, %v650
      %v652 = vrot.slane %v616, 5
      %v653 = vrot.slane %v652, 4
      %v654 = vrot.slane %v210, 5
      %v655 = vsel %vm639, %v653, %v654
      %v656 = vrot.slane %v617, 5
      %v657 = vrot.slane %v656, 4
      %v658 = vrot.slane %v211, 5
      %v659 = vsel %vm639, %v657, %v658
      %v660 = vrot.slane %v618, 5
      %v661 = vrot.slane %v660, 4
      %v662 = vrot.slane %v212, 5
      %v663 = vsel %vm639, %v661, %v662
      %v664 = vrot.slane %v619, 5
      %v665 = vrot.slane %v664, 4
      %v666 = vrot.slane %v213, 5
      %v667 = vsel %vm639, %v665, %v666
      %v668 = vrot.slane %v620, 5
      %v669 = vrot.slane %v668, 4
      %v670 = vrot.slane %v214, 5
      %v671 = vsel %vm639, %v669, %v670
      %s672 = scalar_lea.vmem %s1, 128
      %v673 = vld [vmem:[%s672] sm:$0xf]
      %v674 = vld [vmem:[%s672 + $0x4] sm:$0xf]
      %v675 = vld [vmem:[%s672 + $0x8] sm:$0xf]
      %v676 = vld [vmem:[%s672 + $0xc] sm:$0xf]
      %v677 = vld [vmem:[%s672 + $0x10] sm:$0xf]
      %v678 = vld [vmem:[%s672 + $0x14] sm:$0xf]
      %v679 = vld [vmem:[%s672 + $0x18] sm:$0xf]
      %v680 = vld [vmem:[%s672 + $0x1c] sm:$0xf]
      %v681 = vld [vmem:[%s672 + $0x20] sm:$0xf]
      %v682 = vld [vmem:[%s672 + $0x24] sm:$0xf]
      %v683 = vld [vmem:[%s672 + $0x28] sm:$0xf]
      %v684 = vld [vmem:[%s672 + $0x2c] sm:$0xf]
      %v685 = vld [vmem:[%s672 + $0x30] sm:$0xf]
      %v686 = vld [vmem:[%s672 + $0x34] sm:$0xf]
      %v687 = vld [vmem:[%s672 + $0x38] sm:$0xf]
      %v688 = vld [vmem:[%s672 + $0x3c] sm:$0xf]
      %v689 = vunpack.c.l.b16 %v643
      %v690 = vunpack.c.l.b16 %v647
      %v691 = vunpack.c.l.b16 %v651
      %v692 = vunpack.c.l.b16 %v655
      %v693 = vunpack.c.l.b16 %v659
      %v694 = vunpack.c.l.b16 %v663
      %v695 = vunpack.c.l.b16 %v667
      %v696 = vunpack.c.l.b16 %v671
      %v697 = vpack.c.b16 %v690, %v689
      %v698 = vpack.c.b16 %v692, %v691
      %v699 = vpack.c.b16 %v694, %v693
      %v700 = vpack.c.b16 %v696, %v695
      %v721 = vunpack.c.l.b16 %v673
      %v722 = vunpack.c.l.b16 %v674
      %v723 = vunpack.c.l.b16 %v675
      %v724 = vunpack.c.l.b16 %v676
      %v725 = vunpack.c.l.b16 %v677
      %v726 = vunpack.c.l.b16 %v678
      %v727 = vunpack.c.l.b16 %v679
      %v728 = vunpack.c.l.b16 %v680
      %v729 = vunpack.c.l.b16 %v681
      %v730 = vunpack.c.l.b16 %v682
      %v731 = vunpack.c.l.b16 %v683
      %v732 = vunpack.c.l.b16 %v684
      %v733 = vunpack.c.l.b16 %v685
      %v734 = vunpack.c.l.b16 %v686
      %v735 = vunpack.c.l.b16 %v687
      %v736 = vunpack.c.l.b16 %v688
      %v737 = vpack.c.b16 %v722, %v721
      %v738 = vpack.c.b16 %v724, %v723
      %v739 = vpack.c.b16 %v726, %v725
      %v740 = vpack.c.b16 %v728, %v727
      %v741 = vpack.c.b16 %v730, %v729
      %v742 = vpack.c.b16 %v732, %v731
      %v743 = vpack.c.b16 %v734, %v733
      %v744 = vpack.c.b16 %v736, %v735
      %753 = vmatprep.subr.bf16.mxu0 0
      %754 = vmatpush1.bf16.msra.mxu0 %v737
      %755 = vmatprep.subr.bf16.mxu0 0
      %756 = vmatpush1.bf16.msra.mxu0 %v738
      %757 = vmatprep.subr.bf16.mxu0 0
      %758 = vmatpush1.bf16.msra.mxu0 %v739
      %759 = vmatprep.subr.bf16.mxu0 0
      %760 = vmatpush1.bf16.msra.mxu0 %v740
      %761 = vmatprep.subr.bf16.mxu0 0
      %762 = vmatpush1.bf16.msra.mxu0 %v741
      %763 = vmatprep.subr.bf16.mxu0 0
      %764 = vmatpush1.bf16.msra.mxu0 %v742
      %765 = vmatprep.subr.bf16.mxu0 0
      %766 = vmatpush1.bf16.msra.mxu0 %v743
      %767 = vmatprep.subr.bf16.mxu0 0
      %768 = vmatpush1.bf16.msra.mxu0 %v744
      %769 = vmatprep.subr.bf16.mxu0 0
      %770 = vmatpush1.bf16.msra.mxu0 0
      %771 = vmatprep.subr.bf16.mxu0 0
      %772 = vmatpush1.bf16.msra.mxu0 0
      %773 = vmatprep.subr.bf16.mxu0 0
      %774 = vmatpush1.bf16.msra.mxu0 0
      %775 = vmatprep.subr.bf16.mxu0 0
      %776 = vmatpush1.bf16.msra.mxu0 0
      %777 = vmatprep.subr.bf16.mxu0 0
      %778 = vmatpush1.bf16.msra.mxu0 0
      %779 = vmatprep.subr.bf16.mxu0 0
      %780 = vmatpush1.bf16.msra.mxu0 0
      %781 = vmatprep.subr.bf16.mxu0 0
      %782 = vmatpush1.bf16.msra.mxu0 0
      %783 = vmatprep.subr.bf16.mxu0 0
      %784 = vmatpush1.bf16.msra.mxu0 0
      %785 = vmatprep.mubr.bf16.mxu0 0
      %786 = vmatmul.mubr.bf16.gmra.mrb[0].mxu0 %v697
      %v787 = vpop.f32.mrb[0].mxu0
      %v788 = vadd.f32 0.0, %v787
      %v789 = vpop.f32.mrb[0].mxu0
      %v790 = vpop.f32.mrb[0].mxu0
      %v791 = vadd.f32 0.0, %v790
      %v792 = vpop.f32.mrb[0].mxu0
      %793 = vmatprep.mubr.bf16.mxu0 0
      %794 = vmatmul.mubr.bf16.gmra.mrb[0].mxu0 %v698
      %v795 = vpop.f32.mrb[0].mxu0
      %v796 = vadd.f32 0.0, %v795
      %v797 = vpop.f32.mrb[0].mxu0
      %v798 = vpop.f32.mrb[0].mxu0
      %v799 = vadd.f32 0.0, %v798
      %v800 = vpop.f32.mrb[0].mxu0
      %801 = vmatprep.mubr.bf16.mxu0 0
      %802 = vmatmul.mubr.bf16.gmra.mrb[0].mxu0 %v699
      %v803 = vpop.f32.mrb[0].mxu0
      %v804 = vadd.f32 0.0, %v803
      %v805 = vpop.f32.mrb[0].mxu0
      %v806 = vpop.f32.mrb[0].mxu0
      %v807 = vadd.f32 0.0, %v806
      %v808 = vpop.f32.mrb[0].mxu0
      %809 = vmatprep.mubr.bf16.mxu0 0
      %810 = vmatmul.mubr.bf16.gmra.mrb[0].mxu0 %v700
      %v811 = vpop.f32.mrb[0].mxu0
      %v812 = vadd.f32 0.0, %v811
      %v813 = vpop.f32.mrb[0].mxu0
      %v814 = vpop.f32.mrb[0].mxu0
      %v815 = vadd.f32 0.0, %v814
      %v816 = vpop.f32.mrb[0].mxu0
      %817 = vdwg.mxu0
      %v818 = vadd.f32 %v583, %v788
      %v819 = vadd.f32 %v586, %v791
      %v820 = vadd.f32 %v591, %v796
      %v821 = vadd.f32 %v594, %v799
      %v822 = vadd.f32 %v599, %v804
      %v823 = vadd.f32 %v602, %v807
      %v824 = vadd.f32 %v607, %v812
      %v825 = vadd.f32 %v610, %v815
      %s826 = scalar_lea.vmem %s172, 8
      %v827 = vld [vmem:[%s826] sm:$0xf]
      %v828 = vld [vmem:[%s826 + $0x8] sm:$0xf]
      %v829 = vld [vmem:[%s826 + $0x10] sm:$0xf]
      %v830 = vld [vmem:[%s826 + $0x18] sm:$0xf]
      %v831 = vld [vmem:[%s826 + $0x20] sm:$0xf]
      %v832 = vld [vmem:[%s826 + $0x28] sm:$0xf]
      %v833 = vld [vmem:[%s826 + $0x30] sm:$0xf]
      %v834 = vld [vmem:[%s826 + $0x38] sm:$0xf]
      %s835 = scalar_lea.vmem %s1, 192
      %v836 = vld [vmem:[%s835] sm:$0xf]
      %v837 = vld [vmem:[%s835 + $0x4] sm:$0xf]
      %v838 = vld [vmem:[%s835 + $0x8] sm:$0xf]
      %v839 = vld [vmem:[%s835 + $0xc] sm:$0xf]
      %v840 = vld [vmem:[%s835 + $0x10] sm:$0xf]
      %v841 = vld [vmem:[%s835 + $0x14] sm:$0xf]
      %v842 = vld [vmem:[%s835 + $0x18] sm:$0xf]
      %v843 = vld [vmem:[%s835 + $0x1c] sm:$0xf]
      %v844 = vld [vmem:[%s835 + $0x20] sm:$0xf]
      %v845 = vld [vmem:[%s835 + $0x24] sm:$0xf]
      %v846 = vld [vmem:[%s835 + $0x28] sm:$0xf]
      %v847 = vld [vmem:[%s835 + $0x2c] sm:$0xf]
      %v848 = vld [vmem:[%s835 + $0x30] sm:$0xf]
      %v849 = vld [vmem:[%s835 + $0x34] sm:$0xf]
      %v850 = vld [vmem:[%s835 + $0x38] sm:$0xf]
      %v851 = vld [vmem:[%s835 + $0x3c] sm:$0xf]
      %v860 = vunpack.c.l.b16 %v827
      %v861 = vunpack.c.l.b16 %v828
      %v862 = vunpack.c.l.b16 %v829
      %v863 = vunpack.c.l.b16 %v830
      %v864 = vunpack.c.l.b16 %v831
      %v865 = vunpack.c.l.b16 %v832
      %v866 = vunpack.c.l.b16 %v833
      %v867 = vunpack.c.l.b16 %v834
      %v868 = vpack.c.b16 %v861, %v860
      %v869 = vpack.c.b16 %v863, %v862
      %v870 = vpack.c.b16 %v865, %v864
      %v871 = vpack.c.b16 %v867, %v866
      %v892 = vunpack.c.l.b16 %v836
      %v893 = vunpack.c.l.b16 %v837
      %v894 = vunpack.c.l.b16 %v838
      %v895 = vunpack.c.l.b16 %v839
      %v896 = vunpack.c.l.b16 %v840
      %v897 = vunpack.c.l.b16 %v841
      %v898 = vunpack.c.l.b16 %v842
      %v899 = vunpack.c.l.b16 %v843
      %v900 = vunpack.c.l.b16 %v844
      %v901 = vunpack.c.l.b16 %v845
      %v902 = vunpack.c.l.b16 %v846
      %v903 = vunpack.c.l.b16 %v847
      %v904 = vunpack.c.l.b16 %v848
      %v905 = vunpack.c.l.b16 %v849
      %v906 = vunpack.c.l.b16 %v850
      %v907 = vunpack.c.l.b16 %v851
      %v908 = vpack.c.b16 %v893, %v892
      %v909 = vpack.c.b16 %v895, %v894
      %v910 = vpack.c.b16 %v897, %v896
      %v911 = vpack.c.b16 %v899, %v898
      %v912 = vpack.c.b16 %v901, %v900
      %v913 = vpack.c.b16 %v903, %v902
      %v914 = vpack.c.b16 %v905, %v904
      %v915 = vpack.c.b16 %v907, %v906
      %924 = vmatprep.subr.bf16.mxu0 0
      %925 = vmatpush1.bf16.msra.mxu0 %v908
      %926 = vmatprep.subr.bf16.mxu0 0
      %927 = vmatpush1.bf16.msra.mxu0 %v909
      %928 = vmatprep.subr.bf16.mxu0 0
      %929 = vmatpush1.bf16.msra.mxu0 %v910
      %930 = vmatprep.subr.bf16.mxu0 0
      %931 = vmatpush1.bf16.msra.mxu0 %v911
      %932 = vmatprep.subr.bf16.mxu0 0
      %933 = vmatpush1.bf16.msra.mxu0 %v912
      %934 = vmatprep.subr.bf16.mxu0 0
      %935 = vmatpush1.bf16.msra.mxu0 %v913
      %936 = vmatprep.subr.bf16.mxu0 0
      %937 = vmatpush1.bf16.msra.mxu0 %v914
      %938 = vmatprep.subr.bf16.mxu0 0
      %939 = vmatpush1.bf16.msra.mxu0 %v915
      %940 = vmatprep.subr.bf16.mxu0 0
      %941 = vmatpush1.bf16.msra.mxu0 0
      %942 = vmatprep.subr.bf16.mxu0 0
      %943 = vmatpush1.bf16.msra.mxu0 0
      %944 = vmatprep.subr.bf16.mxu0 0
      %945 = vmatpush1.bf16.msra.mxu0 0
      %946 = vmatprep.subr.bf16.mxu0 0
      %947 = vmatpush1.bf16.msra.mxu0 0
      %948 = vmatprep.subr.bf16.mxu0 0
      %949 = vmatpush1.bf16.msra.mxu0 0
      %950 = vmatprep.subr.bf16.mxu0 0
      %951 = vmatpush1.bf16.msra.mxu0 0
      %952 = vmatprep.subr.bf16.mxu0 0
      %953 = vmatpush1.bf16.msra.mxu0 0
      %954 = vmatprep.subr.bf16.mxu0 0
      %955 = vmatpush1.bf16.msra.mxu0 0
      %956 = vmatprep.mubr.bf16.mxu0 0
      %957 = vmatmul.mubr.bf16.gmra.mrb[0].mxu0 %v868
      %v958 = vpop.f32.mrb[0].mxu0
      %v959 = vadd.f32 0.0, %v958
      %v960 = vpop.f32.mrb[0].mxu0
      %v961 = vpop.f32.mrb[0].mxu0
      %v962 = vadd.f32 0.0, %v961
      %v963 = vpop.f32.mrb[0].mxu0
      %964 = vmatprep.mubr.bf16.mxu0 0
      %965 = vmatmul.mubr.bf16.gmra.mrb[0].mxu0 %v869
      %v966 = vpop.f32.mrb[0].mxu0
      %v967 = vadd.f32 0.0, %v966
      %v968 = vpop.f32.mrb[0].mxu0
      %v969 = vpop.f32.mrb[0].mxu0
      %v970 = vadd.f32 0.0, %v969
      %v971 = vpop.f32.mrb[0].mxu0
      %972 = vmatprep.mubr.bf16.mxu0 0
      %973 = vmatmul.mubr.bf16.gmra.mrb[0].mxu0 %v870
      %v974 = vpop.f32.mrb[0].mxu0
      %v975 = vadd.f32 0.0, %v974
      %v976 = vpop.f32.mrb[0].mxu0
      %v977 = vpop.f32.mrb[0].mxu0
      %v978 = vadd.f32 0.0, %v977
      %v979 = vpop.f32.mrb[0].mxu0
      %980 = vmatprep.mubr.bf16.mxu0 0
      %981 = vmatmul.mubr.bf16.gmra.mrb[0].mxu0 %v871
      %v982 = vpop.f32.mrb[0].mxu0
      %v983 = vadd.f32 0.0, %v982
      %v984 = vpop.f32.mrb[0].mxu0
      %v985 = vpop.f32.mrb[0].mxu0
      %v986 = vadd.f32 0.0, %v985
      %v987 = vpop.f32.mrb[0].mxu0
      %988 = vdwg.mxu0
      %v989 = vadd.f32 %v818, %v959
      %v990 = vadd.f32 %v819, %v962
      %v991 = vadd.f32 %v820, %v967
      %v992 = vadd.f32 %v821, %v970
      %v993 = vadd.f32 %v822, %v975
      %v994 = vadd.f32 %v823, %v978
      %v995 = vadd.f32 %v824, %v983
      %v996 = vadd.f32 %v825, %v986
      %v997 = vld [vmem:[%s826] sm:$0xf]
      %v998 = vld [vmem:[%s826 + $0x4] sm:$0x1]
      %v999 = vld [vmem:[%s826 + $0x8] sm:$0xf]
      %v1000 = vld [vmem:[%s826 + $0xc] sm:$0x1]
      %v1001 = vld [vmem:[%s826 + $0x10] sm:$0xf]
      %v1002 = vld [vmem:[%s826 + $0x14] sm:$0x1]
      %v1003 = vld [vmem:[%s826 + $0x18] sm:$0xf]
      %v1004 = vld [vmem:[%s826 + $0x1c] sm:$0x1]
      %v1005 = vld [vmem:[%s826 + $0x20] sm:$0xf]
      %v1006 = vld [vmem:[%s826 + $0x24] sm:$0x1]
      %v1007 = vld [vmem:[%s826 + $0x28] sm:$0xf]
      %v1008 = vld [vmem:[%s826 + $0x2c] sm:$0x1]
      %v1009 = vld [vmem:[%s826 + $0x30] sm:$0xf]
      %v1010 = vld [vmem:[%s826 + $0x34] sm:$0x1]
      %v1011 = vld [vmem:[%s826 + $0x38] sm:$0xf]
      %v1012 = vld [vmem:[%s826 + $0x3c] sm:$0x1]
      %v1014 = vshrl.u32 %v997, 16
      %v1016 = vrot.slane %v1014, 4
      %v1017 = vshll.u32 %v997, 16
      %v1019 = vrot.slane %v1017, 5
      %v1020 = vor.u32 %v1016, %v1019
      %v1021 = vrot.slane %v1020, 4
      %v1023 = vshll.u32 %v998, 16
      %v1025 = vrot.slane %v1023, 5
      %v1026 = vsel %vm217, %v1021, %v1025
      %v1028 = vshrl.u32 %v999, 16
      %v1030 = vrot.slane %v1028, 4
      %v1031 = vshll.u32 %v999, 16
      %v1033 = vrot.slane %v1031, 5
      %v1034 = vor.u32 %v1030, %v1033
      %v1035 = vrot.slane %v1034, 4
      %v1037 = vshll.u32 %v1000, 16
      %v1039 = vrot.slane %v1037, 5
      %v1040 = vsel %vm217, %v1035, %v1039
      %v1042 = vshrl.u32 %v1001, 16
      %v1044 = vrot.slane %v1042, 4
      %v1045 = vshll.u32 %v1001, 16
      %v1047 = vrot.slane %v1045, 5
      %v1048 = vor.u32 %v1044, %v1047
      %v1049 = vrot.slane %v1048, 4
      %v1051 = vshll.u32 %v1002, 16
      %v1053 = vrot.slane %v1051, 5
      %v1054 = vsel %vm217, %v1049, %v1053
      %v1056 = vshrl.u32 %v1003, 16
      %v1058 = vrot.slane %v1056, 4
      %v1059 = vshll.u32 %v1003, 16
      %v1061 = vrot.slane %v1059, 5
      %v1062 = vor.u32 %v1058, %v1061
      %v1063 = vrot.slane %v1062, 4
      %v1065 = vshll.u32 %v1004, 16
      %v1067 = vrot.slane %v1065, 5
      %v1068 = vsel %vm217, %v1063, %v1067
      %v1070 = vshrl.u32 %v1005, 16
      %v1072 = vrot.slane %v1070, 4
      %v1073 = vshll.u32 %v1005, 16
      %v1075 = vrot.slane %v1073, 5
      %v1076 = vor.u32 %v1072, %v1075
      %v1077 = vrot.slane %v1076, 4
      %v1079 = vshll.u32 %v1006, 16
      %v1081 = vrot.slane %v1079, 5
      %v1082 = vsel %vm217, %v1077, %v1081
      %v1084 = vshrl.u32 %v1007, 16
      %v1086 = vrot.slane %v1084, 4
      %v1087 = vshll.u32 %v1007, 16
      %v1089 = vrot.slane %v1087, 5
      %v1090 = vor.u32 %v1086, %v1089
      %v1091 = vrot.slane %v1090, 4
      %v1093 = vshll.u32 %v1008, 16
      %v1095 = vrot.slane %v1093, 5
      %v1096 = vsel %vm217, %v1091, %v1095
      %v1098 = vshrl.u32 %v1009, 16
      %v1100 = vrot.slane %v1098, 4
      %v1101 = vshll.u32 %v1009, 16
      %v1103 = vrot.slane %v1101, 5
      %v1104 = vor.u32 %v1100, %v1103
      %v1105 = vrot.slane %v1104, 4
      %v1107 = vshll.u32 %v1010, 16
      %v1109 = vrot.slane %v1107, 5
      %v1110 = vsel %vm217, %v1105, %v1109
      %v1112 = vshrl.u32 %v1011, 16
      %v1114 = vrot.slane %v1112, 4
      %v1115 = vshll.u32 %v1011, 16
      %v1117 = vrot.slane %v1115, 5
      %v1118 = vor.u32 %v1114, %v1117
      %v1119 = vrot.slane %v1118, 4
      %v1121 = vshll.u32 %v1012, 16
      %v1123 = vrot.slane %v1121, 5
      %v1124 = vsel %vm217, %v1119, %v1123
      %s1125 = scalar_lea.vmem %s1, 256
      %v1126 = vld [vmem:[%s1125] sm:$0xf]
      %v1127 = vld [vmem:[%s1125 + $0x4] sm:$0xf]
      %v1128 = vld [vmem:[%s1125 + $0x8] sm:$0xf]
      %v1129 = vld [vmem:[%s1125 + $0xc] sm:$0xf]
      %v1130 = vld [vmem:[%s1125 + $0x10] sm:$0xf]
      %v1131 = vld [vmem:[%s1125 + $0x14] sm:$0xf]
      %v1132 = vld [vmem:[%s1125 + $0x18] sm:$0xf]
      %v1133 = vld [vmem:[%s1125 + $0x1c] sm:$0xf]
      %v1134 = vld [vmem:[%s1125 + $0x20] sm:$0xf]
      %v1135 = vld [vmem:[%s1125 + $0x24] sm:$0xf]
      %v1136 = vld [vmem:[%s1125 + $0x28] sm:$0xf]
      %v1137 = vld [vmem:[%s1125 + $0x2c] sm:$0xf]
      %v1138 = vld [vmem:[%s1125 + $0x30] sm:$0xf]
      %v1139 = vld [vmem:[%s1125 + $0x34] sm:$0xf]
      %v1140 = vld [vmem:[%s1125 + $0x38] sm:$0xf]
      %v1141 = vld [vmem:[%s1125 + $0x3c] sm:$0xf]
      %v1142 = vunpack.c.l.b16 %v1026
      %v1143 = vunpack.c.l.b16 %v1040
      %v1144 = vunpack.c.l.b16 %v1054
      %v1145 = vunpack.c.l.b16 %v1068
      %v1146 = vunpack.c.l.b16 %v1082
      %v1147 = vunpack.c.l.b16 %v1096
      %v1148 = vunpack.c.l.b16 %v1110
      %v1149 = vunpack.c.l.b16 %v1124
      %v1150 = vpack.c.b16 %v1143, %v1142
      %v1151 = vpack.c.b16 %v1145, %v1144
      %v1152 = vpack.c.b16 %v1147, %v1146
      %v1153 = vpack.c.b16 %v1149, %v1148
      %v1174 = vunpack.c.l.b16 %v1126
      %v1175 = vunpack.c.l.b16 %v1127
      %v1176 = vunpack.c.l.b16 %v1128
      %v1177 = vunpack.c.l.b16 %v1129
      %v1178 = vunpack.c.l.b16 %v1130
      %v1179 = vunpack.c.l.b16 %v1131
      %v1180 = vunpack.c.l.b16 %v1132
      %v1181 = vunpack.c.l.b16 %v1133
      %v1182 = vunpack.c.l.b16 %v1134
      %v1183 = vunpack.c.l.b16 %v1135
      %v1184 = vunpack.c.l.b16 %v1136
      %v1185 = vunpack.c.l.b16 %v1137
      %v1186 = vunpack.c.l.b16 %v1138
      %v1187 = vunpack.c.l.b16 %v1139
      %v1188 = vunpack.c.l.b16 %v1140
      %v1189 = vunpack.c.l.b16 %v1141
      %v1190 = vpack.c.b16 %v1175, %v1174
      %v1191 = vpack.c.b16 %v1177, %v1176
      %v1192 = vpack.c.b16 %v1179, %v1178
      %v1193 = vpack.c.b16 %v1181, %v1180
      %v1194 = vpack.c.b16 %v1183, %v1182
      %v1195 = vpack.c.b16 %v1185, %v1184
      %v1196 = vpack.c.b16 %v1187, %v1186
      %v1197 = vpack.c.b16 %v1189, %v1188
      %1206 = vmatprep.subr.bf16.mxu0 0
      %1207 = vmatpush1.bf16.msra.mxu0 %v1190
      %1208 = vmatprep.subr.bf16.mxu0 0
      %1209 = vmatpush1.bf16.msra.mxu0 %v1191
      %1210 = vmatprep.subr.bf16.mxu0 0
      %1211 = vmatpush1.bf16.msra.mxu0 %v1192
      %1212 = vmatprep.subr.bf16.mxu0 0
      %1213 = vmatpush1.bf16.msra.mxu0 %v1193
      %1214 = vmatprep.subr.bf16.mxu0 0
      %1215 = vmatpush1.bf16.msra.mxu0 %v1194
      %1216 = vmatprep.subr.bf16.mxu0 0
      %1217 = vmatpush1.bf16.msra.mxu0 %v1195
      %1218 = vmatprep.subr.bf16.mxu0 0
      %1219 = vmatpush1.bf16.msra.mxu0 %v1196
      %1220 = vmatprep.subr.bf16.mxu0 0
      %1221 = vmatpush1.bf16.msra.mxu0 %v1197
      %1222 = vmatprep.subr.bf16.mxu0 0
      %1223 = vmatpush1.bf16.msra.mxu0 0
      %1224 = vmatprep.subr.bf16.mxu0 0
      %1225 = vmatpush1.bf16.msra.mxu0 0
      %1226 = vmatprep.subr.bf16.mxu0 0
      %1227 = vmatpush1.bf16.msra.mxu0 0
      %1228 = vmatprep.subr.bf16.mxu0 0
      %1229 = vmatpush1.bf16.msra.mxu0 0
      %1230 = vmatprep.subr.bf16.mxu0 0
      %1231 = vmatpush1.bf16.msra.mxu0 0
      %1232 = vmatprep.subr.bf16.mxu0 0
      %1233 = vmatpush1.bf16.msra.mxu0 0
      %1234 = vmatprep.subr.bf16.mxu0 0
      %1235 = vmatpush1.bf16.msra.mxu0 0
      %1236 = vmatprep.subr.bf16.mxu0 0
      %1237 = vmatpush1.bf16.msra.mxu0 0
      %1238 = vmatprep.mubr.bf16.mxu0 0
      %1239 = vmatmul.mubr.bf16.gmra.mrb[0].mxu0 %v1150
      %v1240 = vpop.f32.mrb[0].mxu0
      %v1241 = vadd.f32 0.0, %v1240
      %v1242 = vpop.f32.mrb[0].mxu0
      %v1243 = vpop.f32.mrb[0].mxu0
      %v1244 = vadd.f32 0.0, %v1243
      %v1245 = vpop.f32.mrb[0].mxu0
      %1246 = vmatprep.mubr.bf16.mxu0 0
      %1247 = vmatmul.mubr.bf16.gmra.mrb[0].mxu0 %v1151
      %v1248 = vpop.f32.mrb[0].mxu0
      %v1249 = vadd.f32 0.0, %v1248
      %v1250 = vpop.f32.mrb[0].mxu0
      %v1251 = vpop.f32.mrb[0].mxu0
      %v1252 = vadd.f32 0.0, %v1251
      %v1253 = vpop.f32.mrb[0].mxu0
      %1254 = vmatprep.mubr.bf16.mxu0 0
      %1255 = vmatmul.mubr.bf16.gmra.mrb[0].mxu0 %v1152
      %v1256 = vpop.f32.mrb[0].mxu0
      %v1257 = vadd.f32 0.0, %v1256
      %v1258 = vpop.f32.mrb[0].mxu0
      %v1259 = vpop.f32.mrb[0].mxu0
      %v1260 = vadd.f32 0.0, %v1259
      %v1261 = vpop.f32.mrb[0].mxu0
      %1262 = vmatprep.mubr.bf16.mxu0 0
      %1263 = vmatmul.mubr.bf16.gmra.mrb[0].mxu0 %v1153
      %v1264 = vpop.f32.mrb[0].mxu0
      %v1265 = vadd.f32 0.0, %v1264
      %v1266 = vpop.f32.mrb[0].mxu0
      %v1267 = vpop.f32.mrb[0].mxu0
      %v1268 = vadd.f32 0.0, %v1267
      %v1269 = vpop.f32.mrb[0].mxu0
      %1270 = vdwg.mxu0
      %v1271 = vadd.f32 %v989, %v1241
      %v1272 = vadd.f32 %v990, %v1244
      %v1273 = vadd.f32 %v991, %v1249
      %v1274 = vadd.f32 %v992, %v1252
      %v1275 = vadd.f32 %v993, %v1257
      %v1276 = vadd.f32 %v994, %v1260
      %v1277 = vadd.f32 %v995, %v1265
      %v1278 = vadd.f32 %v996, %v1268
      %v1279 = vld [vmem:[%s826] sm:$0xe]
      %v1280 = vld [vmem:[%s826 + $0x8] sm:$0xe]
      %v1281 = vld [vmem:[%s826 + $0x10] sm:$0xe]
      %v1282 = vld [vmem:[%s826 + $0x18] sm:$0xe]
      %v1283 = vld [vmem:[%s826 + $0x20] sm:$0xe]
      %v1284 = vld [vmem:[%s826 + $0x28] sm:$0xe]
      %v1285 = vld [vmem:[%s826 + $0x30] sm:$0xe]
      %v1286 = vld [vmem:[%s826 + $0x38] sm:$0xe]
      %v1303 = vrot.slane %v1279, 5
      %v1304 = vrot.slane %v1303, 4
      %v1305 = vrot.slane %v998, 5
      %v1306 = vsel %vm639, %v1304, %v1305
      %v1307 = vrot.slane %v1280, 5
      %v1308 = vrot.slane %v1307, 4
      %v1309 = vrot.slane %v1000, 5
      %v1310 = vsel %vm639, %v1308, %v1309
      %v1311 = vrot.slane %v1281, 5
      %v1312 = vrot.slane %v1311, 4
      %v1313 = vrot.slane %v1002, 5
      %v1314 = vsel %vm639, %v1312, %v1313
      %v1315 = vrot.slane %v1282, 5
      %v1316 = vrot.slane %v1315, 4
      %v1317 = vrot.slane %v1004, 5
      %v1318 = vsel %vm639, %v1316, %v1317
      %v1319 = vrot.slane %v1283, 5
      %v1320 = vrot.slane %v1319, 4
      %v1321 = vrot.slane %v1006, 5
      %v1322 = vsel %vm639, %v1320, %v1321
      %v1323 = vrot.slane %v1284, 5
      %v1324 = vrot.slane %v1323, 4
      %v1325 = vrot.slane %v1008, 5
      %v1326 = vsel %vm639, %v1324, %v1325
      %v1327 = vrot.slane %v1285, 5
      %v1328 = vrot.slane %v1327, 4
      %v1329 = vrot.slane %v1010, 5
      %v1330 = vsel %vm639, %v1328, %v1329
      %v1331 = vrot.slane %v1286, 5
      %v1332 = vrot.slane %v1331, 4
      %v1333 = vrot.slane %v1012, 5
      %v1334 = vsel %vm639, %v1332, %v1333
      %s1335 = scalar_lea.vmem %s1, 320
      %v1336 = vld [vmem:[%s1335] sm:$0xf]
      %v1337 = vld [vmem:[%s1335 + $0x4] sm:$0xf]
      %v1338 = vld [vmem:[%s1335 + $0x8] sm:$0xf]
      %v1339 = vld [vmem:[%s1335 + $0xc] sm:$0xf]
      %v1340 = vld [vmem:[%s1335 + $0x10] sm:$0xf]
      %v1341 = vld [vmem:[%s1335 + $0x14] sm:$0xf]
      %v1342 = vld [vmem:[%s1335 + $0x18] sm:$0xf]
      %v1343 = vld [vmem:[%s1335 + $0x1c] sm:$0xf]
      %v1344 = vld [vmem:[%s1335 + $0x20] sm:$0xf]
      %v1345 = vld [vmem:[%s1335 + $0x24] sm:$0xf]
      %v1346 = vld [vmem:[%s1335 + $0x28] sm:$0xf]
      %v1347 = vld [vmem:[%s1335 + $0x2c] sm:$0xf]
      %v1348 = vld [vmem:[%s1335 + $0x30] sm:$0xf]
      %v1349 = vld [vmem:[%s1335 + $0x34] sm:$0xf]
      %v1350 = vld [vmem:[%s1335 + $0x38] sm:$0xf]
      %v1351 = vld [vmem:[%s1335 + $0x3c] sm:$0xf]
      %v1352 = vunpack.c.l.b16 %v1306
      %v1353 = vunpack.c.l.b16 %v1310
      %v1354 = vunpack.c.l.b16 %v1314
      %v1355 = vunpack.c.l.b16 %v1318
      %v1356 = vunpack.c.l.b16 %v1322
      %v1357 = vunpack.c.l.b16 %v1326
      %v1358 = vunpack.c.l.b16 %v1330
      %v1359 = vunpack.c.l.b16 %v1334
      %v1360 = vpack.c.b16 %v1353, %v1352
      %v1361 = vpack.c.b16 %v1355, %v1354
      %v1362 = vpack.c.b16 %v1357, %v1356
      %v1363 = vpack.c.b16 %v1359, %v1358
      %v1384 = vunpack.c.l.b16 %v1336
      %v1385 = vunpack.c.l.b16 %v1337
      %v1386 = vunpack.c.l.b16 %v1338
      %v1387 = vunpack.c.l.b16 %v1339
      %v1388 = vunpack.c.l.b16 %v1340
      %v1389 = vunpack.c.l.b16 %v1341
      %v1390 = vunpack.c.l.b16 %v1342
      %v1391 = vunpack.c.l.b16 %v1343
      %v1392 = vunpack.c.l.b16 %v1344
      %v1393 = vunpack.c.l.b16 %v1345
      %v1394 = vunpack.c.l.b16 %v1346
      %v1395 = vunpack.c.l.b16 %v1347
      %v1396 = vunpack.c.l.b16 %v1348
      %v1397 = vunpack.c.l.b16 %v1349
      %v1398 = vunpack.c.l.b16 %v1350
      %v1399 = vunpack.c.l.b16 %v1351
      %v1400 = vpack.c.b16 %v1385, %v1384
      %v1401 = vpack.c.b16 %v1387, %v1386
      %v1402 = vpack.c.b16 %v1389, %v1388
      %v1403 = vpack.c.b16 %v1391, %v1390
      %v1404 = vpack.c.b16 %v1393, %v1392
      %v1405 = vpack.c.b16 %v1395, %v1394
      %v1406 = vpack.c.b16 %v1397, %v1396
      %v1407 = vpack.c.b16 %v1399, %v1398
      %1416 = vmatprep.subr.bf16.mxu0 0
      %1417 = vmatpush1.bf16.msra.mxu0 %v1400
      %1418 = vmatprep.subr.bf16.mxu0 0
      %1419 = vmatpush1.bf16.msra.mxu0 %v1401
      %1420 = vmatprep.subr.bf16.mxu0 0
      %1421 = vmatpush1.bf16.msra.mxu0 %v1402
      %1422 = vmatprep.subr.bf16.mxu0 0
      %1423 = vmatpush1.bf16.msra.mxu0 %v1403
      %1424 = vmatprep.subr.bf16.mxu0 0
      %1425 = vmatpush1.bf16.msra.mxu0 %v1404
      %1426 = vmatprep.subr.bf16.mxu0 0
      %1427 = vmatpush1.bf16.msra.mxu0 %v1405
      %1428 = vmatprep.subr.bf16.mxu0 0
      %1429 = vmatpush1.bf16.msra.mxu0 %v1406
      %1430 = vmatprep.subr.bf16.mxu0 0
      %1431 = vmatpush1.bf16.msra.mxu0 %v1407
      %1432 = vmatprep.subr.bf16.mxu0 0
      %1433 = vmatpush1.bf16.msra.mxu0 0
      %1434 = vmatprep.subr.bf16.mxu0 0
      %1435 = vmatpush1.bf16.msra.mxu0 0
      %1436 = vmatprep.subr.bf16.mxu0 0
      %1437 = vmatpush1.bf16.msra.mxu0 0
      %1438 = vmatprep.subr.bf16.mxu0 0
      %1439 = vmatpush1.bf16.msra.mxu0 0
      %1440 = vmatprep.subr.bf16.mxu0 0
      %1441 = vmatpush1.bf16.msra.mxu0 0
      %1442 = vmatprep.subr.bf16.mxu0 0
      %1443 = vmatpush1.bf16.msra.mxu0 0
      %1444 = vmatprep.subr.bf16.mxu0 0
      %1445 = vmatpush1.bf16.msra.mxu0 0
      %1446 = vmatprep.subr.bf16.mxu0 0
      %1447 = vmatpush1.bf16.msra.mxu0 0
      %1448 = vmatprep.mubr.bf16.mxu0 0
      %1449 = vmatmul.mubr.bf16.gmra.mrb[0].mxu0 %v1360
      %v1450 = vpop.f32.mrb[0].mxu0
      %v1451 = vadd.f32 0.0, %v1450
      %v1452 = vpop.f32.mrb[0].mxu0
      %v1453 = vpop.f32.mrb[0].mxu0
      %v1454 = vadd.f32 0.0, %v1453
      %v1455 = vpop.f32.mrb[0].mxu0
      %1456 = vmatprep.mubr.bf16.mxu0 0
      %1457 = vmatmul.mubr.bf16.gmra.mrb[0].mxu0 %v1361
      %v1458 = vpop.f32.mrb[0].mxu0
      %v1459 = vadd.f32 0.0, %v1458
      %v1460 = vpop.f32.mrb[0].mxu0
      %v1461 = vpop.f32.mrb[0].mxu0
      %v1462 = vadd.f32 0.0, %v1461
      %v1463 = vpop.f32.mrb[0].mxu0
      %1464 = vmatprep.mubr.bf16.mxu0 0
      %1465 = vmatmul.mubr.bf16.gmra.mrb[0].mxu0 %v1362
      %v1466 = vpop.f32.mrb[0].mxu0
      %v1467 = vadd.f32 0.0, %v1466
      %v1468 = vpop.f32.mrb[0].mxu0
      %v1469 = vpop.f32.mrb[0].mxu0
      %v1470 = vadd.f32 0.0, %v1469
      %v1471 = vpop.f32.mrb[0].mxu0
      %1472 = vmatprep.mubr.bf16.mxu0 0
      %1473 = vmatmul.mubr.bf16.gmra.mrb[0].mxu0 %v1363
      %v1474 = vpop.f32.mrb[0].mxu0
      %v1475 = vadd.f32 0.0, %v1474
      %v1476 = vpop.f32.mrb[0].mxu0
      %v1477 = vpop.f32.mrb[0].mxu0
      %v1478 = vadd.f32 0.0, %v1477
      %v1479 = vpop.f32.mrb[0].mxu0
      %1480 = vdwg.mxu0
      %v1481 = vadd.f32 %v1271, %v1451
      %v1482 = vadd.f32 %v1272, %v1454
      %v1483 = vadd.f32 %v1273, %v1459
      %v1484 = vadd.f32 %v1274, %v1462
      %v1485 = vadd.f32 %v1275, %v1467
      %v1486 = vadd.f32 %v1276, %v1470
      %v1487 = vadd.f32 %v1277, %v1475
      %v1488 = vadd.f32 %v1278, %v1478
      %s1489 = scalar_lea.vmem %s172, 16
      %v1490 = vld [vmem:[%s1489] sm:$0xf]
      %v1491 = vld [vmem:[%s1489 + $0x8] sm:$0xf]
      %v1492 = vld [vmem:[%s1489 + $0x10] sm:$0xf]
      %v1493 = vld [vmem:[%s1489 + $0x18] sm:$0xf]
      %v1494 = vld [vmem:[%s1489 + $0x20] sm:$0xf]
      %v1495 = vld [vmem:[%s1489 + $0x28] sm:$0xf]
      %v1496 = vld [vmem:[%s1489 + $0x30] sm:$0xf]
      %v1497 = vld [vmem:[%s1489 + $0x38] sm:$0xf]
      %s1498 = scalar_lea.vmem %s1, 384
      %v1499 = vld [vmem:[%s1498] sm:$0xf]
      %v1500 = vld [vmem:[%s1498 + $0x4] sm:$0xf]
      %v1501 = vld [vmem:[%s1498 + $0x8] sm:$0xf]
      %v1502 = vld [vmem:[%s1498 + $0xc] sm:$0xf]
      %v1503 = vld [vmem:[%s1498 + $0x10] sm:$0xf]
      %v1504 = vld [vmem:[%s1498 + $0x14] sm:$0xf]
      %v1505 = vld [vmem:[%s1498 + $0x18] sm:$0xf]
      %v1506 = vld [vmem:[%s1498 + $0x1c] sm:$0xf]
      %v1507 = vld [vmem:[%s1498 + $0x20] sm:$0xf]
      %v1508 = vld [vmem:[%s1498 + $0x24] sm:$0xf]
      %v1509 = vld [vmem:[%s1498 + $0x28] sm:$0xf]
      %v1510 = vld [vmem:[%s1498 + $0x2c] sm:$0xf]
      %v1511 = vld [vmem:[%s1498 + $0x30] sm:$0xf]
      %v1512 = vld [vmem:[%s1498 + $0x34] sm:$0xf]
      %v1513 = vld [vmem:[%s1498 + $0x38] sm:$0xf]
      %v1514 = vld [vmem:[%s1498 + $0x3c] sm:$0xf]
      %v1523 = vunpack.c.l.b16 %v1490
      %v1524 = vunpack.c.l.b16 %v1491
      %v1525 = vunpack.c.l.b16 %v1492
      %v1526 = vunpack.c.l.b16 %v1493
      %v1527 = vunpack.c.l.b16 %v1494
      %v1528 = vunpack.c.l.b16 %v1495
      %v1529 = vunpack.c.l.b16 %v1496
      %v1530 = vunpack.c.l.b16 %v1497
      %v1531 = vpack.c.b16 %v1524, %v1523
      %v1532 = vpack.c.b16 %v1526, %v1525
      %v1533 = vpack.c.b16 %v1528, %v1527
      %v1534 = vpack.c.b16 %v1530, %v1529
      %v1555 = vunpack.c.l.b16 %v1499
      %v1556 = vunpack.c.l.b16 %v1500
      %v1557 = vunpack.c.l.b16 %v1501
      %v1558 = vunpack.c.l.b16 %v1502
      %v1559 = vunpack.c.l.b16 %v1503
      %v1560 = vunpack.c.l.b16 %v1504
      %v1561 = vunpack.c.l.b16 %v1505
      %v1562 = vunpack.c.l.b16 %v1506
      %v1563 = vunpack.c.l.b16 %v1507
      %v1564 = vunpack.c.l.b16 %v1508
      %v1565 = vunpack.c.l.b16 %v1509
      %v1566 = vunpack.c.l.b16 %v1510
      %v1567 = vunpack.c.l.b16 %v1511
      %v1568 = vunpack.c.l.b16 %v1512
      %v1569 = vunpack.c.l.b16 %v1513
      %v1570 = vunpack.c.l.b16 %v1514
      %v1571 = vpack.c.b16 %v1556, %v1555
      %v1572 = vpack.c.b16 %v1558, %v1557
      %v1573 = vpack.c.b16 %v1560, %v1559
      %v1574 = vpack.c.b16 %v1562, %v1561
      %v1575 = vpack.c.b16 %v1564, %v1563
      %v1576 = vpack.c.b16 %v1566, %v1565
      %v1577 = vpack.c.b16 %v1568, %v1567
      %v1578 = vpack.c.b16 %v1570, %v1569
      %1587 = vmatprep.subr.bf16.mxu0 0
      %1588 = vmatpush1.bf16.msra.mxu0 %v1571
      %1589 = vmatprep.subr.bf16.mxu0 0
      %1590 = vmatpush1.bf16.msra.mxu0 %v1572
      %1591 = vmatprep.subr.bf16.mxu0 0
      %1592 = vmatpush1.bf16.msra.mxu0 %v1573
      %1593 = vmatprep.subr.bf16.mxu0 0
      %1594 = vmatpush1.bf16.msra.mxu0 %v1574
      %1595 = vmatprep.subr.bf16.mxu0 0
      %1596 = vmatpush1.bf16.msra.mxu0 %v1575
      %1597 = vmatprep.subr.bf16.mxu0 0
      %1598 = vmatpush1.bf16.msra.mxu0 %v1576
      %1599 = vmatprep.subr.bf16.mxu0 0
      %1600 = vmatpush1.bf16.msra.mxu0 %v1577
      %1601 = vmatprep.subr.bf16.mxu0 0
      %1602 = vmatpush1.bf16.msra.mxu0 %v1578
      %1603 = vmatprep.subr.bf16.mxu0 0
      %1604 = vmatpush1.bf16.msra.mxu0 0
      %1605 = vmatprep.subr.bf16.mxu0 0
      %1606 = vmatpush1.bf16.msra.mxu0 0
      %1607 = vmatprep.subr.bf16.mxu0 0
      %1608 = vmatpush1.bf16.msra.mxu0 0
      %1609 = vmatprep.subr.bf16.mxu0 0
      %1610 = vmatpush1.bf16.msra.mxu0 0
      %1611 = vmatprep.subr.bf16.mxu0 0
      %1612 = vmatpush1.bf16.msra.mxu0 0
      %1613 = vmatprep.subr.bf16.mxu0 0
      %1614 = vmatpush1.bf16.msra.mxu0 0
      %1615 = vmatprep.subr.bf16.mxu0 0
      %1616 = vmatpush1.bf16.msra.mxu0 0
      %1617 = vmatprep.subr.bf16.mxu0 0
      %1618 = vmatpush1.bf16.msra.mxu0 0
      %1619 = vmatprep.mubr.bf16.mxu0 0
      %1620 = vmatmul.mubr.bf16.gmra.mrb[0].mxu0 %v1531
      %v1621 = vpop.f32.mrb[0].mxu0
      %v1622 = vadd.f32 0.0, %v1621
      %v1623 = vpop.f32.mrb[0].mxu0
      %v1624 = vpop.f32.mrb[0].mxu0
      %v1625 = vadd.f32 0.0, %v1624
      %v1626 = vpop.f32.mrb[0].mxu0
      %1627 = vmatprep.mubr.bf16.mxu0 0
      %1628 = vmatmul.mubr.bf16.gmra.mrb[0].mxu0 %v1532
      %v1629 = vpop.f32.mrb[0].mxu0
      %v1630 = vadd.f32 0.0, %v1629
      %v1631 = vpop.f32.mrb[0].mxu0
      %v1632 = vpop.f32.mrb[0].mxu0
      %v1633 = vadd.f32 0.0, %v1632
      %v1634 = vpop.f32.mrb[0].mxu0
      %1635 = vmatprep.mubr.bf16.mxu0 0
      %1636 = vmatmul.mubr.bf16.gmra.mrb[0].mxu0 %v1533
      %v1637 = vpop.f32.mrb[0].mxu0
      %v1638 = vadd.f32 0.0, %v1637
      %v1639 = vpop.f32.mrb[0].mxu0
      %v1640 = vpop.f32.mrb[0].mxu0
      %v1641 = vadd.f32 0.0, %v1640
      %v1642 = vpop.f32.mrb[0].mxu0
      %1643 = vmatprep.mubr.bf16.mxu0 0
      %1644 = vmatmul.mubr.bf16.gmra.mrb[0].mxu0 %v1534
      %v1645 = vpop.f32.mrb[0].mxu0
      %v1646 = vadd.f32 0.0, %v1645
      %v1647 = vpop.f32.mrb[0].mxu0
      %v1648 = vpop.f32.mrb[0].mxu0
      %v1649 = vadd.f32 0.0, %v1648
      %v1650 = vpop.f32.mrb[0].mxu0
      %1651 = vdwg.mxu0
      %v1652 = vadd.f32 %v1481, %v1622
      %v1653 = vadd.f32 %v1482, %v1625
      %v1654 = vadd.f32 %v1483, %v1630
      %v1655 = vadd.f32 %v1484, %v1633
      %v1656 = vadd.f32 %v1485, %v1638
      %v1657 = vadd.f32 %v1486, %v1641
      %v1658 = vadd.f32 %v1487, %v1646
      %v1659 = vadd.f32 %v1488, %v1649
      %v1660 = vld [vmem:[%s1489] sm:$0xf]
      %v1661 = vld [vmem:[%s1489 + $0x4] sm:$0x1]
      %v1662 = vld [vmem:[%s1489 + $0x8] sm:$0xf]
      %v1663 = vld [vmem:[%s1489 + $0xc] sm:$0x1]
      %v1664 = vld [vmem:[%s1489 + $0x10] sm:$0xf]
      %v1665 = vld [vmem:[%s1489 + $0x14] sm:$0x1]
      %v1666 = vld [vmem:[%s1489 + $0x18] sm:$0xf]
      %v1667 = vld [vmem:[%s1489 + $0x1c] sm:$0x1]
      %v1668 = vld [vmem:[%s1489 + $0x20] sm:$0xf]
      %v1669 = vld [vmem:[%s1489 + $0x24] sm:$0x1]
      %v1670 = vld [vmem:[%s1489 + $0x28] sm:$0xf]
      %v1671 = vld [vmem:[%s1489 + $0x2c] sm:$0x1]
      %v1672 = vld [vmem:[%s1489 + $0x30] sm:$0xf]
      %v1673 = vld [vmem:[%s1489 + $0x34] sm:$0x1]
      %v1674 = vld [vmem:[%s1489 + $0x38] sm:$0xf]
      %v1675 = vld [vmem:[%s1489 + $0x3c] sm:$0x1]
      %v1677 = vshrl.u32 %v1660, 16
      %v1679 = vrot.slane %v1677, 4
      %v1680 = vshll.u32 %v1660, 16
      %v1682 = vrot.slane %v1680, 5
      %v1683 = vor.u32 %v1679, %v1682
      %v1684 = vrot.slane %v1683, 4
      %v1686 = vshll.u32 %v1661, 16
      %v1688 = vrot.slane %v1686, 5
      %v1689 = vsel %vm217, %v1684, %v1688
      %v1691 = vshrl.u32 %v1662, 16
      %v1693 = vrot.slane %v1691, 4
      %v1694 = vshll.u32 %v1662, 16
      %v1696 = vrot.slane %v1694, 5
      %v1697 = vor.u32 %v1693, %v1696
      %v1698 = vrot.slane %v1697, 4
      %v1700 = vshll.u32 %v1663, 16
      %v1702 = vrot.slane %v1700, 5
      %v1703 = vsel %vm217, %v1698, %v1702
      %v1705 = vshrl.u32 %v1664, 16
      %v1707 = vrot.slane %v1705, 4
      %v1708 = vshll.u32 %v1664, 16
      %v1710 = vrot.slane %v1708, 5
      %v1711 = vor.u32 %v1707, %v1710
      %v1712 = vrot.slane %v1711, 4
      %v1714 = vshll.u32 %v1665, 16
      %v1716 = vrot.slane %v1714, 5
      %v1717 = vsel %vm217, %v1712, %v1716
      %v1719 = vshrl.u32 %v1666, 16
      %v1721 = vrot.slane %v1719, 4
      %v1722 = vshll.u32 %v1666, 16
      %v1724 = vrot.slane %v1722, 5
      %v1725 = vor.u32 %v1721, %v1724
      %v1726 = vrot.slane %v1725, 4
      %v1728 = vshll.u32 %v1667, 16
      %v1730 = vrot.slane %v1728, 5
      %v1731 = vsel %vm217, %v1726, %v1730
      %v1733 = vshrl.u32 %v1668, 16
      %v1735 = vrot.slane %v1733, 4
      %v1736 = vshll.u32 %v1668, 16
      %v1738 = vrot.slane %v1736, 5
      %v1739 = vor.u32 %v1735, %v1738
      %v1740 = vrot.slane %v1739, 4
      %v1742 = vshll.u32 %v1669, 16
      %v1744 = vrot.slane %v1742, 5
      %v1745 = vsel %vm217, %v1740, %v1744
      %v1747 = vshrl.u32 %v1670, 16
      %v1749 = vrot.slane %v1747, 4
      %v1750 = vshll.u32 %v1670, 16
      %v1752 = vrot.slane %v1750, 5
      %v1753 = vor.u32 %v1749, %v1752
      %v1754 = vrot.slane %v1753, 4
      %v1756 = vshll.u32 %v1671, 16
      %v1758 = vrot.slane %v1756, 5
      %v1759 = vsel %vm217, %v1754, %v1758
      %v1761 = vshrl.u32 %v1672, 16
      %v1763 = vrot.slane %v1761, 4
      %v1764 = vshll.u32 %v1672, 16
      %v1766 = vrot.slane %v1764, 5
      %v1767 = vor.u32 %v1763, %v1766
      %v1768 = vrot.slane %v1767, 4
      %v1770 = vshll.u32 %v1673, 16
      %v1772 = vrot.slane %v1770, 5
      %v1773 = vsel %vm217, %v1768, %v1772
      %v1775 = vshrl.u32 %v1674, 16
      %v1777 = vrot.slane %v1775, 4
      %v1778 = vshll.u32 %v1674, 16
      %v1780 = vrot.slane %v1778, 5
      %v1781 = vor.u32 %v1777, %v1780
      %v1782 = vrot.slane %v1781, 4
      %v1784 = vshll.u32 %v1675, 16
      %v1786 = vrot.slane %v1784, 5
      %v1787 = vsel %vm217, %v1782, %v1786
      %s1788 = scalar_lea.vmem %s1, 448
      %v1789 = vld [vmem:[%s1788] sm:$0xf]
      %v1790 = vld [vmem:[%s1788 + $0x4] sm:$0xf]
      %v1791 = vld [vmem:[%s1788 + $0x8] sm:$0xf]
      %v1792 = vld [vmem:[%s1788 + $0xc] sm:$0xf]
      %v1793 = vld [vmem:[%s1788 + $0x10] sm:$0xf]
      %v1794 = vld [vmem:[%s1788 + $0x14] sm:$0xf]
      %v1795 = vld [vmem:[%s1788 + $0x18] sm:$0xf]
      %v1796 = vld [vmem:[%s1788 + $0x1c] sm:$0xf]
      %v1797 = vld [vmem:[%s1788 + $0x20] sm:$0xf]
      %v1798 = vld [vmem:[%s1788 + $0x24] sm:$0xf]
      %v1799 = vld [vmem:[%s1788 + $0x28] sm:$0xf]
      %v1800 = vld [vmem:[%s1788 + $0x2c] sm:$0xf]
      %v1801 = vld [vmem:[%s1788 + $0x30] sm:$0xf]
      %v1802 = vld [vmem:[%s1788 + $0x34] sm:$0xf]
      %v1803 = vld [vmem:[%s1788 + $0x38] sm:$0xf]
      %v1804 = vld [vmem:[%s1788 + $0x3c] sm:$0xf]
      %v1805 = vunpack.c.l.b16 %v1689
      %v1806 = vunpack.c.l.b16 %v1703
      %v1807 = vunpack.c.l.b16 %v1717
      %v1808 = vunpack.c.l.b16 %v1731
      %v1809 = vunpack.c.l.b16 %v1745
      %v1810 = vunpack.c.l.b16 %v1759
      %v1811 = vunpack.c.l.b16 %v1773
      %v1812 = vunpack.c.l.b16 %v1787
      %v1813 = vpack.c.b16 %v1806, %v1805
      %v1814 = vpack.c.b16 %v1808, %v1807
      %v1815 = vpack.c.b16 %v1810, %v1809
      %v1816 = vpack.c.b16 %v1812, %v1811
      %v1837 = vunpack.c.l.b16 %v1789
      %v1838 = vunpack.c.l.b16 %v1790
      %v1839 = vunpack.c.l.b16 %v1791
      %v1840 = vunpack.c.l.b16 %v1792
      %v1841 = vunpack.c.l.b16 %v1793
      %v1842 = vunpack.c.l.b16 %v1794
      %v1843 = vunpack.c.l.b16 %v1795
      %v1844 = vunpack.c.l.b16 %v1796
      %v1845 = vunpack.c.l.b16 %v1797
      %v1846 = vunpack.c.l.b16 %v1798
      %v1847 = vunpack.c.l.b16 %v1799
      %v1848 = vunpack.c.l.b16 %v1800
      %v1849 = vunpack.c.l.b16 %v1801
      %v1850 = vunpack.c.l.b16 %v1802
      %v1851 = vunpack.c.l.b16 %v1803
      %v1852 = vunpack.c.l.b16 %v1804
      %v1853 = vpack.c.b16 %v1838, %v1837
      %v1854 = vpack.c.b16 %v1840, %v1839
      %v1855 = vpack.c.b16 %v1842, %v1841
      %v1856 = vpack.c.b16 %v1844, %v1843
      %v1857 = vpack.c.b16 %v1846, %v1845
      %v1858 = vpack.c.b16 %v1848, %v1847
      %v1859 = vpack.c.b16 %v1850, %v1849
      %v1860 = vpack.c.b16 %v1852, %v1851
      %1869 = vmatprep.subr.bf16.mxu0 0
      %1870 = vmatpush1.bf16.msra.mxu0 %v1853
      %1871 = vmatprep.subr.bf16.mxu0 0
      %1872 = vmatpush1.bf16.msra.mxu0 %v1854
      %1873 = vmatprep.subr.bf16.mxu0 0
      %1874 = vmatpush1.bf16.msra.mxu0 %v1855
      %1875 = vmatprep.subr.bf16.mxu0 0
      %1876 = vmatpush1.bf16.msra.mxu0 %v1856
      %1877 = vmatprep.subr.bf16.mxu0 0
      %1878 = vmatpush1.bf16.msra.mxu0 %v1857
      %1879 = vmatprep.subr.bf16.mxu0 0
      %1880 = vmatpush1.bf16.msra.mxu0 %v1858
      %1881 = vmatprep.subr.bf16.mxu0 0
      %1882 = vmatpush1.bf16.msra.mxu0 %v1859
      %1883 = vmatprep.subr.bf16.mxu0 0
      %1884 = vmatpush1.bf16.msra.mxu0 %v1860
      %1885 = vmatprep.subr.bf16.mxu0 0
      %1886 = vmatpush1.bf16.msra.mxu0 0
      %1887 = vmatprep.subr.bf16.mxu0 0
      %1888 = vmatpush1.bf16.msra.mxu0 0
      %1889 = vmatprep.subr.bf16.mxu0 0
      %1890 = vmatpush1.bf16.msra.mxu0 0
      %1891 = vmatprep.subr.bf16.mxu0 0
      %1892 = vmatpush1.bf16.msra.mxu0 0
      %1893 = vmatprep.subr.bf16.mxu0 0
      %1894 = vmatpush1.bf16.msra.mxu0 0
      %1895 = vmatprep.subr.bf16.mxu0 0
      %1896 = vmatpush1.bf16.msra.mxu0 0
      %1897 = vmatprep.subr.bf16.mxu0 0
      %1898 = vmatpush1.bf16.msra.mxu0 0
      %1899 = vmatprep.subr.bf16.mxu0 0
      %1900 = vmatpush1.bf16.msra.mxu0 0
      %1901 = vmatprep.mubr.bf16.mxu0 0
      %1902 = vmatmul.mubr.bf16.gmra.mrb[0].mxu0 %v1813
      %v1903 = vpop.f32.mrb[0].mxu0
      %v1904 = vadd.f32 0.0, %v1903
      %v1905 = vpop.f32.mrb[0].mxu0
      %v1906 = vpop.f32.mrb[0].mxu0
      %v1907 = vadd.f32 0.0, %v1906
      %v1908 = vpop.f32.mrb[0].mxu0
      %1909 = vmatprep.mubr.bf16.mxu0 0
      %1910 = vmatmul.mubr.bf16.gmra.mrb[0].mxu0 %v1814
      %v1911 = vpop.f32.mrb[0].mxu0
      %v1912 = vadd.f32 0.0, %v1911
      %v1913 = vpop.f32.mrb[0].mxu0
      %v1914 = vpop.f32.mrb[0].mxu0
      %v1915 = vadd.f32 0.0, %v1914
      %v1916 = vpop.f32.mrb[0].mxu0
      %1917 = vmatprep.mubr.bf16.mxu0 0
      %1918 = vmatmul.mubr.bf16.gmra.mrb[0].mxu0 %v1815
      %v1919 = vpop.f32.mrb[0].mxu0
      %v1920 = vadd.f32 0.0, %v1919
      %v1921 = vpop.f32.mrb[0].mxu0
      %v1922 = vpop.f32.mrb[0].mxu0
      %v1923 = vadd.f32 0.0, %v1922
      %v1924 = vpop.f32.mrb[0].mxu0
      %1925 = vmatprep.mubr.bf16.mxu0 0
      %1926 = vmatmul.mubr.bf16.gmra.mrb[0].mxu0 %v1816
      %v1927 = vpop.f32.mrb[0].mxu0
      %v1928 = vadd.f32 0.0, %v1927
      %v1929 = vpop.f32.mrb[0].mxu0
      %v1930 = vpop.f32.mrb[0].mxu0
      %v1931 = vadd.f32 0.0, %v1930
      %v1932 = vpop.f32.mrb[0].mxu0
      %1933 = vdwg.mxu0
      %v1934 = vadd.f32 %v1652, %v1904
      %v1935 = vadd.f32 %v1653, %v1907
      %v1936 = vadd.f32 %v1654, %v1912
      %v1937 = vadd.f32 %v1655, %v1915
      %v1938 = vadd.f32 %v1656, %v1920
      %v1939 = vadd.f32 %v1657, %v1923
      %v1940 = vadd.f32 %v1658, %v1928
      %v1941 = vadd.f32 %v1659, %v1931
      %v1942 = vld [vmem:[%s1489] sm:$0xe]
      %v1943 = vld [vmem:[%s1489 + $0x8] sm:$0xe]
      %v1944 = vld [vmem:[%s1489 + $0x10] sm:$0xe]
      %v1945 = vld [vmem:[%s1489 + $0x18] sm:$0xe]
      %v1946 = vld [vmem:[%s1489 + $0x20] sm:$0xe]
      %v1947 = vld [vmem:[%s1489 + $0x28] sm:$0xe]
      %v1948 = vld [vmem:[%s1489 + $0x30] sm:$0xe]
      %v1949 = vld [vmem:[%s1489 + $0x38] sm:$0xe]
      %v1966 = vrot.slane %v1942, 5
      %v1967 = vrot.slane %v1966, 4
      %v1968 = vrot.slane %v1661, 5
      %v1969 = vsel %vm639, %v1967, %v1968
      %v1970 = vrot.slane %v1943, 5
      %v1971 = vrot.slane %v1970, 4
      %v1972 = vrot.slane %v1663, 5
      %v1973 = vsel %vm639, %v1971, %v1972
      %v1974 = vrot.slane %v1944, 5
      %v1975 = vrot.slane %v1974, 4
      %v1976 = vrot.slane %v1665, 5
      %v1977 = vsel %vm639, %v1975, %v1976
      %v1978 = vrot.slane %v1945, 5
      %v1979 = vrot.slane %v1978, 4
      %v1980 = vrot.slane %v1667, 5
      %v1981 = vsel %vm639, %v1979, %v1980
      %v1982 = vrot.slane %v1946, 5
      %v1983 = vrot.slane %v1982, 4
      %v1984 = vrot.slane %v1669, 5
      %v1985 = vsel %vm639, %v1983, %v1984
      %v1986 = vrot.slane %v1947, 5
      %v1987 = vrot.slane %v1986, 4
      %v1988 = vrot.slane %v1671, 5
      %v1989 = vsel %vm639, %v1987, %v1988
      %v1990 = vrot.slane %v1948, 5
      %v1991 = vrot.slane %v1990, 4
      %v1992 = vrot.slane %v1673, 5
      %v1993 = vsel %vm639, %v1991, %v1992
      %v1994 = vrot.slane %v1949, 5
      %v1995 = vrot.slane %v1994, 4
      %v1996 = vrot.slane %v1675, 5
      %v1997 = vsel %vm639, %v1995, %v1996
      %s1998 = scalar_lea.vmem %s1, 512
      %v1999 = vld [vmem:[%s1998] sm:$0xf]
      %v2000 = vld [vmem:[%s1998 + $0x4] sm:$0xf]
      %v2001 = vld [vmem:[%s1998 + $0x8] sm:$0xf]
      %v2002 = vld [vmem:[%s1998 + $0xc] sm:$0xf]
      %v2003 = vld [vmem:[%s1998 + $0x10] sm:$0xf]
      %v2004 = vld [vmem:[%s1998 + $0x14] sm:$0xf]
      %v2005 = vld [vmem:[%s1998 + $0x18] sm:$0xf]
      %v2006 = vld [vmem:[%s1998 + $0x1c] sm:$0xf]
      %v2007 = vld [vmem:[%s1998 + $0x20] sm:$0xf]
      %v2008 = vld [vmem:[%s1998 + $0x24] sm:$0xf]
      %v2009 = vld [vmem:[%s1998 + $0x28] sm:$0xf]
      %v2010 = vld [vmem:[%s1998 + $0x2c] sm:$0xf]
      %v2011 = vld [vmem:[%s1998 + $0x30] sm:$0xf]
      %v2012 = vld [vmem:[%s1998 + $0x34] sm:$0xf]
      %v2013 = vld [vmem:[%s1998 + $0x38] sm:$0xf]
      %v2014 = vld [vmem:[%s1998 + $0x3c] sm:$0xf]
      %v2015 = vunpack.c.l.b16 %v1969
      %v2016 = vunpack.c.l.b16 %v1973
      %v2017 = vunpack.c.l.b16 %v1977
      %v2018 = vunpack.c.l.b16 %v1981
      %v2019 = vunpack.c.l.b16 %v1985
      %v2020 = vunpack.c.l.b16 %v1989
      %v2021 = vunpack.c.l.b16 %v1993
      %v2022 = vunpack.c.l.b16 %v1997
      %v2023 = vpack.c.b16 %v2016, %v2015
      %v2024 = vpack.c.b16 %v2018, %v2017
      %v2025 = vpack.c.b16 %v2020, %v2019
      %v2026 = vpack.c.b16 %v2022, %v2021
      %v2047 = vunpack.c.l.b16 %v1999
      %v2048 = vunpack.c.l.b16 %v2000
      %v2049 = vunpack.c.l.b16 %v2001
      %v2050 = vunpack.c.l.b16 %v2002
      %v2051 = vunpack.c.l.b16 %v2003
      %v2052 = vunpack.c.l.b16 %v2004
      %v2053 = vunpack.c.l.b16 %v2005
      %v2054 = vunpack.c.l.b16 %v2006
      %v2055 = vunpack.c.l.b16 %v2007
      %v2056 = vunpack.c.l.b16 %v2008
      %v2057 = vunpack.c.l.b16 %v2009
      %v2058 = vunpack.c.l.b16 %v2010
      %v2059 = vunpack.c.l.b16 %v2011
      %v2060 = vunpack.c.l.b16 %v2012
      %v2061 = vunpack.c.l.b16 %v2013
      %v2062 = vunpack.c.l.b16 %v2014
      %v2063 = vpack.c.b16 %v2048, %v2047
      %v2064 = vpack.c.b16 %v2050, %v2049
      %v2065 = vpack.c.b16 %v2052, %v2051
      %v2066 = vpack.c.b16 %v2054, %v2053
      %v2067 = vpack.c.b16 %v2056, %v2055
      %v2068 = vpack.c.b16 %v2058, %v2057
      %v2069 = vpack.c.b16 %v2060, %v2059
      %v2070 = vpack.c.b16 %v2062, %v2061
      %2079 = vmatprep.subr.bf16.mxu0 0
      %2080 = vmatpush1.bf16.msra.mxu0 %v2063
      %2081 = vmatprep.subr.bf16.mxu0 0
      %2082 = vmatpush1.bf16.msra.mxu0 %v2064
      %2083 = vmatprep.subr.bf16.mxu0 0
      %2084 = vmatpush1.bf16.msra.mxu0 %v2065
      %2085 = vmatprep.subr.bf16.mxu0 0
      %2086 = vmatpush1.bf16.msra.mxu0 %v2066
      %2087 = vmatprep.subr.bf16.mxu0 0
      %2088 = vmatpush1.bf16.msra.mxu0 %v2067
      %2089 = vmatprep.subr.bf16.mxu0 0
      %2090 = vmatpush1.bf16.msra.mxu0 %v2068
      %2091 = vmatprep.subr.bf16.mxu0 0
      %2092 = vmatpush1.bf16.msra.mxu0 %v2069
      %2093 = vmatprep.subr.bf16.mxu0 0
      %2094 = vmatpush1.bf16.msra.mxu0 %v2070
      %2095 = vmatprep.subr.bf16.mxu0 0
      %2096 = vmatpush1.bf16.msra.mxu0 0
      %2097 = vmatprep.subr.bf16.mxu0 0
      %2098 = vmatpush1.bf16.msra.mxu0 0
      %2099 = vmatprep.subr.bf16.mxu0 0
      %2100 = vmatpush1.bf16.msra.mxu0 0
      %2101 = vmatprep.subr.bf16.mxu0 0
      %2102 = vmatpush1.bf16.msra.mxu0 0
      %2103 = vmatprep.subr.bf16.mxu0 0
      %2104 = vmatpush1.bf16.msra.mxu0 0
      %2105 = vmatprep.subr.bf16.mxu0 0
      %2106 = vmatpush1.bf16.msra.mxu0 0
      %2107 = vmatprep.subr.bf16.mxu0 0
      %2108 = vmatpush1.bf16.msra.mxu0 0
      %2109 = vmatprep.subr.bf16.mxu0 0
      %2110 = vmatpush1.bf16.msra.mxu0 0
      %2111 = vmatprep.mubr.bf16.mxu0 0
      %2112 = vmatmul.mubr.bf16.gmra.mrb[0].mxu0 %v2023
      %v2113 = vpop.f32.mrb[0].mxu0
      %v2114 = vadd.f32 0.0, %v2113
      %v2115 = vpop.f32.mrb[0].mxu0
      %v2116 = vpop.f32.mrb[0].mxu0
      %v2117 = vadd.f32 0.0, %v2116
      %v2118 = vpop.f32.mrb[0].mxu0
      %2119 = vmatprep.mubr.bf16.mxu0 0
      %2120 = vmatmul.mubr.bf16.gmra.mrb[0].mxu0 %v2024
      %v2121 = vpop.f32.mrb[0].mxu0
      %v2122 = vadd.f32 0.0, %v2121
      %v2123 = vpop.f32.mrb[0].mxu0
      %v2124 = vpop.f32.mrb[0].mxu0
      %v2125 = vadd.f32 0.0, %v2124
      %v2126 = vpop.f32.mrb[0].mxu0
      %2127 = vmatprep.mubr.bf16.mxu0 0
      %2128 = vmatmul.mubr.bf16.gmra.mrb[0].mxu0 %v2025
      %v2129 = vpop.f32.mrb[0].mxu0
      %v2130 = vadd.f32 0.0, %v2129
      %v2131 = vpop.f32.mrb[0].mxu0
      %v2132 = vpop.f32.mrb[0].mxu0
      %v2133 = vadd.f32 0.0, %v2132
      %v2134 = vpop.f32.mrb[0].mxu0
      %2135 = vmatprep.mubr.bf16.mxu0 0
      %2136 = vmatmul.mubr.bf16.gmra.mrb[0].mxu0 %v2026
      %v2137 = vpop.f32.mrb[0].mxu0
      %v2138 = vadd.f32 0.0, %v2137
      %v2139 = vpop.f32.mrb[0].mxu0
      %v2140 = vpop.f32.mrb[0].mxu0
      %v2141 = vadd.f32 0.0, %v2140
      %v2142 = vpop.f32.mrb[0].mxu0
      %2143 = vdwg.mxu0
      %v2144 = vadd.f32 %v1934, %v2114
      %v2145 = vadd.f32 %v1935, %v2117
      %v2146 = vadd.f32 %v1936, %v2122
      %v2147 = vadd.f32 %v1937, %v2125
      %v2148 = vadd.f32 %v1938, %v2130
      %v2149 = vadd.f32 %v1939, %v2133
      %v2150 = vadd.f32 %v1940, %v2138
      %v2151 = vadd.f32 %v1941, %v2141
      %v2152 = vpack.c.bf16 %v2145, %v2144
      %v2153 = vpack.c.bf16 %v2147, %v2146
      %v2154 = vpack.c.bf16 %v2149, %v2148
      %v2155 = vpack.c.bf16 %v2151, %v2150
      %v2160 = vunpack.c.l.b16 %v2152
      %v2161 = vunpack.c.h.b16 %v2152
      %v2162 = vunpack.c.l.b16 %v2153
      %v2163 = vunpack.c.h.b16 %v2153
      %v2164 = vunpack.c.l.b16 %v2154
      %v2165 = vunpack.c.h.b16 %v2154
      %v2166 = vunpack.c.l.b16 %v2155
      %v2167 = vunpack.c.h.b16 %v2155
      %v2168 = vpack.c.b16 %v2160, %v2160
      %v2169 = vpack.c.b16 %v2161, %v2161
      %v2170 = vpack.c.b16 %v2162, %v2162
      %v2171 = vpack.c.b16 %v2163, %v2163
      %v2172 = vpack.c.b16 %v2164, %v2164
      %v2173 = vpack.c.b16 %v2165, %v2165
      %v2174 = vpack.c.b16 %v2166, %v2166
      %v2175 = vpack.c.b16 %v2167, %v2167
      %2184 = vst [vmem:[%s177] sm:$0xf] %v2168
      %2185 = vst [vmem:[%s177 + $0x4] sm:$0xf] %v2169
      %2186 = vst [vmem:[%s177 + $0x8] sm:$0xf] %v2170
      %2187 = vst [vmem:[%s177 + $0xc] sm:$0xf] %v2171
      %2188 = vst [vmem:[%s177 + $0x10] sm:$0xf] %v2172
      %2189 = vst [vmem:[%s177 + $0x14] sm:$0xf] %v2173
      %2190 = vst [vmem:[%s177 + $0x18] sm:$0xf] %v2174
      %2191 = vst [vmem:[%s177 + $0x1c] sm:$0xf] %v2175
      %v2192 = vadd.f32 %v2144, %v2145
      %v2193 = vadd.f32 %v2192, %v2146
      %v2194 = vadd.f32 %v2193, %v2147
      %v2195 = vadd.f32 %v2194, %v2148
      %v2196 = vadd.f32 %v2195, %v2149
      %v2197 = vadd.f32 %v2196, %v2150
      %v2198 = vadd.f32 %v2197, %v2151
      %v2199 = vrot.slane %v2198, 4
      %v2200 = vadd.f32 %v2198, %v2199
      %v2201 = vrot.slane %v2200, 2
      %v2202 = vadd.f32 %v2200, %v2201
      %v2203 = vrot.slane %v2202, 1
      %v2204 = vadd.f32 %v2202, %v2203
      %v2205 = vmul.f32 %v2204, 0.015625
      %v2206 = vsub.f32 %v2144, %v2205
      %v2207 = vsub.f32 %v2145, %v2205
      %v2208 = vsub.f32 %v2146, %v2205
      %v2209 = vsub.f32 %v2147, %v2205
      %v2210 = vsub.f32 %v2148, %v2205
      %v2211 = vsub.f32 %v2149, %v2205
      %v2212 = vsub.f32 %v2150, %v2205
      %v2213 = vsub.f32 %v2151, %v2205
      %v2214 = vmul.f32 %v2206, %v2206
      %v2215 = vmul.f32 %v2207, %v2207
      %v2216 = vmul.f32 %v2208, %v2208
      %v2217 = vmul.f32 %v2209, %v2209
      %v2218 = vmul.f32 %v2210, %v2210
      %v2219 = vmul.f32 %v2211, %v2211
      %v2220 = vmul.f32 %v2212, %v2212
      %v2221 = vmul.f32 %v2213, %v2213
      %v2222 = vadd.f32 %v2214, %v2215
      %v2223 = vadd.f32 %v2222, %v2216
      %v2224 = vadd.f32 %v2223, %v2217
      %v2225 = vadd.f32 %v2224, %v2218
      %v2226 = vadd.f32 %v2225, %v2219
      %v2227 = vadd.f32 %v2226, %v2220
      %v2228 = vadd.f32 %v2227, %v2221
      %v2229 = vrot.slane %v2228, 4
      %v2230 = vadd.f32 %v2228, %v2229
      %v2231 = vrot.slane %v2230, 2
      %v2232 = vadd.f32 %v2230, %v2231
      %v2233 = vrot.slane %v2232, 1
      %v2234 = vadd.f32 %v2232, %v2233
      %v2235 = vlaneseq
      %v2236 = vshrl.u32 %v2235, 7
      %vm2237 = vcmp.eq.s32.totalorder %v2236, 0
      %vm2238 = vcmp.eq.s32.totalorder %v2236, 1
      %v2239 = vsel %vm2238, %v2234, 0.0
      %v2240 = vsel %vm2237, %v2204, %v2239
      %2241 = vst [vmem:[%s181] sm:$0xff] %v2240
      %p2242 = scmp.lt.s32.totalorder %s15, 1
      %s2243 = scalar_select %p2242, %s15, 1
      %s2244 = smul.addr %s2243, 8
      %s2245 = smul.addr %s2244, 4
      %s2246 = scalar_lea.vmem %s2, %s2245
      %p2247 = scmp.lt.s32.totalorder %s15, 1
      %s2248 = scalar_select %p2247, %s15, 1
      %s2249 = smul.addr %s2248, 8
      %s2250 = scalar_lea.vmem %s3, %s2249
      // Predicated region
      $region29: #{residual_block.6} parent=27 // pred_check
        %p2251 = pneg %p80
      $region30: #{residual_block.6} parent=27 // pred_check_branch
        %2253 = sbr.rel (%p2251) target = $region32
      $region31: #{residual_block.6} parent=27 // pred_region
        _
      $region32: #{residual_block.6} parent=27 // pred_fallthru
        _
      // Predicated region
      $region33: #{residual_block.6} parent=27 // pred_check
        %p2254 = pneg %p106
      $region34: #{residual_block.6} parent=27 // pred_check_branch
        %2256 = sbr.rel (%p2254) target = $region36
      $region35: #{residual_block.6} parent=27 // pred_region
        _
      $region36: #{residual_block.6} parent=27 // pred_fallthru
        _
    $region28: #{residual_block.6} parent=5 // pred_fallthru
      _
    %p2257 = scmp.le.s32.totalorder 2, %s10
    // Predicated region
    $region37: #{residual_block.6} parent=5 // pred_check
      %p2258 = pneg %p2257
    $region38: #{residual_block.6} parent=5 // pred_check_branch
      %2260 = sbr.rel (%p2258) target = $region40
    $region39: #{residual_block.6} parent=5 // pred_region
      %s2261 = ssub.s32 %s10, 2
      // Predicated region
      $region41: #{residual_block.6} parent=39 // pred_check
        %p2262 = pneg %p86
      $region42: #{residual_block.6} parent=39 // pred_check_branch
        %2264 = sbr.rel (%p2262) target = $region44
      $region43: #{residual_block.6} parent=39 // pred_region
        %p2265 = scmp.lt.s32.totalorder %s16, 1
        %s2266 = scalar_select %p2265, %s16, 1
        %s2267 = smul.addr %s2266, 8
        %s2268 = smul.addr %s2267, 4
        %s2269 = scalar_lea.vmem %s2, %s2268
      $region44: #{residual_block.6} parent=39 // pred_fallthru
        _
      // Predicated region
      $region45: #{residual_block.6} parent=39 // pred_check
        %p2270 = pneg %p112
      $region46: #{residual_block.6} parent=39 // pred_check_branch
        %2272 = sbr.rel (%p2270) target = $region48
      $region47: #{residual_block.6} parent=39 // pred_region
        %p2273 = scmp.lt.s32.totalorder %s16, 1
        %s2274 = scalar_select %p2273, %s16, 1
        %s2275 = smul.addr %s2274, 8
        %s2276 = scalar_lea.vmem %s3, %s2275
      $region48: #{residual_block.6} parent=39 // pred_fallthru
        _
    $region40: #{residual_block.6} parent=5 // pred_fallthru
      _
  $region6: #{residual_block.6} parent=0 // loop_footer
    %s14 = sadd.s32 1, %s10
  $region7: #{residual_block.6} parent=0 // loop_footer_branch
    %9 = sbr.rel target = $region3
  $region8: #{residual_block.6} parent=0 // loop_exit
    _

</llo_original>
